<compile_context>
chip_gen: v7x
topology: tpu7x:2x2x1
jax: 0.10.0
libtpu: 0.0.40
codegen_flags: <defaults>
</compile_context>

<pallas_src>
import jax
import jax.numpy as jnp
from jax.experimental import pallas as pl
from jax.experimental.pallas import tpu as pltpu

F_IN = 784
F_PAD = 896          # 7 * 128 : lane-aligned padded input feature dim
H0, H1, H2 = 1024, 512, 256


def _leaky_relu(x, slope=0.2):
    return jnp.where(x > 0, x, slope * x)


def _round_up(n, m):
    return (n + m - 1) // m * m


def discriminator_kernel(x_ref,
                         w0_ref, b0_ref,
                         w1_ref, b1_ref,
                         w2_ref, b2_ref,
                         w3_ref, b3_ref,
                         o_ref):
    # hidden0: Linear(784->1024) + LeakyReLU(0.2) + Dropout(0.3)
    # x and weights are bf16; MXU accumulates in f32.
    h = jnp.dot(x_ref[...], w0_ref[...],
                preferred_element_type=jnp.float32) + b0_ref[...]
    h = _leaky_relu(h)
    # TODO(synk): Dropout(0.3) is train-mode stochastic; implemented as eval-mode identity.

    # hidden1: Linear(1024->512) + LeakyReLU(0.2) + Dropout(0.3)
    h = jnp.dot(h.astype(jnp.bfloat16), w1_ref[...],
                preferred_element_type=jnp.float32) + b1_ref[...]
    h = _leaky_relu(h)

    # hidden2: Linear(512->256) + LeakyReLU(0.2) + Dropout(0.3)
    h = jnp.dot(h.astype(jnp.bfloat16), w2_ref[...],
                preferred_element_type=jnp.float32) + b2_ref[...]
    h = _leaky_relu(h)

    # out: Linear(256->1) + Sigmoid.  An N=1 matmul wastes the MXU, so do it as a
    # VPU multiply + lane reduction (overlaps with the previous layer's MXU work).
    z = jnp.sum(h * w3_ref[...].astype(jnp.float32),
                axis=-1, keepdims=True) + b3_ref[...]
    o_ref[...] = jax.nn.sigmoid(z)


def prepare_params(torch_params):
    """PyTorch layout (W:(out,in) f32, b:(out,) f32) -> kernel layout:
    weights transposed to (in,out) and cast to bf16, w0 zero-padded 784->896,
    biases as (1,out) f32, final weight as a (1,256) bf16 row."""
    w0, b0, w1, b1, w2, b2, w3, b3 = torch_params
    w0k = jnp.pad(w0.T, ((0, F_PAD - F_IN), (0, 0))).astype(jnp.bfloat16)
    w1k = w1.T.astype(jnp.bfloat16)
    w2k = w2.T.astype(jnp.bfloat16)
    w3k = w3.reshape(1, H2).astype(jnp.bfloat16)
    return (w0k, b0.reshape(1, H0).astype(jnp.float32),
            w1k, b1.reshape(1, H1).astype(jnp.float32),
            w2k, b2.reshape(1, H2).astype(jnp.float32),
            w3k, b3.reshape(1, 1).astype(jnp.float32))


def discriminator_forward(x, kernel_params, *, block_b=256):
    """x: (B, 784) float32. kernel_params: output of prepare_params."""
    B = x.shape[0]
    TB = min(block_b, _round_up(B, 8))          # 256-row tiles fill v6e/v7x MXUs
    B_pad = _round_up(B, TB)
    x_p = jnp.pad(x, ((0, B_pad - B), (0, F_PAD - F_IN))).astype(jnp.bfloat16)

    w0, b0, w1, b1, w2, b2, w3, b3 = kernel_params

    def const(shape):
        # Resident operand: same block for every grid step -> DMA'd once.
        return pl.BlockSpec(shape, lambda i: (0, 0))

    out = pl.pallas_call(
        discriminator_kernel,
        out_shape=jax.ShapeDtypeStruct((B_pad, 1), jnp.float32),
        grid=(B_pad // TB,),
        in_specs=[
            pl.BlockSpec((TB, F_PAD), lambda i: (i, 0)),   # streamed input tile
            const((F_PAD, H0)), const((1, H0)),
            const((H0, H1)), const((1, H1)),
            const((H1, H2)), const((1, H2)),
            const((1, H2)), const((1, 1)),
        ],
        out_specs=pl.BlockSpec((TB, 1), lambda i: (i, 0)),
        compiler_params=pltpu.CompilerParams(
            dimension_semantics=("parallel",)),
    )(x_p, w0, b0, w1, b1, w2, b2, w3, b3)

    return out[:B]


def init_params(key):
    """PyTorch-default-style init: W:(out,in), b:(out,), U(-1/sqrt(fan_in), +)."""
    dims = [(F_IN, H0), (H0, H1), (H1, H2), (H2, 1)]
    params = []
    for fan_in, fan_out in dims:
        key, kw, kb = jax.random.split(key, 3)
        bound = 1.0 / float(fan_in) ** 0.5
        w = jax.random.uniform(kw, (fan_out, fan_in), jnp.float32, -bound, bound)
        b = jax.random.uniform(kb, (fan_out,), jnp.float32, -bound, bound)
        params += [w, b]
    return tuple(params)


def reference_forward(x, torch_params):
    """Pure-JAX f32 reference matching PyTorch eval-mode forward."""
    w0, b0, w1, b1, w2, b2, w3, b3 = torch_params
    h = _leaky_relu(x @ w0.T + b0)
    h = _leaky_relu(h @ w1.T + b1)
    h = _leaky_relu(h @ w2.T + b2)
    return jax.nn.sigmoid(h @ w3.T + b3)


if __name__ == "__main__":
    key = jax.random.PRNGKey(0)
    k_x, k_p = jax.random.split(key)

    batch = 8
    x = jax.random.normal(k_x, (batch, F_IN), dtype=jnp.float32)
    torch_params = init_params(k_p)
    kernel_params = prepare_params(torch_params)

    out = discriminator_forward(x, kernel_params)
    out = jax.block_until_ready(out)

    ref = reference_forward(x, torch_params)
    assert out.shape == (batch, 1)
    max_err = float(jnp.max(jnp.abs(out - ref)))
    # bf16 matmuls vs. f32 reference -> loosened tolerance
    assert max_err < 2e-2, f"mismatch vs. reference: max abs err {max_err}"

    print("KERNEL_OK")
</pallas_src>

<mosaic_0001>
module attributes {stable_mosaic.version = 11 : i64} {
  func.func @discriminator_kernel(%arg0: i32, %arg1: memref<8x896xbf16, #tpu.memory_space<vmem>>, %arg2: memref<896x1024xbf16, #tpu.memory_space<vmem>>, %arg3: memref<1x1024xf32, #tpu.memory_space<vmem>>, %arg4: memref<1024x512xbf16, #tpu.memory_space<vmem>>, %arg5: memref<1x512xf32, #tpu.memory_space<vmem>>, %arg6: memref<512x256xbf16, #tpu.memory_space<vmem>>, %arg7: memref<1x256xf32, #tpu.memory_space<vmem>>, %arg8: memref<1x256xbf16, #tpu.memory_space<vmem>>, %arg9: memref<1x1xf32, #tpu.memory_space<vmem>>, %arg10: memref<8x1xf32, #tpu.memory_space<vmem>>) attributes {dimension_semantics = [#tpu.dimension_semantics<parallel>], iteration_bounds = array<i64: 1>, scalar_prefetch = 0 : i64, scratch_operands = 0 : i64, tpu.core_type = #tpu.core_type<tc>, window_params = [{transform_indices = @transform_0, window_bounds = array<i64: 8, 896>}, {pipeline_mode = #tpu.pipeline_mode<synchronous>, transform_indices = @transform_1, window_bounds = array<i64: 896, 1024>}, {pipeline_mode = #tpu.pipeline_mode<synchronous>, transform_indices = @transform_2, window_bounds = array<i64: 1, 1024>}, {pipeline_mode = #tpu.pipeline_mode<synchronous>, transform_indices = @transform_3, window_bounds = array<i64: 1024, 512>}, {pipeline_mode = #tpu.pipeline_mode<synchronous>, transform_indices = @transform_4, window_bounds = array<i64: 1, 512>}, {pipeline_mode = #tpu.pipeline_mode<synchronous>, transform_indices = @transform_5, window_bounds = array<i64: 512, 256>}, {pipeline_mode = #tpu.pipeline_mode<synchronous>, transform_indices = @transform_6, window_bounds = array<i64: 1, 256>}, {pipeline_mode = #tpu.pipeline_mode<synchronous>, transform_indices = @transform_7, window_bounds = array<i64: 1, 256>}, {pipeline_mode = #tpu.pipeline_mode<synchronous>, transform_indices = @transform_8, window_bounds = array<i64: 1, 1>}, {transform_indices = @transform_9, window_bounds = array<i64: 8, 1>}]} {
    %c0 = arith.constant 0 : index
    %c0_0 = arith.constant 0 : index
    %0 = vector.load %arg1[%c0, %c0_0] : memref<8x896xbf16, #tpu.memory_space<vmem>>, vector<8x896xbf16>
    %c0_1 = arith.constant 0 : index
    %c0_2 = arith.constant 0 : index
    %1 = vector.load %arg2[%c0_1, %c0_2] : memref<896x1024xbf16, #tpu.memory_space<vmem>>, vector<896x1024xbf16>
    %cst = arith.constant dense<0.000000e+00> : vector<8x1024xf32>
    %2 = tpu.matmul %0, %1, %cst {dimension_numbers = #tpu.dot_dimension_numbers<[1], [0], [0], [1], [0, 0, 1, 1], [], []>} : vector<8x896xbf16>, vector<896x1024xbf16>, vector<8x1024xf32> -> vector<8x1024xf32>
    %c0_3 = arith.constant 0 : index
    %c0_4 = arith.constant 0 : index
    %3 = vector.load %arg3[%c0_3, %c0_4] : memref<1x1024xf32, #tpu.memory_space<vmem>>, vector<1x1024xf32>
    %4 = vector.broadcast %3 : vector<1x1024xf32> to vector<8x1024xf32>
    %5 = arith.addf %2, %4 : vector<8x1024xf32>
    %cst_5 = arith.constant 0.000000e+00 : f32
    %6 = vector.broadcast %cst_5 : f32 to vector<8x1024xf32>
    %7 = arith.cmpf ogt, %5, %6 : vector<8x1024xf32>
    %cst_6 = arith.constant 2.000000e-01 : f32
    %8 = vector.broadcast %cst_6 : f32 to vector<8x1024xf32>
    %9 = arith.mulf %8, %5 : vector<8x1024xf32>
    %10 = arith.select %7, %5, %9 : vector<8x1024xi1>, vector<8x1024xf32>
    %11 = arith.truncf %10 : vector<8x1024xf32> to vector<8x1024xbf16>
    %c0_7 = arith.constant 0 : index
    %c0_8 = arith.constant 0 : index
    %12 = vector.load %arg4[%c0_7, %c0_8] : memref<1024x512xbf16, #tpu.memory_space<vmem>>, vector<1024x512xbf16>
    %cst_9 = arith.constant dense<0.000000e+00> : vector<8x512xf32>
    %13 = tpu.matmul %11, %12, %cst_9 {dimension_numbers = #tpu.dot_dimension_numbers<[1], [0], [0], [1], [0, 0, 1, 1], [], []>} : vector<8x1024xbf16>, vector<1024x512xbf16>, vector<8x512xf32> -> vector<8x512xf32>
    %c0_10 = arith.constant 0 : index
    %c0_11 = arith.constant 0 : index
    %14 = vector.load %arg5[%c0_10, %c0_11] : memref<1x512xf32, #tpu.memory_space<vmem>>, vector<1x512xf32>
    %15 = vector.broadcast %14 : vector<1x512xf32> to vector<8x512xf32>
    %16 = arith.addf %13, %15 : vector<8x512xf32>
    %cst_12 = arith.constant 0.000000e+00 : f32
    %17 = vector.broadcast %cst_12 : f32 to vector<8x512xf32>
    %18 = arith.cmpf ogt, %16, %17 : vector<8x512xf32>
    %cst_13 = arith.constant 2.000000e-01 : f32
    %19 = vector.broadcast %cst_13 : f32 to vector<8x512xf32>
    %20 = arith.mulf %19, %16 : vector<8x512xf32>
    %21 = arith.select %18, %16, %20 : vector<8x512xi1>, vector<8x512xf32>
    %22 = arith.truncf %21 : vector<8x512xf32> to vector<8x512xbf16>
    %c0_14 = arith.constant 0 : index
    %c0_15 = arith.constant 0 : index
    %23 = vector.load %arg6[%c0_14, %c0_15] : memref<512x256xbf16, #tpu.memory_space<vmem>>, vector<512x256xbf16>
    %cst_16 = arith.constant dense<0.000000e+00> : vector<8x256xf32>
    %24 = tpu.matmul %22, %23, %cst_16 {dimension_numbers = #tpu.dot_dimension_numbers<[1], [0], [0], [1], [0, 0, 1, 1], [], []>} : vector<8x512xbf16>, vector<512x256xbf16>, vector<8x256xf32> -> vector<8x256xf32>
    %c0_17 = arith.constant 0 : index
    %c0_18 = arith.constant 0 : index
    %25 = vector.load %arg7[%c0_17, %c0_18] : memref<1x256xf32, #tpu.memory_space<vmem>>, vector<1x256xf32>
    %26 = vector.broadcast %25 : vector<1x256xf32> to vector<8x256xf32>
    %27 = arith.addf %24, %26 : vector<8x256xf32>
    %cst_19 = arith.constant 0.000000e+00 : f32
    %28 = vector.broadcast %cst_19 : f32 to vector<8x256xf32>
    %29 = arith.cmpf ogt, %27, %28 : vector<8x256xf32>
    %cst_20 = arith.constant 2.000000e-01 : f32
    %30 = vector.broadcast %cst_20 : f32 to vector<8x256xf32>
    %31 = arith.mulf %30, %27 : vector<8x256xf32>
    %32 = arith.select %29, %27, %31 : vector<8x256xi1>, vector<8x256xf32>
    %c0_21 = arith.constant 0 : index
    %c0_22 = arith.constant 0 : index
    %33 = vector.load %arg8[%c0_21, %c0_22] : memref<1x256xbf16, #tpu.memory_space<vmem>>, vector<1x256xbf16>
    %34 = arith.extf %33 : vector<1x256xbf16> to vector<1x256xf32>
    %35 = vector.broadcast %34 : vector<1x256xf32> to vector<8x256xf32>
    %36 = arith.mulf %32, %35 : vector<8x256xf32>
    %cst_23 = arith.constant dense<0.000000e+00> : vector<8xf32>
    %37 = vector.multi_reduction <add>, %36, %cst_23 [1] : vector<8x256xf32> to vector<8xf32>
    %38 = vector.shape_cast %37 : vector<8xf32> to vector<8x1xf32>
    %c0_24 = arith.constant 0 : index
    %c0_25 = arith.constant 0 : index
    %39 = vector.load %arg9[%c0_24, %c0_25] : memref<1x1xf32, #tpu.memory_space<vmem>>, vector<1x1xf32>
    %40 = vector.broadcast %39 : vector<1x1xf32> to vector<8x1xf32>
    %41 = arith.addf %38, %40 : vector<8x1xf32>
    %42 = arith.negf %41 : vector<8x1xf32>
    %43 = math.exp %42 : vector<8x1xf32>
    %cst_26 = arith.constant 1.000000e+00 : f32
    %44 = vector.broadcast %cst_26 : f32 to vector<8x1xf32>
    %45 = arith.addf %44, %43 : vector<8x1xf32>
    %46 = arith.divf %44, %45 : vector<8x1xf32>
    %c0_27 = arith.constant 0 : index
    %c0_28 = arith.constant 0 : index
    %47 = vector.load %arg10[%c0_27, %c0_28] : memref<8x1xf32, #tpu.memory_space<vmem>>, vector<8x1xf32>
    tpu.vector_store %arg10[%c0_27, %c0_28], %46 {strides = array<i32>} : memref<8x1xf32, #tpu.memory_space<vmem>>, vector<8x1xf32>,
    return
  }
  func.func @transform_0(%arg0: i32) -> (i32, i32) {
    %c0_i32 = arith.constant 0 : i32
    %c0_i32_0 = arith.constant 0 : i32
    return %arg0, %c0_i32 : i32, i32
  }
  func.func @transform_1(%arg0: i32) -> (i32, i32) {
    %c0_i32 = arith.constant 0 : i32
    %c0_i32_0 = arith.constant 0 : i32
    %c0_i32_1 = arith.constant 0 : i32
    return %c0_i32, %c0_i32_0 : i32, i32
  }
  func.func @transform_2(%arg0: i32) -> (i32, i32) {
    %c0_i32 = arith.constant 0 : i32
    %c0_i32_0 = arith.constant 0 : i32
    %c0_i32_1 = arith.constant 0 : i32
    return %c0_i32, %c0_i32_0 : i32, i32
  }
  func.func @transform_3(%arg0: i32) -> (i32, i32) {
    %c0_i32 = arith.constant 0 : i32
    %c0_i32_0 = arith.constant 0 : i32
    %c0_i32_1 = arith.constant 0 : i32
    return %c0_i32, %c0_i32_0 : i32, i32
  }
  func.func @transform_4(%arg0: i32) -> (i32, i32) {
    %c0_i32 = arith.constant 0 : i32
    %c0_i32_0 = arith.constant 0 : i32
    %c0_i32_1 = arith.constant 0 : i32
    return %c0_i32, %c0_i32_0 : i32, i32
  }
  func.func @transform_5(%arg0: i32) -> (i32, i32) {
    %c0_i32 = arith.constant 0 : i32
    %c0_i32_0 = arith.constant 0 : i32
    %c0_i32_1 = arith.constant 0 : i32
    return %c0_i32, %c0_i32_0 : i32, i32
  }
  func.func @transform_6(%arg0: i32) -> (i32, i32) {
    %c0_i32 = arith.constant 0 : i32
    %c0_i32_0 = arith.constant 0 : i32
    %c0_i32_1 = arith.constant 0 : i32
    return %c0_i32, %c0_i32_0 : i32, i32
  }
  func.func @transform_7(%arg0: i32) -> (i32, i32) {
    %c0_i32 = arith.constant 0 : i32
    %c0_i32_0 = arith.constant 0 : i32
    %c0_i32_1 = arith.constant 0 : i32
    return %c0_i32, %c0_i32_0 : i32, i32
  }
  func.func @transform_8(%arg0: i32) -> (i32, i32) {
    %c0_i32 = arith.constant 0 : i32
    %c0_i32_0 = arith.constant 0 : i32
    %c0_i32_1 = arith.constant 0 : i32
    return %c0_i32, %c0_i32_0 : i32, i32
  }
  func.func @transform_9(%arg0: i32) -> (i32, i32) {
    %c0_i32 = arith.constant 0 : i32
    %c0_i32_0 = arith.constant 0 : i32
    return %arg0, %c0_i32 : i32, i32
  }
}

</mosaic_0001>

<llo_original>
// kernel: tpu_custom_call.1
$region0: #{tpu_custom_call.1}
  #allocation0 [shape = 'u32[]', space=smem, size = 0x4, offset = 0x4, fixed_abs, tag = 'smem constant byte address 0x4 - core index']
  #allocation1 [shape = 'u32[144,128]{1,0:T(1,128)}', space=vmem, size = 0x12000, scoped, tag = 'internal scratch']
  #allocation2 [shape = 'f32[1,1]{1,0:T(1,128)S(1)}', space=vmem, size = 0x200, scoped, tag = 'scoped memory for tpu_custom_call.1']
  %s0 = inlined_call_operand.hbm [shape: bf16[8,896], index: 0, kind: input, shape index: {}]
  %s1 = inlined_call_operand.hbm [shape: bf16[896,1024], index: 1, kind: input, shape index: {}]
  %s2 = inlined_call_operand.hbm [shape: f32[1,1024], index: 2, kind: input, shape index: {}]
  %s3 = inlined_call_operand.hbm [shape: bf16[1024,512], index: 3, kind: input, shape index: {}]
  %s4 = inlined_call_operand.hbm [shape: f32[1,512], index: 4, kind: input, shape index: {}]
  %s5 = inlined_call_operand.hbm [shape: bf16[512,256], index: 5, kind: input, shape index: {}]
  %s6 = inlined_call_operand.hbm [shape: f32[1,256], index: 6, kind: input, shape index: {}]
  %s7 = inlined_call_operand.hbm [shape: bf16[1,256], index: 7, kind: input, shape index: {}]
  %s8 = inlined_call_operand.<no memory space> [shape: f32[1,1], index: 8, kind: input, shape index: {}]
  %s9 = inlined_call_operand.vmem [shape: f32[8,1], index: 9, kind: output, shape index: {}]
  %s10 = sld [smem:[#allocation0]]
  $region78: #{tpu_custom_call.1} parent=0
    _
  %s12 = ssub.s32 1, %s10
  %s13 = scalar_select 0, %s12, %s10
  %v14 = vstv %s8
  %15 = vst [vmem:[#allocation2] sm:$0x1] %v14
  $region1: #{tpu_custom_call.1} parent=0
    #allocation3 [shape = 'u8[14336]{0}', space=vmem, size = 0x3800, scoped, tag = 'input window, operand 0, single buffered']
    #allocation4 [shape = 's32[1]{0}', space=sflag, size = 0x4, scoped, tag = 'scoped memory for tpu_custom_call.1']
    #allocation5 [shape = 'u8[1835008]{0}', space=vmem, size = 0x1c0000, scoped, tag = 'input window, operand 1, single buffered']
    #allocation6 [shape = 's32[1]{0}', space=sflag, size = 0x4, scoped, tag = 'scoped memory for tpu_custom_call.1']
    #allocation7 [shape = 'u8[4096]{0}', space=vmem, size = 0x1000, scoped, tag = 'input window, operand 2, single buffered']
    #allocation8 [shape = 'u8[1048576]{0}', space=vmem, size = 0x100000, scoped, tag = 'input window, operand 3, single buffered']
    #allocation9 [shape = 's32[1]{0}', space=sflag, size = 0x4, scoped, tag = 'scoped memory for tpu_custom_call.1']
    #allocation10 [shape = 'u8[2048]{0}', space=vmem, size = 0x800, scoped, tag = 'input window, operand 4, single buffered']
    #allocation11 [shape = 'u8[262144]{0}', space=vmem, size = 0x40000, scoped, tag = 'input window, operand 5, single buffered']
    #allocation12 [shape = 's32[1]{0}', space=sflag, size = 0x4, scoped, tag = 'scoped memory for tpu_custom_call.1']
    #allocation13 [shape = 'u8[1024]{0}', space=vmem, size = 0x400, scoped, tag = 'input window, operand 6, single buffered']
    #allocation14 [shape = 'u8[1024]{0}', space=vmem, size = 0x400, scoped, tag = 'input window, operand 7, single buffered']
    #allocation15 [shape = 's32[1]{0}', space=sflag, size = 0x4, scoped, tag = 'scoped memory for tpu_custom_call.1']
    %16 = vsyncpa [#allocation4], 0
    %17 = vsyncpa [#allocation6], 0
    %18 = vsyncpa [#allocation9], 0
    %19 = vsyncpa [#allocation12], 0
    %20 = vsyncpa [#allocation15], 0
    // Predicated region
    $region2: #{tpu_custom_call.1} parent=1 // pred_check
      _
    $region3: #{tpu_custom_call.1} parent=1 // pred_check_branch
      %22 = sbr.rel (0) target = $region5
    $region4: #{tpu_custom_call.1} parent=1 // pred_region
      %s24 = ssub.s32 448, 448
      %25 = vsyncadd [#allocation4], %s24
      %s27 = sshll.u32 [#allocation3], 4
      %s28 = int_to_ptr.vmem [resolvable:$true] %s27
      %30 = dma.hbm_to_vmem [thread:$0]  %s0, 448, %s28, [#allocation4]
    $region5: #{tpu_custom_call.1} parent=1 // pred_fallthru
      _
    // Predicated region
    $region6: #{tpu_custom_call.1} parent=1 // pred_check
      _
    $region7: #{tpu_custom_call.1} parent=1 // pred_check_branch
      %32 = sbr.rel (0) target = $region9
    $region8: #{tpu_custom_call.1} parent=1 // pred_region
      %s34 = ssub.s32 57344, 57344
      %35 = vsyncadd [#allocation6], %s34
      %s36 = sshll.u32 [#allocation5], 4
      %s37 = int_to_ptr.vmem [resolvable:$true] %s36
      %42 = dma.hbm_to_vmem [thread:$0]  %s1, 57344, %s37, [#allocation6], 512, 512, 32
    $region9: #{tpu_custom_call.1} parent=1 // pred_fallthru
      _
    // Predicated region
    $region10: #{tpu_custom_call.1} parent=1 // pred_check
      _
    $region11: #{tpu_custom_call.1} parent=1 // pred_check_branch
      %44 = sbr.rel (0) target = $region13
    $region12: #{tpu_custom_call.1} parent=1 // pred_region
      %s46 = ssub.s32 128, 128
      %47 = vsyncadd [#allocation6], %s46
      %s49 = sshll.u32 [#allocation7], 4
      %s50 = int_to_ptr.vmem [resolvable:$true] %s49
      %52 = dma.hbm_to_vmem [thread:$0]  %s2, 128, %s50, [#allocation6]
    $region13: #{tpu_custom_call.1} parent=1 // pred_fallthru
      _
    // Predicated region
    $region14: #{tpu_custom_call.1} parent=1 // pred_check
      _
    $region15: #{tpu_custom_call.1} parent=1 // pred_check_branch
      %54 = sbr.rel (0) target = $region17
    $region16: #{tpu_custom_call.1} parent=1 // pred_region
      %s56 = ssub.s32 32768, 32768
      %57 = vsyncadd [#allocation9], %s56
      %s58 = sshll.u32 [#allocation8], 4
      %s59 = int_to_ptr.vmem [resolvable:$true] %s58
      %64 = dma.hbm_to_vmem [thread:$0]  %s3, 32768, %s59, [#allocation9], 256, 256, 16
    $region17: #{tpu_custom_call.1} parent=1 // pred_fallthru
      _
    // Predicated region
    $region18: #{tpu_custom_call.1} parent=1 // pred_check
      _
    $region19: #{tpu_custom_call.1} parent=1 // pred_check_branch
      %66 = sbr.rel (0) target = $region21
    $region20: #{tpu_custom_call.1} parent=1 // pred_region
      %s68 = ssub.s32 64, 64
      %69 = vsyncadd [#allocation9], %s68
      %s71 = sshll.u32 [#allocation10], 4
      %s72 = int_to_ptr.vmem [resolvable:$true] %s71
      %74 = dma.hbm_to_vmem [thread:$0]  %s4, 64, %s72, [#allocation9]
    $region21: #{tpu_custom_call.1} parent=1 // pred_fallthru
      _
    // Predicated region
    $region22: #{tpu_custom_call.1} parent=1 // pred_check
      _
    $region23: #{tpu_custom_call.1} parent=1 // pred_check_branch
      %76 = sbr.rel (0) target = $region25
    $region24: #{tpu_custom_call.1} parent=1 // pred_region
      %s78 = ssub.s32 8192, 8192
      %79 = vsyncadd [#allocation12], %s78
      %s80 = sshll.u32 [#allocation11], 4
      %s81 = int_to_ptr.vmem [resolvable:$true] %s80
      %86 = dma.hbm_to_vmem [thread:$0]  %s5, 8192, %s81, [#allocation12], 128, 128, 8
    $region25: #{tpu_custom_call.1} parent=1 // pred_fallthru
      _
    // Predicated region
    $region26: #{tpu_custom_call.1} parent=1 // pred_check
      _
    $region27: #{tpu_custom_call.1} parent=1 // pred_check_branch
      %88 = sbr.rel (0) target = $region29
    $region28: #{tpu_custom_call.1} parent=1 // pred_region
      %s90 = ssub.s32 32, 32
      %91 = vsyncadd [#allocation12], %s90
      %s93 = sshll.u32 [#allocation13], 4
      %s94 = int_to_ptr.vmem [resolvable:$true] %s93
      %96 = dma.hbm_to_vmem [thread:$0]  %s6, 32, %s94, [#allocation12]
    $region29: #{tpu_custom_call.1} parent=1 // pred_fallthru
      _
    // Predicated region
    $region30: #{tpu_custom_call.1} parent=1 // pred_check
      _
    $region31: #{tpu_custom_call.1} parent=1 // pred_check_branch
      %98 = sbr.rel (0) target = $region33
    $region32: #{tpu_custom_call.1} parent=1 // pred_region
      %s100 = ssub.s32 32, 32
      %101 = vsyncadd [#allocation15], %s100
      %s103 = sshll.u32 [#allocation14], 4
      %s104 = int_to_ptr.vmem [resolvable:$true] %s103
      %106 = dma.hbm_to_vmem [thread:$0]  %s7, 32, %s104, [#allocation15]
    $region33: #{tpu_custom_call.1} parent=1 // pred_fallthru
      _
    // Predicated region
    $region34: #{tpu_custom_call.1} parent=1 // pred_check
      _
    $region35: #{tpu_custom_call.1} parent=1 // pred_check_branch
      %108 = sbr.rel (0) target = $region37
    $region36: #{tpu_custom_call.1} parent=1 // pred_region
      _
    $region37: #{tpu_custom_call.1} parent=1 // pred_fallthru
      _
    // Predicated region
    $region38: #{tpu_custom_call.1} parent=1 // pred_check
      _
    $region39: #{tpu_custom_call.1} parent=1 // pred_check_branch
      %110 = sbr.rel (0) target = $region41
    $region40: #{tpu_custom_call.1} parent=1 // pred_region
      %111 = dma.done [#allocation4], 448
    $region41: #{tpu_custom_call.1} parent=1 // pred_fallthru
      _
    // Predicated region
    $region42: #{tpu_custom_call.1} parent=1 // pred_check
      _
    $region43: #{tpu_custom_call.1} parent=1 // pred_check_branch
      %113 = sbr.rel (0) target = $region45
    $region44: #{tpu_custom_call.1} parent=1 // pred_region
      %114 = dma.done [#allocation6], 57344
    $region45: #{tpu_custom_call.1} parent=1 // pred_fallthru
      _
    // Predicated region
    $region46: #{tpu_custom_call.1} parent=1 // pred_check
      _
    $region47: #{tpu_custom_call.1} parent=1 // pred_check_branch
      %116 = sbr.rel (0) target = $region49
    $region48: #{tpu_custom_call.1} parent=1 // pred_region
      %117 = dma.done [#allocation6], 128
    $region49: #{tpu_custom_call.1} parent=1 // pred_fallthru
      _
    // Predicated region
    $region50: #{tpu_custom_call.1} parent=1 // pred_check
      _
    $region51: #{tpu_custom_call.1} parent=1 // pred_check_branch
      %119 = sbr.rel (0) target = $region53
    $region52: #{tpu_custom_call.1} parent=1 // pred_region
      %120 = dma.done [#allocation9], 32768
    $region53: #{tpu_custom_call.1} parent=1 // pred_fallthru
      _
    // Predicated region
    $region54: #{tpu_custom_call.1} parent=1 // pred_check
      _
    $region55: #{tpu_custom_call.1} parent=1 // pred_check_branch
      %122 = sbr.rel (0) target = $region57
    $region56: #{tpu_custom_call.1} parent=1 // pred_region
      %123 = dma.done [#allocation9], 64
    $region57: #{tpu_custom_call.1} parent=1 // pred_fallthru
      _
    // Predicated region
    $region58: #{tpu_custom_call.1} parent=1 // pred_check
      _
    $region59: #{tpu_custom_call.1} parent=1 // pred_check_branch
      %125 = sbr.rel (0) target = $region61
    $region60: #{tpu_custom_call.1} parent=1 // pred_region
      %126 = dma.done [#allocation12], 8192
    $region61: #{tpu_custom_call.1} parent=1 // pred_fallthru
      _
    // Predicated region
    $region62: #{tpu_custom_call.1} parent=1 // pred_check
      _
    $region63: #{tpu_custom_call.1} parent=1 // pred_check_branch
      %128 = sbr.rel (0) target = $region65
    $region64: #{tpu_custom_call.1} parent=1 // pred_region
      %129 = dma.done [#allocation12], 32
    $region65: #{tpu_custom_call.1} parent=1 // pred_fallthru
      _
    // Predicated region
    $region66: #{tpu_custom_call.1} parent=1 // pred_check
      _
    $region67: #{tpu_custom_call.1} parent=1 // pred_check_branch
      %131 = sbr.rel (0) target = $region69
    $region68: #{tpu_custom_call.1} parent=1 // pred_region
      %132 = dma.done [#allocation15], 32
    $region69: #{tpu_custom_call.1} parent=1 // pred_fallthru
      _
    %v134 = vld [vmem:[#allocation3] sm:$0xff]
    %v135 = vld [vmem:[#allocation3 + $0x8] sm:$0xff]
    %v136 = vld [vmem:[#allocation3 + $0x10] sm:$0xff]
    %v137 = vld [vmem:[#allocation3 + $0x18] sm:$0xf]
    %v138 = vld [vmem:[#allocation5] sm:$0xff]
    %v139 = vld [vmem:[#allocation5 + $0x8] sm:$0xff]
    %v140 = vld [vmem:[#allocation5 + $0x10] sm:$0xff]
    %v141 = vld [vmem:[#allocation5 + $0x18] sm:$0xff]
    %v142 = vld [vmem:[#allocation5 + $0x20] sm:$0xff]
    %v143 = vld [vmem:[#allocation5 + $0x28] sm:$0xff]
    %v144 = vld [vmem:[#allocation5 + $0x30] sm:$0xff]
    %v145 = vld [vmem:[#allocation5 + $0x38] sm:$0xff]
    %v146 = vld [vmem:[#allocation5 + $0x40] sm:$0xff]
    %v147 = vld [vmem:[#allocation5 + $0x48] sm:$0xff]
    %v148 = vld [vmem:[#allocation5 + $0x50] sm:$0xff]
    %v149 = vld [vmem:[#allocation5 + $0x58] sm:$0xff]
    %v150 = vld [vmem:[#allocation5 + $0x60] sm:$0xff]
    %v151 = vld [vmem:[#allocation5 + $0x68] sm:$0xff]
    %v152 = vld [vmem:[#allocation5 + $0x70] sm:$0xff]
    %v153 = vld [vmem:[#allocation5 + $0x78] sm:$0xff]
    %v154 = vld [vmem:[#allocation5 + $0x80] sm:$0xff]
    %v155 = vld [vmem:[#allocation5 + $0x88] sm:$0xff]
    %v156 = vld [vmem:[#allocation5 + $0x90] sm:$0xff]
    %v157 = vld [vmem:[#allocation5 + $0x98] sm:$0xff]
    %v158 = vld [vmem:[#allocation5 + $0xa0] sm:$0xff]
    %v159 = vld [vmem:[#allocation5 + $0xa8] sm:$0xff]
    %v160 = vld [vmem:[#allocation5 + $0xb0] sm:$0xff]
    %v161 = vld [vmem:[#allocation5 + $0xb8] sm:$0xff]
    %v162 = vld [vmem:[#allocation5 + $0xc0] sm:$0xff]
    %v163 = vld [vmem:[#allocation5 + $0xc8] sm:$0xff]
    %v164 = vld [vmem:[#allocation5 + $0xd0] sm:$0xff]
    %v165 = vld [vmem:[#allocation5 + $0xd8] sm:$0xff]
    %v166 = vld [vmem:[#allocation5 + $0xe0] sm:$0xff]
    %v167 = vld [vmem:[#allocation5 + $0xe8] sm:$0xff]
    %v168 = vld [vmem:[#allocation5 + $0xf0] sm:$0xff]
    %v169 = vld [vmem:[#allocation5 + $0xf8] sm:$0xff]
    %v170 = vld [vmem:[#allocation5 + $0x100] sm:$0xff]
    %v171 = vld [vmem:[#allocation5 + $0x108] sm:$0xff]
    %v172 = vld [vmem:[#allocation5 + $0x110] sm:$0xff]
    %v173 = vld [vmem:[#allocation5 + $0x118] sm:$0xff]
    %v174 = vld [vmem:[#allocation5 + $0x120] sm:$0xff]
    %v175 = vld [vmem:[#allocation5 + $0x128] sm:$0xff]
    %v176 = vld [vmem:[#allocation5 + $0x130] sm:$0xff]
    %v177 = vld [vmem:[#allocation5 + $0x138] sm:$0xff]
    %v178 = vld [vmem:[#allocation5 + $0x140] sm:$0xff]
    %v179 = vld [vmem:[#allocation5 + $0x148] sm:$0xff]
    %v180 = vld [vmem:[#allocation5 + $0x150] sm:$0xff]
    %v181 = vld [vmem:[#allocation5 + $0x158] sm:$0xff]
    %v182 = vld [vmem:[#allocation5 + $0x160] sm:$0xff]
    %v183 = vld [vmem:[#allocation5 + $0x168] sm:$0xff]
    %v184 = vld [vmem:[#allocation5 + $0x170] sm:$0xff]
    %v185 = vld [vmem:[#allocation5 + $0x178] sm:$0xff]
    %v186 = vld [vmem:[#allocation5 + $0x180] sm:$0xff]
    %v187 = vld [vmem:[#allocation5 + $0x188] sm:$0xff]
    %v188 = vld [vmem:[#allocation5 + $0x190] sm:$0xff]
    %v189 = vld [vmem:[#allocation5 + $0x198] sm:$0xff]
    %v190 = vld [vmem:[#allocation5 + $0x1a0] sm:$0xff]
    %v191 = vld [vmem:[#allocation5 + $0x1a8] sm:$0xff]
    %v192 = vld [vmem:[#allocation5 + $0x1b0] sm:$0xff]
    %v193 = vld [vmem:[#allocation5 + $0x1b8] sm:$0xff]
    %v194 = vld [vmem:[#allocation5 + $0x1c0] sm:$0xff]
    %v195 = vld [vmem:[#allocation5 + $0x1c8] sm:$0xff]
    %v196 = vld [vmem:[#allocation5 + $0x1d0] sm:$0xff]
    %v197 = vld [vmem:[#allocation5 + $0x1d8] sm:$0xff]
    %v198 = vld [vmem:[#allocation5 + $0x1e0] sm:$0xff]
    %v199 = vld [vmem:[#allocation5 + $0x1e8] sm:$0xff]
    %v200 = vld [vmem:[#allocation5 + $0x1f0] sm:$0xff]
    %v201 = vld [vmem:[#allocation5 + $0x1f8] sm:$0xff]
    %v202 = vld [vmem:[#allocation5 + $0x200] sm:$0xff]
    %v203 = vld [vmem:[#allocation5 + $0x208] sm:$0xff]
    %v204 = vld [vmem:[#allocation5 + $0x210] sm:$0xff]
    %v205 = vld [vmem:[#allocation5 + $0x218] sm:$0xff]
    %v206 = vld [vmem:[#allocation5 + $0x220] sm:$0xff]
    %v207 = vld [vmem:[#allocation5 + $0x228] sm:$0xff]
    %v208 = vld [vmem:[#allocation5 + $0x230] sm:$0xff]
    %v209 = vld [vmem:[#allocation5 + $0x238] sm:$0xff]
    %v210 = vld [vmem:[#allocation5 + $0x240] sm:$0xff]
    %v211 = vld [vmem:[#allocation5 + $0x248] sm:$0xff]
    %v212 = vld [vmem:[#allocation5 + $0x250] sm:$0xff]
    %v213 = vld [vmem:[#allocation5 + $0x258] sm:$0xff]
    %v214 = vld [vmem:[#allocation5 + $0x260] sm:$0xff]
    %v215 = vld [vmem:[#allocation5 + $0x268] sm:$0xff]
    %v216 = vld [vmem:[#allocation5 + $0x270] sm:$0xff]
    %v217 = vld [vmem:[#allocation5 + $0x278] sm:$0xff]
    %v218 = vld [vmem:[#allocation5 + $0x280] sm:$0xff]
    %v219 = vld [vmem:[#allocation5 + $0x288] sm:$0xff]
    %v220 = vld [vmem:[#allocation5 + $0x290] sm:$0xff]
    %v221 = vld [vmem:[#allocation5 + $0x298] sm:$0xff]
    %v222 = vld [vmem:[#allocation5 + $0x2a0] sm:$0xff]
    %v223 = vld [vmem:[#allocation5 + $0x2a8] sm:$0xff]
    %v224 = vld [vmem:[#allocation5 + $0x2b0] sm:$0xff]
    %v225 = vld [vmem:[#allocation5 + $0x2b8] sm:$0xff]
    %v226 = vld [vmem:[#allocation5 + $0x2c0] sm:$0xff]
    %v227 = vld [vmem:[#allocation5 + $0x2c8] sm:$0xff]
    %v228 = vld [vmem:[#allocation5 + $0x2d0] sm:$0xff]
    %v229 = vld [vmem:[#allocation5 + $0x2d8] sm:$0xff]
    %v230 = vld [vmem:[#allocation5 + $0x2e0] sm:$0xff]
    %v231 = vld [vmem:[#allocation5 + $0x2e8] sm:$0xff]
    %v232 = vld [vmem:[#allocation5 + $0x2f0] sm:$0xff]
    %v233 = vld [vmem:[#allocation5 + $0x2f8] sm:$0xff]
    %v234 = vld [vmem:[#allocation5 + $0x300] sm:$0xff]
    %v235 = vld [vmem:[#allocation5 + $0x308] sm:$0xff]
    %v236 = vld [vmem:[#allocation5 + $0x310] sm:$0xff]
    %v237 = vld [vmem:[#allocation5 + $0x318] sm:$0xff]
    %v238 = vld [vmem:[#allocation5 + $0x320] sm:$0xff]
    %v239 = vld [vmem:[#allocation5 + $0x328] sm:$0xff]
    %v240 = vld [vmem:[#allocation5 + $0x330] sm:$0xff]
    %v241 = vld [vmem:[#allocation5 + $0x338] sm:$0xff]
    %v242 = vld [vmem:[#allocation5 + $0x340] sm:$0xff]
    %v243 = vld [vmem:[#allocation5 + $0x348] sm:$0xff]
    %v244 = vld [vmem:[#allocation5 + $0x350] sm:$0xff]
    %v245 = vld [vmem:[#allocation5 + $0x358] sm:$0xff]
    %v246 = vld [vmem:[#allocation5 + $0x360] sm:$0xff]
    %v247 = vld [vmem:[#allocation5 + $0x368] sm:$0xff]
    %v248 = vld [vmem:[#allocation5 + $0x370] sm:$0xff]
    %v249 = vld [vmem:[#allocation5 + $0x378] sm:$0xff]
    %v250 = vld [vmem:[#allocation5 + $0x380] sm:$0xff]
    %v251 = vld [vmem:[#allocation5 + $0x388] sm:$0xff]
    %v252 = vld [vmem:[#allocation5 + $0x390] sm:$0xff]
    %v253 = vld [vmem:[#allocation5 + $0x398] sm:$0xff]
    %v254 = vld [vmem:[#allocation5 + $0x3a0] sm:$0xff]
    %v255 = vld [vmem:[#allocation5 + $0x3a8] sm:$0xff]
    %v256 = vld [vmem:[#allocation5 + $0x3b0] sm:$0xff]
    %v257 = vld [vmem:[#allocation5 + $0x3b8] sm:$0xff]
    %v258 = vld [vmem:[#allocation5 + $0x3c0] sm:$0xff]
    %v259 = vld [vmem:[#allocation5 + $0x3c8] sm:$0xff]
    %v260 = vld [vmem:[#allocation5 + $0x3d0] sm:$0xff]
    %v261 = vld [vmem:[#allocation5 + $0x3d8] sm:$0xff]
    %v262 = vld [vmem:[#allocation5 + $0x3e0] sm:$0xff]
    %v263 = vld [vmem:[#allocation5 + $0x3e8] sm:$0xff]
    %v264 = vld [vmem:[#allocation5 + $0x3f0] sm:$0xff]
    %v265 = vld [vmem:[#allocation5 + $0x3f8] sm:$0xff]
    %v266 = vld [vmem:[#allocation5 + $0x400] sm:$0xff]
    %v267 = vld [vmem:[#allocation5 + $0x408] sm:$0xff]
    %v268 = vld [vmem:[#allocation5 + $0x410] sm:$0xff]
    %v269 = vld [vmem:[#allocation5 + $0x418] sm:$0xff]
    %v270 = vld [vmem:[#allocation5 + $0x420] sm:$0xff]
    %v271 = vld [vmem:[#allocation5 + $0x428] sm:$0xff]
    %v272 = vld [vmem:[#allocation5 + $0x430] sm:$0xff]
    %v273 = vld [vmem:[#allocation5 + $0x438] sm:$0xff]
    %v274 = vld [vmem:[#allocation5 + $0x440] sm:$0xff]
    %v275 = vld [vmem:[#allocation5 + $0x448] sm:$0xff]
    %v276 = vld [vmem:[#allocation5 + $0x450] sm:$0xff]
    %v277 = vld [vmem:[#allocation5 + $0x458] sm:$0xff]
    %v278 = vld [vmem:[#allocation5 + $0x460] sm:$0xff]
    %v279 = vld [vmem:[#allocation5 + $0x468] sm:$0xff]
    %v280 = vld [vmem:[#allocation5 + $0x470] sm:$0xff]
    %v281 = vld [vmem:[#allocation5 + $0x478] sm:$0xff]
    %v282 = vld [vmem:[#allocation5 + $0x480] sm:$0xff]
    %v283 = vld [vmem:[#allocation5 + $0x488] sm:$0xff]
    %v284 = vld [vmem:[#allocation5 + $0x490] sm:$0xff]
    %v285 = vld [vmem:[#allocation5 + $0x498] sm:$0xff]
    %v286 = vld [vmem:[#allocation5 + $0x4a0] sm:$0xff]
    %v287 = vld [vmem:[#allocation5 + $0x4a8] sm:$0xff]
    %v288 = vld [vmem:[#allocation5 + $0x4b0] sm:$0xff]
    %v289 = vld [vmem:[#allocation5 + $0x4b8] sm:$0xff]
    %v290 = vld [vmem:[#allocation5 + $0x4c0] sm:$0xff]
    %v291 = vld [vmem:[#allocation5 + $0x4c8] sm:$0xff]
    %v292 = vld [vmem:[#allocation5 + $0x4d0] sm:$0xff]
    %v293 = vld [vmem:[#allocation5 + $0x4d8] sm:$0xff]
    %v294 = vld [vmem:[#allocation5 + $0x4e0] sm:$0xff]
    %v295 = vld [vmem:[#allocation5 + $0x4e8] sm:$0xff]
    %v296 = vld [vmem:[#allocation5 + $0x4f0] sm:$0xff]
    %v297 = vld [vmem:[#allocation5 + $0x4f8] sm:$0xff]
    %v298 = vld [vmem:[#allocation5 + $0x500] sm:$0xff]
    %v299 = vld [vmem:[#allocation5 + $0x508] sm:$0xff]
    %v300 = vld [vmem:[#allocation5 + $0x510] sm:$0xff]
    %v301 = vld [vmem:[#allocation5 + $0x518] sm:$0xff]
    %v302 = vld [vmem:[#allocation5 + $0x520] sm:$0xff]
    %v303 = vld [vmem:[#allocation5 + $0x528] sm:$0xff]
    %v304 = vld [vmem:[#allocation5 + $0x530] sm:$0xff]
    %v305 = vld [vmem:[#allocation5 + $0x538] sm:$0xff]
    %v306 = vld [vmem:[#allocation5 + $0x540] sm:$0xff]
    %v307 = vld [vmem:[#allocation5 + $0x548] sm:$0xff]
    %v308 = vld [vmem:[#allocation5 + $0x550] sm:$0xff]
    %v309 = vld [vmem:[#allocation5 + $0x558] sm:$0xff]
    %v310 = vld [vmem:[#allocation5 + $0x560] sm:$0xff]
    %v311 = vld [vmem:[#allocation5 + $0x568] sm:$0xff]
    %v312 = vld [vmem:[#allocation5 + $0x570] sm:$0xff]
    %v313 = vld [vmem:[#allocation5 + $0x578] sm:$0xff]
    %v314 = vld [vmem:[#allocation5 + $0x580] sm:$0xff]
    %v315 = vld [vmem:[#allocation5 + $0x588] sm:$0xff]
    %v316 = vld [vmem:[#allocation5 + $0x590] sm:$0xff]
    %v317 = vld [vmem:[#allocation5 + $0x598] sm:$0xff]
    %v318 = vld [vmem:[#allocation5 + $0x5a0] sm:$0xff]
    %v319 = vld [vmem:[#allocation5 + $0x5a8] sm:$0xff]
    %v320 = vld [vmem:[#allocation5 + $0x5b0] sm:$0xff]
    %v321 = vld [vmem:[#allocation5 + $0x5b8] sm:$0xff]
    %v322 = vld [vmem:[#allocation5 + $0x5c0] sm:$0xff]
    %v323 = vld [vmem:[#allocation5 + $0x5c8] sm:$0xff]
    %v324 = vld [vmem:[#allocation5 + $0x5d0] sm:$0xff]
    %v325 = vld [vmem:[#allocation5 + $0x5d8] sm:$0xff]
    %v326 = vld [vmem:[#allocation5 + $0x5e0] sm:$0xff]
    %v327 = vld [vmem:[#allocation5 + $0x5e8] sm:$0xff]
    %v328 = vld [vmem:[#allocation5 + $0x5f0] sm:$0xff]
    %v329 = vld [vmem:[#allocation5 + $0x5f8] sm:$0xff]
    %v330 = vld [vmem:[#allocation5 + $0x600] sm:$0xff]
    %v331 = vld [vmem:[#allocation5 + $0x608] sm:$0xff]
    %v332 = vld [vmem:[#allocation5 + $0x610] sm:$0xff]
    %v333 = vld [vmem:[#allocation5 + $0x618] sm:$0xff]
    %v334 = vld [vmem:[#allocation5 + $0x620] sm:$0xff]
    %v335 = vld [vmem:[#allocation5 + $0x628] sm:$0xff]
    %v336 = vld [vmem:[#allocation5 + $0x630] sm:$0xff]
    %v337 = vld [vmem:[#allocation5 + $0x638] sm:$0xff]
    %v338 = vld [vmem:[#allocation5 + $0x640] sm:$0xff]
    %v339 = vld [vmem:[#allocation5 + $0x648] sm:$0xff]
    %v340 = vld [vmem:[#allocation5 + $0x650] sm:$0xff]
    %v341 = vld [vmem:[#allocation5 + $0x658] sm:$0xff]
    %v342 = vld [vmem:[#allocation5 + $0x660] sm:$0xff]
    %v343 = vld [vmem:[#allocation5 + $0x668] sm:$0xff]
    %v344 = vld [vmem:[#allocation5 + $0x670] sm:$0xff]
    %v345 = vld [vmem:[#allocation5 + $0x678] sm:$0xff]
    %v346 = vld [vmem:[#allocation5 + $0x680] sm:$0xff]
    %v347 = vld [vmem:[#allocation5 + $0x688] sm:$0xff]
    %v348 = vld [vmem:[#allocation5 + $0x690] sm:$0xff]
    %v349 = vld [vmem:[#allocation5 + $0x698] sm:$0xff]
    %v350 = vld [vmem:[#allocation5 + $0x6a0] sm:$0xff]
    %v351 = vld [vmem:[#allocation5 + $0x6a8] sm:$0xff]
    %v352 = vld [vmem:[#allocation5 + $0x6b0] sm:$0xff]
    %v353 = vld [vmem:[#allocation5 + $0x6b8] sm:$0xff]
    %v354 = vld [vmem:[#allocation5 + $0x6c0] sm:$0xff]
    %v355 = vld [vmem:[#allocation5 + $0x6c8] sm:$0xff]
    %v356 = vld [vmem:[#allocation5 + $0x6d0] sm:$0xff]
    %v357 = vld [vmem:[#allocation5 + $0x6d8] sm:$0xff]
    %v358 = vld [vmem:[#allocation5 + $0x6e0] sm:$0xff]
    %v359 = vld [vmem:[#allocation5 + $0x6e8] sm:$0xff]
    %v360 = vld [vmem:[#allocation5 + $0x6f0] sm:$0xff]
    %v361 = vld [vmem:[#allocation5 + $0x6f8] sm:$0xff]
    %v362 = vld [vmem:[#allocation5 + $0x700] sm:$0xff]
    %v363 = vld [vmem:[#allocation5 + $0x708] sm:$0xff]
    %v364 = vld [vmem:[#allocation5 + $0x710] sm:$0xff]
    %v365 = vld [vmem:[#allocation5 + $0x718] sm:$0xff]
    %v366 = vld [vmem:[#allocation5 + $0x720] sm:$0xff]
    %v367 = vld [vmem:[#allocation5 + $0x728] sm:$0xff]
    %v368 = vld [vmem:[#allocation5 + $0x730] sm:$0xff]
    %v369 = vld [vmem:[#allocation5 + $0x738] sm:$0xff]
    %v370 = vld [vmem:[#allocation5 + $0x740] sm:$0xff]
    %v371 = vld [vmem:[#allocation5 + $0x748] sm:$0xff]
    %v372 = vld [vmem:[#allocation5 + $0x750] sm:$0xff]
    %v373 = vld [vmem:[#allocation5 + $0x758] sm:$0xff]
    %v374 = vld [vmem:[#allocation5 + $0x760] sm:$0xff]
    %v375 = vld [vmem:[#allocation5 + $0x768] sm:$0xff]
    %v376 = vld [vmem:[#allocation5 + $0x770] sm:$0xff]
    %v377 = vld [vmem:[#allocation5 + $0x778] sm:$0xff]
    %v378 = vld [vmem:[#allocation5 + $0x780] sm:$0xff]
    %v379 = vld [vmem:[#allocation5 + $0x788] sm:$0xff]
    %v380 = vld [vmem:[#allocation5 + $0x790] sm:$0xff]
    %v381 = vld [vmem:[#allocation5 + $0x798] sm:$0xff]
    %v382 = vld [vmem:[#allocation5 + $0x7a0] sm:$0xff]
    %v383 = vld [vmem:[#allocation5 + $0x7a8] sm:$0xff]
    %v384 = vld [vmem:[#allocation5 + $0x7b0] sm:$0xff]
    %v385 = vld [vmem:[#allocation5 + $0x7b8] sm:$0xff]
    %v386 = vld [vmem:[#allocation5 + $0x7c0] sm:$0xff]
    %v387 = vld [vmem:[#allocation5 + $0x7c8] sm:$0xff]
    %v388 = vld [vmem:[#allocation5 + $0x7d0] sm:$0xff]
    %v389 = vld [vmem:[#allocation5 + $0x7d8] sm:$0xff]
    %v390 = vld [vmem:[#allocation5 + $0x7e0] sm:$0xff]
    %v391 = vld [vmem:[#allocation5 + $0x7e8] sm:$0xff]
    %v392 = vld [vmem:[#allocation5 + $0x7f0] sm:$0xff]
    %v393 = vld [vmem:[#allocation5 + $0x7f8] sm:$0xff]
    %v394 = vld [vmem:[#allocation5 + $0x800] sm:$0xff]
    %v395 = vld [vmem:[#allocation5 + $0x808] sm:$0xff]
    %v396 = vld [vmem:[#allocation5 + $0x810] sm:$0xff]
    %v397 = vld [vmem:[#allocation5 + $0x818] sm:$0xff]
    %v398 = vld [vmem:[#allocation5 + $0x820] sm:$0xff]
    %v399 = vld [vmem:[#allocation5 + $0x828] sm:$0xff]
    %v400 = vld [vmem:[#allocation5 + $0x830] sm:$0xff]
    %v401 = vld [vmem:[#allocation5 + $0x838] sm:$0xff]
    %v402 = vld [vmem:[#allocation5 + $0x840] sm:$0xff]
    %v403 = vld [vmem:[#allocation5 + $0x848] sm:$0xff]
    %v404 = vld [vmem:[#allocation5 + $0x850] sm:$0xff]
    %v405 = vld [vmem:[#allocation5 + $0x858] sm:$0xff]
    %v406 = vld [vmem:[#allocation5 + $0x860] sm:$0xff]
    %v407 = vld [vmem:[#allocation5 + $0x868] sm:$0xff]
    %v408 = vld [vmem:[#allocation5 + $0x870] sm:$0xff]
    %v409 = vld [vmem:[#allocation5 + $0x878] sm:$0xff]
    %v410 = vld [vmem:[#allocation5 + $0x880] sm:$0xff]
    %v411 = vld [vmem:[#allocation5 + $0x888] sm:$0xff]
    %v412 = vld [vmem:[#allocation5 + $0x890] sm:$0xff]
    %v413 = vld [vmem:[#allocation5 + $0x898] sm:$0xff]
    %v414 = vld [vmem:[#allocation5 + $0x8a0] sm:$0xff]
    %v415 = vld [vmem:[#allocation5 + $0x8a8] sm:$0xff]
    %v416 = vld [vmem:[#allocation5 + $0x8b0] sm:$0xff]
    %v417 = vld [vmem:[#allocation5 + $0x8b8] sm:$0xff]
    %v418 = vld [vmem:[#allocation5 + $0x8c0] sm:$0xff]
    %v419 = vld [vmem:[#allocation5 + $0x8c8] sm:$0xff]
    %v420 = vld [vmem:[#allocation5 + $0x8d0] sm:$0xff]
    %v421 = vld [vmem:[#allocation5 + $0x8d8] sm:$0xff]
    %v422 = vld [vmem:[#allocation5 + $0x8e0] sm:$0xff]
    %v423 = vld [vmem:[#allocation5 + $0x8e8] sm:$0xff]
    %v424 = vld [vmem:[#allocation5 + $0x8f0] sm:$0xff]
    %v425 = vld [vmem:[#allocation5 + $0x8f8] sm:$0xff]
    %v426 = vld [vmem:[#allocation5 + $0x900] sm:$0xff]
    %v427 = vld [vmem:[#allocation5 + $0x908] sm:$0xff]
    %v428 = vld [vmem:[#allocation5 + $0x910] sm:$0xff]
    %v429 = vld [vmem:[#allocation5 + $0x918] sm:$0xff]
    %v430 = vld [vmem:[#allocation5 + $0x920] sm:$0xff]
    %v431 = vld [vmem:[#allocation5 + $0x928] sm:$0xff]
    %v432 = vld [vmem:[#allocation5 + $0x930] sm:$0xff]
    %v433 = vld [vmem:[#allocation5 + $0x938] sm:$0xff]
    %v434 = vld [vmem:[#allocation5 + $0x940] sm:$0xff]
    %v435 = vld [vmem:[#allocation5 + $0x948] sm:$0xff]
    %v436 = vld [vmem:[#allocation5 + $0x950] sm:$0xff]
    %v437 = vld [vmem:[#allocation5 + $0x958] sm:$0xff]
    %v438 = vld [vmem:[#allocation5 + $0x960] sm:$0xff]
    %v439 = vld [vmem:[#allocation5 + $0x968] sm:$0xff]
    %v440 = vld [vmem:[#allocation5 + $0x970] sm:$0xff]
    %v441 = vld [vmem:[#allocation5 + $0x978] sm:$0xff]
    %v442 = vld [vmem:[#allocation5 + $0x980] sm:$0xff]
    %v443 = vld [vmem:[#allocation5 + $0x988] sm:$0xff]
    %v444 = vld [vmem:[#allocation5 + $0x990] sm:$0xff]
    %v445 = vld [vmem:[#allocation5 + $0x998] sm:$0xff]
    %v446 = vld [vmem:[#allocation5 + $0x9a0] sm:$0xff]
    %v447 = vld [vmem:[#allocation5 + $0x9a8] sm:$0xff]
    %v448 = vld [vmem:[#allocation5 + $0x9b0] sm:$0xff]
    %v449 = vld [vmem:[#allocation5 + $0x9b8] sm:$0xff]
    %v450 = vld [vmem:[#allocation5 + $0x9c0] sm:$0xff]
    %v451 = vld [vmem:[#allocation5 + $0x9c8] sm:$0xff]
    %v452 = vld [vmem:[#allocation5 + $0x9d0] sm:$0xff]
    %v453 = vld [vmem:[#allocation5 + $0x9d8] sm:$0xff]
    %v454 = vld [vmem:[#allocation5 + $0x9e0] sm:$0xff]
    %v455 = vld [vmem:[#allocation5 + $0x9e8] sm:$0xff]
    %v456 = vld [vmem:[#allocation5 + $0x9f0] sm:$0xff]
    %v457 = vld [vmem:[#allocation5 + $0x9f8] sm:$0xff]
    %v458 = vld [vmem:[#allocation5 + $0xa00] sm:$0xff]
    %v459 = vld [vmem:[#allocation5 + $0xa08] sm:$0xff]
    %v460 = vld [vmem:[#allocation5 + $0xa10] sm:$0xff]
    %v461 = vld [vmem:[#allocation5 + $0xa18] sm:$0xff]
    %v462 = vld [vmem:[#allocation5 + $0xa20] sm:$0xff]
    %v463 = vld [vmem:[#allocation5 + $0xa28] sm:$0xff]
    %v464 = vld [vmem:[#allocation5 + $0xa30] sm:$0xff]
    %v465 = vld [vmem:[#allocation5 + $0xa38] sm:$0xff]
    %v466 = vld [vmem:[#allocation5 + $0xa40] sm:$0xff]
    %v467 = vld [vmem:[#allocation5 + $0xa48] sm:$0xff]
    %v468 = vld [vmem:[#allocation5 + $0xa50] sm:$0xff]
    %v469 = vld [vmem:[#allocation5 + $0xa58] sm:$0xff]
    %v470 = vld [vmem:[#allocation5 + $0xa60] sm:$0xff]
    %v471 = vld [vmem:[#allocation5 + $0xa68] sm:$0xff]
    %v472 = vld [vmem:[#allocation5 + $0xa70] sm:$0xff]
    %v473 = vld [vmem:[#allocation5 + $0xa78] sm:$0xff]
    %v474 = vld [vmem:[#allocation5 + $0xa80] sm:$0xff]
    %v475 = vld [vmem:[#allocation5 + $0xa88] sm:$0xff]
    %v476 = vld [vmem:[#allocation5 + $0xa90] sm:$0xff]
    %v477 = vld [vmem:[#allocation5 + $0xa98] sm:$0xff]
    %v478 = vld [vmem:[#allocation5 + $0xaa0] sm:$0xff]
    %v479 = vld [vmem:[#allocation5 + $0xaa8] sm:$0xff]
    %v480 = vld [vmem:[#allocation5 + $0xab0] sm:$0xff]
    %v481 = vld [vmem:[#allocation5 + $0xab8] sm:$0xff]
    %v482 = vld [vmem:[#allocation5 + $0xac0] sm:$0xff]
    %v483 = vld [vmem:[#allocation5 + $0xac8] sm:$0xff]
    %v484 = vld [vmem:[#allocation5 + $0xad0] sm:$0xff]
    %v485 = vld [vmem:[#allocation5 + $0xad8] sm:$0xff]
    %v486 = vld [vmem:[#allocation5 + $0xae0] sm:$0xff]
    %v487 = vld [vmem:[#allocation5 + $0xae8] sm:$0xff]
    %v488 = vld [vmem:[#allocation5 + $0xaf0] sm:$0xff]
    %v489 = vld [vmem:[#allocation5 + $0xaf8] sm:$0xff]
    %v490 = vld [vmem:[#allocation5 + $0xb00] sm:$0xff]
    %v491 = vld [vmem:[#allocation5 + $0xb08] sm:$0xff]
    %v492 = vld [vmem:[#allocation5 + $0xb10] sm:$0xff]
    %v493 = vld [vmem:[#allocation5 + $0xb18] sm:$0xff]
    %v494 = vld [vmem:[#allocation5 + $0xb20] sm:$0xff]
    %v495 = vld [vmem:[#allocation5 + $0xb28] sm:$0xff]
    %v496 = vld [vmem:[#allocation5 + $0xb30] sm:$0xff]
    %v497 = vld [vmem:[#allocation5 + $0xb38] sm:$0xff]
    %v498 = vld [vmem:[#allocation5 + $0xb40] sm:$0xff]
    %v499 = vld [vmem:[#allocation5 + $0xb48] sm:$0xff]
    %v500 = vld [vmem:[#allocation5 + $0xb50] sm:$0xff]
    %v501 = vld [vmem:[#allocation5 + $0xb58] sm:$0xff]
    %v502 = vld [vmem:[#allocation5 + $0xb60] sm:$0xff]
    %v503 = vld [vmem:[#allocation5 + $0xb68] sm:$0xff]
    %v504 = vld [vmem:[#allocation5 + $0xb70] sm:$0xff]
    %v505 = vld [vmem:[#allocation5 + $0xb78] sm:$0xff]
    %v506 = vld [vmem:[#allocation5 + $0xb80] sm:$0xff]
    %v507 = vld [vmem:[#allocation5 + $0xb88] sm:$0xff]
    %v508 = vld [vmem:[#allocation5 + $0xb90] sm:$0xff]
    %v509 = vld [vmem:[#allocation5 + $0xb98] sm:$0xff]
    %v510 = vld [vmem:[#allocation5 + $0xba0] sm:$0xff]
    %v511 = vld [vmem:[#allocation5 + $0xba8] sm:$0xff]
    %v512 = vld [vmem:[#allocation5 + $0xbb0] sm:$0xff]
    %v513 = vld [vmem:[#allocation5 + $0xbb8] sm:$0xff]
    %v514 = vld [vmem:[#allocation5 + $0xbc0] sm:$0xff]
    %v515 = vld [vmem:[#allocation5 + $0xbc8] sm:$0xff]
    %v516 = vld [vmem:[#allocation5 + $0xbd0] sm:$0xff]
    %v517 = vld [vmem:[#allocation5 + $0xbd8] sm:$0xff]
    %v518 = vld [vmem:[#allocation5 + $0xbe0] sm:$0xff]
    %v519 = vld [vmem:[#allocation5 + $0xbe8] sm:$0xff]
    %v520 = vld [vmem:[#allocation5 + $0xbf0] sm:$0xff]
    %v521 = vld [vmem:[#allocation5 + $0xbf8] sm:$0xff]
    %v522 = vld [vmem:[#allocation5 + $0xc00] sm:$0xff]
    %v523 = vld [vmem:[#allocation5 + $0xc08] sm:$0xff]
    %v524 = vld [vmem:[#allocation5 + $0xc10] sm:$0xff]
    %v525 = vld [vmem:[#allocation5 + $0xc18] sm:$0xff]
    %v526 = vld [vmem:[#allocation5 + $0xc20] sm:$0xff]
    %v527 = vld [vmem:[#allocation5 + $0xc28] sm:$0xff]
    %v528 = vld [vmem:[#allocation5 + $0xc30] sm:$0xff]
    %v529 = vld [vmem:[#allocation5 + $0xc38] sm:$0xff]
    %v530 = vld [vmem:[#allocation5 + $0xc40] sm:$0xff]
    %v531 = vld [vmem:[#allocation5 + $0xc48] sm:$0xff]
    %v532 = vld [vmem:[#allocation5 + $0xc50] sm:$0xff]
    %v533 = vld [vmem:[#allocation5 + $0xc58] sm:$0xff]
    %v534 = vld [vmem:[#allocation5 + $0xc60] sm:$0xff]
    %v535 = vld [vmem:[#allocation5 + $0xc68] sm:$0xff]
    %v536 = vld [vmem:[#allocation5 + $0xc70] sm:$0xff]
    %v537 = vld [vmem:[#allocation5 + $0xc78] sm:$0xff]
    %v538 = vld [vmem:[#allocation5 + $0xc80] sm:$0xff]
    %v539 = vld [vmem:[#allocation5 + $0xc88] sm:$0xff]
    %v540 = vld [vmem:[#allocation5 + $0xc90] sm:$0xff]
    %v541 = vld [vmem:[#allocation5 + $0xc98] sm:$0xff]
    %v542 = vld [vmem:[#allocation5 + $0xca0] sm:$0xff]
    %v543 = vld [vmem:[#allocation5 + $0xca8] sm:$0xff]
    %v544 = vld [vmem:[#allocation5 + $0xcb0] sm:$0xff]
    %v545 = vld [vmem:[#allocation5 + $0xcb8] sm:$0xff]
    %v546 = vld [vmem:[#allocation5 + $0xcc0] sm:$0xff]
    %v547 = vld [vmem:[#allocation5 + $0xcc8] sm:$0xff]
    %v548 = vld [vmem:[#allocation5 + $0xcd0] sm:$0xff]
    %v549 = vld [vmem:[#allocation5 + $0xcd8] sm:$0xff]
    %v550 = vld [vmem:[#allocation5 + $0xce0] sm:$0xff]
    %v551 = vld [vmem:[#allocation5 + $0xce8] sm:$0xff]
    %v552 = vld [vmem:[#allocation5 + $0xcf0] sm:$0xff]
    %v553 = vld [vmem:[#allocation5 + $0xcf8] sm:$0xff]
    %v554 = vld [vmem:[#allocation5 + $0xd00] sm:$0xff]
    %v555 = vld [vmem:[#allocation5 + $0xd08] sm:$0xff]
    %v556 = vld [vmem:[#allocation5 + $0xd10] sm:$0xff]
    %v557 = vld [vmem:[#allocation5 + $0xd18] sm:$0xff]
    %v558 = vld [vmem:[#allocation5 + $0xd20] sm:$0xff]
    %v559 = vld [vmem:[#allocation5 + $0xd28] sm:$0xff]
    %v560 = vld [vmem:[#allocation5 + $0xd30] sm:$0xff]
    %v561 = vld [vmem:[#allocation5 + $0xd38] sm:$0xff]
    %v562 = vld [vmem:[#allocation5 + $0xd40] sm:$0xff]
    %v563 = vld [vmem:[#allocation5 + $0xd48] sm:$0xff]
    %v564 = vld [vmem:[#allocation5 + $0xd50] sm:$0xff]
    %v565 = vld [vmem:[#allocation5 + $0xd58] sm:$0xff]
    %v566 = vld [vmem:[#allocation5 + $0xd60] sm:$0xff]
    %v567 = vld [vmem:[#allocation5 + $0xd68] sm:$0xff]
    %v568 = vld [vmem:[#allocation5 + $0xd70] sm:$0xff]
    %v569 = vld [vmem:[#allocation5 + $0xd78] sm:$0xff]
    %v570 = vld [vmem:[#allocation5 + $0xd80] sm:$0xff]
    %v571 = vld [vmem:[#allocation5 + $0xd88] sm:$0xff]
    %v572 = vld [vmem:[#allocation5 + $0xd90] sm:$0xff]
    %v573 = vld [vmem:[#allocation5 + $0xd98] sm:$0xff]
    %v574 = vld [vmem:[#allocation5 + $0xda0] sm:$0xff]
    %v575 = vld [vmem:[#allocation5 + $0xda8] sm:$0xff]
    %v576 = vld [vmem:[#allocation5 + $0xdb0] sm:$0xff]
    %v577 = vld [vmem:[#allocation5 + $0xdb8] sm:$0xff]
    %v578 = vld [vmem:[#allocation5 + $0xdc0] sm:$0xff]
    %v579 = vld [vmem:[#allocation5 + $0xdc8] sm:$0xff]
    %v580 = vld [vmem:[#allocation5 + $0xdd0] sm:$0xff]
    %v581 = vld [vmem:[#allocation5 + $0xdd8] sm:$0xff]
    %v582 = vld [vmem:[#allocation5 + $0xde0] sm:$0xff]
    %v583 = vld [vmem:[#allocation5 + $0xde8] sm:$0xff]
    %v584 = vld [vmem:[#allocation5 + $0xdf0] sm:$0xff]
    %v585 = vld [vmem:[#allocation5 + $0xdf8] sm:$0xff]
    %v586 = vld [vmem:[#allocation7] sm:$0xff]
    %v588 = vlaneseq
    %v589 = vshrl.u32 %v588, 7
    %v590 = vsub.s32 0, %v589
    %v591 = vrot.slane %v586, %v590
    %v592 = vlaneseq
    %v593 = vshrl.u32 %v592, 7
    %v594 = vsub.s32 1, %v593
    %v595 = vrot.slane %v586, %v594
    %v596 = vlaneseq
    %v597 = vshrl.u32 %v596, 7
    %v598 = vsub.s32 2, %v597
    %v599 = vrot.slane %v586, %v598
    %v600 = vlaneseq
    %v601 = vshrl.u32 %v600, 7
    %v602 = vsub.s32 3, %v601
    %v603 = vrot.slane %v586, %v602
    %v604 = vlaneseq
    %v605 = vshrl.u32 %v604, 7
    %v606 = vsub.s32 4, %v605
    %v607 = vrot.slane %v586, %v606
    %v608 = vlaneseq
    %v609 = vshrl.u32 %v608, 7
    %v610 = vsub.s32 5, %v609
    %v611 = vrot.slane %v586, %v610
    %v612 = vlaneseq
    %v613 = vshrl.u32 %v612, 7
    %v614 = vsub.s32 6, %v613
    %v615 = vrot.slane %v586, %v614
    %v616 = vlaneseq
    %v617 = vshrl.u32 %v616, 7
    %v618 = vsub.s32 7, %v617
    %v619 = vrot.slane %v586, %v618
    %v632 = vunpack.c.l.b16 %v134
    %v633 = vunpack.c.h.b16 %v134
    %v634 = vunpack.c.l.b16 %v135
    %v635 = vunpack.c.h.b16 %v135
    %v636 = vunpack.c.l.b16 %v136
    %v637 = vunpack.c.h.b16 %v136
    %v638 = vunpack.c.l.b16 %v137
    %v639 = vpack.c.b16 %v632, %v632
    %v640 = vpack.c.b16 %v633, %v633
    %v641 = vpack.c.b16 %v634, %v634
    %v642 = vpack.c.b16 %v635, %v635
    %v643 = vpack.c.b16 %v636, %v636
    %v644 = vpack.c.b16 %v637, %v637
    %v645 = vpack.c.b16 %v638, %v638
    %v1101 = vunpack.c.l.b16 %v138
    %v1102 = vunpack.c.h.b16 %v138
    %v1103 = vunpack.c.l.b16 %v139
    %v1104 = vunpack.c.h.b16 %v139
    %v1105 = vunpack.c.l.b16 %v140
    %v1106 = vunpack.c.h.b16 %v140
    %v1107 = vunpack.c.l.b16 %v141
    %v1108 = vunpack.c.h.b16 %v141
    %v1109 = vunpack.c.l.b16 %v142
    %v1110 = vunpack.c.h.b16 %v142
    %v1111 = vunpack.c.l.b16 %v143
    %v1112 = vunpack.c.h.b16 %v143
    %v1113 = vunpack.c.l.b16 %v144
    %v1114 = vunpack.c.h.b16 %v144
    %v1115 = vunpack.c.l.b16 %v145
    %v1116 = vunpack.c.h.b16 %v145
    %v1117 = vunpack.c.l.b16 %v146
    %v1118 = vunpack.c.h.b16 %v146
    %v1119 = vunpack.c.l.b16 %v147
    %v1120 = vunpack.c.h.b16 %v147
    %v1121 = vunpack.c.l.b16 %v148
    %v1122 = vunpack.c.h.b16 %v148
    %v1123 = vunpack.c.l.b16 %v149
    %v1124 = vunpack.c.h.b16 %v149
    %v1125 = vunpack.c.l.b16 %v150
    %v1126 = vunpack.c.h.b16 %v150
    %v1127 = vunpack.c.l.b16 %v151
    %v1128 = vunpack.c.h.b16 %v151
    %v1129 = vunpack.c.l.b16 %v152
    %v1130 = vunpack.c.h.b16 %v152
    %v1131 = vunpack.c.l.b16 %v153
    %v1132 = vunpack.c.h.b16 %v153
    %v1133 = vunpack.c.l.b16 %v154
    %v1134 = vunpack.c.h.b16 %v154
    %v1135 = vunpack.c.l.b16 %v155
    %v1136 = vunpack.c.h.b16 %v155
    %v1137 = vunpack.c.l.b16 %v156
    %v1138 = vunpack.c.h.b16 %v156
    %v1139 = vunpack.c.l.b16 %v157
    %v1140 = vunpack.c.h.b16 %v157
    %v1141 = vunpack.c.l.b16 %v158
    %v1142 = vunpack.c.h.b16 %v158
    %v1143 = vunpack.c.l.b16 %v159
    %v1144 = vunpack.c.h.b16 %v159
    %v1145 = vunpack.c.l.b16 %v160
    %v1146 = vunpack.c.h.b16 %v160
    %v1147 = vunpack.c.l.b16 %v161
    %v1148 = vunpack.c.h.b16 %v161
    %v1149 = vunpack.c.l.b16 %v162
    %v1150 = vunpack.c.h.b16 %v162
    %v1151 = vunpack.c.l.b16 %v163
    %v1152 = vunpack.c.h.b16 %v163
    %v1153 = vunpack.c.l.b16 %v164
    %v1154 = vunpack.c.h.b16 %v164
    %v1155 = vunpack.c.l.b16 %v165
    %v1156 = vunpack.c.h.b16 %v165
    %v1157 = vunpack.c.l.b16 %v166
    %v1158 = vunpack.c.h.b16 %v166
    %v1159 = vunpack.c.l.b16 %v167
    %v1160 = vunpack.c.h.b16 %v167
    %v1161 = vunpack.c.l.b16 %v168
    %v1162 = vunpack.c.h.b16 %v168
    %v1163 = vunpack.c.l.b16 %v169
    %v1164 = vunpack.c.h.b16 %v169
    %v1165 = vunpack.c.l.b16 %v170
    %v1166 = vunpack.c.h.b16 %v170
    %v1167 = vunpack.c.l.b16 %v171
    %v1168 = vunpack.c.h.b16 %v171
    %v1169 = vunpack.c.l.b16 %v172
    %v1170 = vunpack.c.h.b16 %v172
    %v1171 = vunpack.c.l.b16 %v173
    %v1172 = vunpack.c.h.b16 %v173
    %v1173 = vunpack.c.l.b16 %v174
    %v1174 = vunpack.c.h.b16 %v174
    %v1175 = vunpack.c.l.b16 %v175
    %v1176 = vunpack.c.h.b16 %v175
    %v1177 = vunpack.c.l.b16 %v176
    %v1178 = vunpack.c.h.b16 %v176
    %v1179 = vunpack.c.l.b16 %v177
    %v1180 = vunpack.c.h.b16 %v177
    %v1181 = vunpack.c.l.b16 %v178
    %v1182 = vunpack.c.h.b16 %v178
    %v1183 = vunpack.c.l.b16 %v179
    %v1184 = vunpack.c.h.b16 %v179
    %v1185 = vunpack.c.l.b16 %v180
    %v1186 = vunpack.c.h.b16 %v180
    %v1187 = vunpack.c.l.b16 %v181
    %v1188 = vunpack.c.h.b16 %v181
    %v1189 = vunpack.c.l.b16 %v182
    %v1190 = vunpack.c.h.b16 %v182
    %v1191 = vunpack.c.l.b16 %v183
    %v1192 = vunpack.c.h.b16 %v183
    %v1193 = vunpack.c.l.b16 %v184
    %v1194 = vunpack.c.h.b16 %v184
    %v1195 = vunpack.c.l.b16 %v185
    %v1196 = vunpack.c.h.b16 %v185
    %v1197 = vunpack.c.l.b16 %v186
    %v1198 = vunpack.c.h.b16 %v186
    %v1199 = vunpack.c.l.b16 %v187
    %v1200 = vunpack.c.h.b16 %v187
    %v1201 = vunpack.c.l.b16 %v188
    %v1202 = vunpack.c.h.b16 %v188
    %v1203 = vunpack.c.l.b16 %v189
    %v1204 = vunpack.c.h.b16 %v189
    %v1205 = vunpack.c.l.b16 %v190
    %v1206 = vunpack.c.h.b16 %v190
    %v1207 = vunpack.c.l.b16 %v191
    %v1208 = vunpack.c.h.b16 %v191
    %v1209 = vunpack.c.l.b16 %v192
    %v1210 = vunpack.c.h.b16 %v192
    %v1211 = vunpack.c.l.b16 %v193
    %v1212 = vunpack.c.h.b16 %v193
    %v1213 = vunpack.c.l.b16 %v194
    %v1214 = vunpack.c.h.b16 %v194
    %v1215 = vunpack.c.l.b16 %v195
    %v1216 = vunpack.c.h.b16 %v195
    %v1217 = vunpack.c.l.b16 %v196
    %v1218 = vunpack.c.h.b16 %v196
    %v1219 = vunpack.c.l.b16 %v197
    %v1220 = vunpack.c.h.b16 %v197
    %v1221 = vunpack.c.l.b16 %v198
    %v1222 = vunpack.c.h.b16 %v198
    %v1223 = vunpack.c.l.b16 %v199
    %v1224 = vunpack.c.h.b16 %v199
    %v1225 = vunpack.c.l.b16 %v200
    %v1226 = vunpack.c.h.b16 %v200
    %v1227 = vunpack.c.l.b16 %v201
    %v1228 = vunpack.c.h.b16 %v201
    %v1229 = vunpack.c.l.b16 %v202
    %v1230 = vunpack.c.h.b16 %v202
    %v1231 = vunpack.c.l.b16 %v203
    %v1232 = vunpack.c.h.b16 %v203
    %v1233 = vunpack.c.l.b16 %v204
    %v1234 = vunpack.c.h.b16 %v204
    %v1235 = vunpack.c.l.b16 %v205
    %v1236 = vunpack.c.h.b16 %v205
    %v1237 = vunpack.c.l.b16 %v206
    %v1238 = vunpack.c.h.b16 %v206
    %v1239 = vunpack.c.l.b16 %v207
    %v1240 = vunpack.c.h.b16 %v207
    %v1241 = vunpack.c.l.b16 %v208
    %v1242 = vunpack.c.h.b16 %v208
    %v1243 = vunpack.c.l.b16 %v209
    %v1244 = vunpack.c.h.b16 %v209
    %v1245 = vunpack.c.l.b16 %v210
    %v1246 = vunpack.c.h.b16 %v210
    %v1247 = vunpack.c.l.b16 %v211
    %v1248 = vunpack.c.h.b16 %v211
    %v1249 = vunpack.c.l.b16 %v212
    %v1250 = vunpack.c.h.b16 %v212
    %v1251 = vunpack.c.l.b16 %v213
    %v1252 = vunpack.c.h.b16 %v213
    %v1253 = vunpack.c.l.b16 %v214
    %v1254 = vunpack.c.h.b16 %v214
    %v1255 = vunpack.c.l.b16 %v215
    %v1256 = vunpack.c.h.b16 %v215
    %v1257 = vunpack.c.l.b16 %v216
    %v1258 = vunpack.c.h.b16 %v216
    %v1259 = vunpack.c.l.b16 %v217
    %v1260 = vunpack.c.h.b16 %v217
    %v1261 = vunpack.c.l.b16 %v218
    %v1262 = vunpack.c.h.b16 %v218
    %v1263 = vunpack.c.l.b16 %v219
    %v1264 = vunpack.c.h.b16 %v219
    %v1265 = vunpack.c.l.b16 %v220
    %v1266 = vunpack.c.h.b16 %v220
    %v1267 = vunpack.c.l.b16 %v221
    %v1268 = vunpack.c.h.b16 %v221
    %v1269 = vunpack.c.l.b16 %v222
    %v1270 = vunpack.c.h.b16 %v222
    %v1271 = vunpack.c.l.b16 %v223
    %v1272 = vunpack.c.h.b16 %v223
    %v1273 = vunpack.c.l.b16 %v224
    %v1274 = vunpack.c.h.b16 %v224
    %v1275 = vunpack.c.l.b16 %v225
    %v1276 = vunpack.c.h.b16 %v225
    %v1277 = vunpack.c.l.b16 %v226
    %v1278 = vunpack.c.h.b16 %v226
    %v1279 = vunpack.c.l.b16 %v227
    %v1280 = vunpack.c.h.b16 %v227
    %v1281 = vunpack.c.l.b16 %v228
    %v1282 = vunpack.c.h.b16 %v228
    %v1283 = vunpack.c.l.b16 %v229
    %v1284 = vunpack.c.h.b16 %v229
    %v1285 = vunpack.c.l.b16 %v230
    %v1286 = vunpack.c.h.b16 %v230
    %v1287 = vunpack.c.l.b16 %v231
    %v1288 = vunpack.c.h.b16 %v231
    %v1289 = vunpack.c.l.b16 %v232
    %v1290 = vunpack.c.h.b16 %v232
    %v1291 = vunpack.c.l.b16 %v233
    %v1292 = vunpack.c.h.b16 %v233
    %v1293 = vunpack.c.l.b16 %v234
    %v1294 = vunpack.c.h.b16 %v234
    %v1295 = vunpack.c.l.b16 %v235
    %v1296 = vunpack.c.h.b16 %v235
    %v1297 = vunpack.c.l.b16 %v236
    %v1298 = vunpack.c.h.b16 %v236
    %v1299 = vunpack.c.l.b16 %v237
    %v1300 = vunpack.c.h.b16 %v237
    %v1301 = vunpack.c.l.b16 %v238
    %v1302 = vunpack.c.h.b16 %v238
    %v1303 = vunpack.c.l.b16 %v239
    %v1304 = vunpack.c.h.b16 %v239
    %v1305 = vunpack.c.l.b16 %v240
    %v1306 = vunpack.c.h.b16 %v240
    %v1307 = vunpack.c.l.b16 %v241
    %v1308 = vunpack.c.h.b16 %v241
    %v1309 = vunpack.c.l.b16 %v242
    %v1310 = vunpack.c.h.b16 %v242
    %v1311 = vunpack.c.l.b16 %v243
    %v1312 = vunpack.c.h.b16 %v243
    %v1313 = vunpack.c.l.b16 %v244
    %v1314 = vunpack.c.h.b16 %v244
    %v1315 = vunpack.c.l.b16 %v245
    %v1316 = vunpack.c.h.b16 %v245
    %v1317 = vunpack.c.l.b16 %v246
    %v1318 = vunpack.c.h.b16 %v246
    %v1319 = vunpack.c.l.b16 %v247
    %v1320 = vunpack.c.h.b16 %v247
    %v1321 = vunpack.c.l.b16 %v248
    %v1322 = vunpack.c.h.b16 %v248
    %v1323 = vunpack.c.l.b16 %v249
    %v1324 = vunpack.c.h.b16 %v249
    %v1325 = vunpack.c.l.b16 %v250
    %v1326 = vunpack.c.h.b16 %v250
    %v1327 = vunpack.c.l.b16 %v251
    %v1328 = vunpack.c.h.b16 %v251
    %v1329 = vunpack.c.l.b16 %v252
    %v1330 = vunpack.c.h.b16 %v252
    %v1331 = vunpack.c.l.b16 %v253
    %v1332 = vunpack.c.h.b16 %v253
    %v1333 = vunpack.c.l.b16 %v254
    %v1334 = vunpack.c.h.b16 %v254
    %v1335 = vunpack.c.l.b16 %v255
    %v1336 = vunpack.c.h.b16 %v255
    %v1337 = vunpack.c.l.b16 %v256
    %v1338 = vunpack.c.h.b16 %v256
    %v1339 = vunpack.c.l.b16 %v257
    %v1340 = vunpack.c.h.b16 %v257
    %v1341 = vunpack.c.l.b16 %v258
    %v1342 = vunpack.c.h.b16 %v258
    %v1343 = vunpack.c.l.b16 %v259
    %v1344 = vunpack.c.h.b16 %v259
    %v1345 = vunpack.c.l.b16 %v260
    %v1346 = vunpack.c.h.b16 %v260
    %v1347 = vunpack.c.l.b16 %v261
    %v1348 = vunpack.c.h.b16 %v261
    %v1349 = vunpack.c.l.b16 %v262
    %v1350 = vunpack.c.h.b16 %v262
    %v1351 = vunpack.c.l.b16 %v263
    %v1352 = vunpack.c.h.b16 %v263
    %v1353 = vunpack.c.l.b16 %v264
    %v1354 = vunpack.c.h.b16 %v264
    %v1355 = vunpack.c.l.b16 %v265
    %v1356 = vunpack.c.h.b16 %v265
    %v1357 = vunpack.c.l.b16 %v266
    %v1358 = vunpack.c.h.b16 %v266
    %v1359 = vunpack.c.l.b16 %v267
    %v1360 = vunpack.c.h.b16 %v267
    %v1361 = vunpack.c.l.b16 %v268
    %v1362 = vunpack.c.h.b16 %v268
    %v1363 = vunpack.c.l.b16 %v269
    %v1364 = vunpack.c.h.b16 %v269
    %v1365 = vunpack.c.l.b16 %v270
    %v1366 = vunpack.c.h.b16 %v270
    %v1367 = vunpack.c.l.b16 %v271
    %v1368 = vunpack.c.h.b16 %v271
    %v1369 = vunpack.c.l.b16 %v272
    %v1370 = vunpack.c.h.b16 %v272
    %v1371 = vunpack.c.l.b16 %v273
    %v1372 = vunpack.c.h.b16 %v273
    %v1373 = vunpack.c.l.b16 %v274
    %v1374 = vunpack.c.h.b16 %v274
    %v1375 = vunpack.c.l.b16 %v275
    %v1376 = vunpack.c.h.b16 %v275
    %v1377 = vunpack.c.l.b16 %v276
    %v1378 = vunpack.c.h.b16 %v276
    %v1379 = vunpack.c.l.b16 %v277
    %v1380 = vunpack.c.h.b16 %v277
    %v1381 = vunpack.c.l.b16 %v278
    %v1382 = vunpack.c.h.b16 %v278
    %v1383 = vunpack.c.l.b16 %v279
    %v1384 = vunpack.c.h.b16 %v279
    %v1385 = vunpack.c.l.b16 %v280
    %v1386 = vunpack.c.h.b16 %v280
    %v1387 = vunpack.c.l.b16 %v281
    %v1388 = vunpack.c.h.b16 %v281
    %v1389 = vunpack.c.l.b16 %v282
    %v1390 = vunpack.c.h.b16 %v282
    %v1391 = vunpack.c.l.b16 %v283
    %v1392 = vunpack.c.h.b16 %v283
    %v1393 = vunpack.c.l.b16 %v284
    %v1394 = vunpack.c.h.b16 %v284
    %v1395 = vunpack.c.l.b16 %v285
    %v1396 = vunpack.c.h.b16 %v285
    %v1397 = vunpack.c.l.b16 %v286
    %v1398 = vunpack.c.h.b16 %v286
    %v1399 = vunpack.c.l.b16 %v287
    %v1400 = vunpack.c.h.b16 %v287
    %v1401 = vunpack.c.l.b16 %v288
    %v1402 = vunpack.c.h.b16 %v288
    %v1403 = vunpack.c.l.b16 %v289
    %v1404 = vunpack.c.h.b16 %v289
    %v1405 = vunpack.c.l.b16 %v290
    %v1406 = vunpack.c.h.b16 %v290
    %v1407 = vunpack.c.l.b16 %v291
    %v1408 = vunpack.c.h.b16 %v291
    %v1409 = vunpack.c.l.b16 %v292
    %v1410 = vunpack.c.h.b16 %v292
    %v1411 = vunpack.c.l.b16 %v293
    %v1412 = vunpack.c.h.b16 %v293
    %v1413 = vunpack.c.l.b16 %v294
    %v1414 = vunpack.c.h.b16 %v294
    %v1415 = vunpack.c.l.b16 %v295
    %v1416 = vunpack.c.h.b16 %v295
    %v1417 = vunpack.c.l.b16 %v296
    %v1418 = vunpack.c.h.b16 %v296
    %v1419 = vunpack.c.l.b16 %v297
    %v1420 = vunpack.c.h.b16 %v297
    %v1421 = vunpack.c.l.b16 %v298
    %v1422 = vunpack.c.h.b16 %v298
    %v1423 = vunpack.c.l.b16 %v299
    %v1424 = vunpack.c.h.b16 %v299
    %v1425 = vunpack.c.l.b16 %v300
    %v1426 = vunpack.c.h.b16 %v300
    %v1427 = vunpack.c.l.b16 %v301
    %v1428 = vunpack.c.h.b16 %v301
    %v1429 = vunpack.c.l.b16 %v302
    %v1430 = vunpack.c.h.b16 %v302
    %v1431 = vunpack.c.l.b16 %v303
    %v1432 = vunpack.c.h.b16 %v303
    %v1433 = vunpack.c.l.b16 %v304
    %v1434 = vunpack.c.h.b16 %v304
    %v1435 = vunpack.c.l.b16 %v305
    %v1436 = vunpack.c.h.b16 %v305
    %v1437 = vunpack.c.l.b16 %v306
    %v1438 = vunpack.c.h.b16 %v306
    %v1439 = vunpack.c.l.b16 %v307
    %v1440 = vunpack.c.h.b16 %v307
    %v1441 = vunpack.c.l.b16 %v308
    %v1442 = vunpack.c.h.b16 %v308
    %v1443 = vunpack.c.l.b16 %v309
    %v1444 = vunpack.c.h.b16 %v309
    %v1445 = vunpack.c.l.b16 %v310
    %v1446 = vunpack.c.h.b16 %v310
    %v1447 = vunpack.c.l.b16 %v311
    %v1448 = vunpack.c.h.b16 %v311
    %v1449 = vunpack.c.l.b16 %v312
    %v1450 = vunpack.c.h.b16 %v312
    %v1451 = vunpack.c.l.b16 %v313
    %v1452 = vunpack.c.h.b16 %v313
    %v1453 = vunpack.c.l.b16 %v314
    %v1454 = vunpack.c.h.b16 %v314
    %v1455 = vunpack.c.l.b16 %v315
    %v1456 = vunpack.c.h.b16 %v315
    %v1457 = vunpack.c.l.b16 %v316
    %v1458 = vunpack.c.h.b16 %v316
    %v1459 = vunpack.c.l.b16 %v317
    %v1460 = vunpack.c.h.b16 %v317
    %v1461 = vunpack.c.l.b16 %v318
    %v1462 = vunpack.c.h.b16 %v318
    %v1463 = vunpack.c.l.b16 %v319
    %v1464 = vunpack.c.h.b16 %v319
    %v1465 = vunpack.c.l.b16 %v320
    %v1466 = vunpack.c.h.b16 %v320
    %v1467 = vunpack.c.l.b16 %v321
    %v1468 = vunpack.c.h.b16 %v321
    %v1469 = vunpack.c.l.b16 %v322
    %v1470 = vunpack.c.h.b16 %v322
    %v1471 = vunpack.c.l.b16 %v323
    %v1472 = vunpack.c.h.b16 %v323
    %v1473 = vunpack.c.l.b16 %v324
    %v1474 = vunpack.c.h.b16 %v324
    %v1475 = vunpack.c.l.b16 %v325
    %v1476 = vunpack.c.h.b16 %v325
    %v1477 = vunpack.c.l.b16 %v326
    %v1478 = vunpack.c.h.b16 %v326
    %v1479 = vunpack.c.l.b16 %v327
    %v1480 = vunpack.c.h.b16 %v327
    %v1481 = vunpack.c.l.b16 %v328
    %v1482 = vunpack.c.h.b16 %v328
    %v1483 = vunpack.c.l.b16 %v329
    %v1484 = vunpack.c.h.b16 %v329
    %v1485 = vunpack.c.l.b16 %v330
    %v1486 = vunpack.c.h.b16 %v330
    %v1487 = vunpack.c.l.b16 %v331
    %v1488 = vunpack.c.h.b16 %v331
    %v1489 = vunpack.c.l.b16 %v332
    %v1490 = vunpack.c.h.b16 %v332
    %v1491 = vunpack.c.l.b16 %v333
    %v1492 = vunpack.c.h.b16 %v333
    %v1493 = vunpack.c.l.b16 %v334
    %v1494 = vunpack.c.h.b16 %v334
    %v1495 = vunpack.c.l.b16 %v335
    %v1496 = vunpack.c.h.b16 %v335
    %v1497 = vunpack.c.l.b16 %v336
    %v1498 = vunpack.c.h.b16 %v336
    %v1499 = vunpack.c.l.b16 %v337
    %v1500 = vunpack.c.h.b16 %v337
    %v1501 = vunpack.c.l.b16 %v338
    %v1502 = vunpack.c.h.b16 %v338
    %v1503 = vunpack.c.l.b16 %v339
    %v1504 = vunpack.c.h.b16 %v339
    %v1505 = vunpack.c.l.b16 %v340
    %v1506 = vunpack.c.h.b16 %v340
    %v1507 = vunpack.c.l.b16 %v341
    %v1508 = vunpack.c.h.b16 %v341
    %v1509 = vunpack.c.l.b16 %v342
    %v1510 = vunpack.c.h.b16 %v342
    %v1511 = vunpack.c.l.b16 %v343
    %v1512 = vunpack.c.h.b16 %v343
    %v1513 = vunpack.c.l.b16 %v344
    %v1514 = vunpack.c.h.b16 %v344
    %v1515 = vunpack.c.l.b16 %v345
    %v1516 = vunpack.c.h.b16 %v345
    %v1517 = vunpack.c.l.b16 %v346
    %v1518 = vunpack.c.h.b16 %v346
    %v1519 = vunpack.c.l.b16 %v347
    %v1520 = vunpack.c.h.b16 %v347
    %v1521 = vunpack.c.l.b16 %v348
    %v1522 = vunpack.c.h.b16 %v348
    %v1523 = vunpack.c.l.b16 %v349
    %v1524 = vunpack.c.h.b16 %v349
    %v1525 = vunpack.c.l.b16 %v350
    %v1526 = vunpack.c.h.b16 %v350
    %v1527 = vunpack.c.l.b16 %v351
    %v1528 = vunpack.c.h.b16 %v351
    %v1529 = vunpack.c.l.b16 %v352
    %v1530 = vunpack.c.h.b16 %v352
    %v1531 = vunpack.c.l.b16 %v353
    %v1532 = vunpack.c.h.b16 %v353
    %v1533 = vunpack.c.l.b16 %v354
    %v1534 = vunpack.c.h.b16 %v354
    %v1535 = vunpack.c.l.b16 %v355
    %v1536 = vunpack.c.h.b16 %v355
    %v1537 = vunpack.c.l.b16 %v356
    %v1538 = vunpack.c.h.b16 %v356
    %v1539 = vunpack.c.l.b16 %v357
    %v1540 = vunpack.c.h.b16 %v357
    %v1541 = vunpack.c.l.b16 %v358
    %v1542 = vunpack.c.h.b16 %v358
    %v1543 = vunpack.c.l.b16 %v359
    %v1544 = vunpack.c.h.b16 %v359
    %v1545 = vunpack.c.l.b16 %v360
    %v1546 = vunpack.c.h.b16 %v360
    %v1547 = vunpack.c.l.b16 %v361
    %v1548 = vunpack.c.h.b16 %v361
    %v1549 = vunpack.c.l.b16 %v362
    %v1550 = vunpack.c.h.b16 %v362
    %v1551 = vunpack.c.l.b16 %v363
    %v1552 = vunpack.c.h.b16 %v363
    %v1553 = vunpack.c.l.b16 %v364
    %v1554 = vunpack.c.h.b16 %v364
    %v1555 = vunpack.c.l.b16 %v365
    %v1556 = vunpack.c.h.b16 %v365
    %v1557 = vunpack.c.l.b16 %v366
    %v1558 = vunpack.c.h.b16 %v366
    %v1559 = vunpack.c.l.b16 %v367
    %v1560 = vunpack.c.h.b16 %v367
    %v1561 = vunpack.c.l.b16 %v368
    %v1562 = vunpack.c.h.b16 %v368
    %v1563 = vunpack.c.l.b16 %v369
    %v1564 = vunpack.c.h.b16 %v369
    %v1565 = vunpack.c.l.b16 %v370
    %v1566 = vunpack.c.h.b16 %v370
    %v1567 = vunpack.c.l.b16 %v371
    %v1568 = vunpack.c.h.b16 %v371
    %v1569 = vunpack.c.l.b16 %v372
    %v1570 = vunpack.c.h.b16 %v372
    %v1571 = vunpack.c.l.b16 %v373
    %v1572 = vunpack.c.h.b16 %v373
    %v1573 = vunpack.c.l.b16 %v374
    %v1574 = vunpack.c.h.b16 %v374
    %v1575 = vunpack.c.l.b16 %v375
    %v1576 = vunpack.c.h.b16 %v375
    %v1577 = vunpack.c.l.b16 %v376
    %v1578 = vunpack.c.h.b16 %v376
    %v1579 = vunpack.c.l.b16 %v377
    %v1580 = vunpack.c.h.b16 %v377
    %v1581 = vunpack.c.l.b16 %v378
    %v1582 = vunpack.c.h.b16 %v378
    %v1583 = vunpack.c.l.b16 %v379
    %v1584 = vunpack.c.h.b16 %v379
    %v1585 = vunpack.c.l.b16 %v380
    %v1586 = vunpack.c.h.b16 %v380
    %v1587 = vunpack.c.l.b16 %v381
    %v1588 = vunpack.c.h.b16 %v381
    %v1589 = vunpack.c.l.b16 %v382
    %v1590 = vunpack.c.h.b16 %v382
    %v1591 = vunpack.c.l.b16 %v383
    %v1592 = vunpack.c.h.b16 %v383
    %v1593 = vunpack.c.l.b16 %v384
    %v1594 = vunpack.c.h.b16 %v384
    %v1595 = vunpack.c.l.b16 %v385
    %v1596 = vunpack.c.h.b16 %v385
    %v1597 = vunpack.c.l.b16 %v386
    %v1598 = vunpack.c.h.b16 %v386
    %v1599 = vunpack.c.l.b16 %v387
    %v1600 = vunpack.c.h.b16 %v387
    %v1601 = vunpack.c.l.b16 %v388
    %v1602 = vunpack.c.h.b16 %v388
    %v1603 = vunpack.c.l.b16 %v389
    %v1604 = vunpack.c.h.b16 %v389
    %v1605 = vunpack.c.l.b16 %v390
    %v1606 = vunpack.c.h.b16 %v390
    %v1607 = vunpack.c.l.b16 %v391
    %v1608 = vunpack.c.h.b16 %v391
    %v1609 = vunpack.c.l.b16 %v392
    %v1610 = vunpack.c.h.b16 %v392
    %v1611 = vunpack.c.l.b16 %v393
    %v1612 = vunpack.c.h.b16 %v393
    %v1613 = vunpack.c.l.b16 %v394
    %v1614 = vunpack.c.h.b16 %v394
    %v1615 = vunpack.c.l.b16 %v395
    %v1616 = vunpack.c.h.b16 %v395
    %v1617 = vunpack.c.l.b16 %v396
    %v1618 = vunpack.c.h.b16 %v396
    %v1619 = vunpack.c.l.b16 %v397
    %v1620 = vunpack.c.h.b16 %v397
    %v1621 = vunpack.c.l.b16 %v398
    %v1622 = vunpack.c.h.b16 %v398
    %v1623 = vunpack.c.l.b16 %v399
    %v1624 = vunpack.c.h.b16 %v399
    %v1625 = vunpack.c.l.b16 %v400
    %v1626 = vunpack.c.h.b16 %v400
    %v1627 = vunpack.c.l.b16 %v401
    %v1628 = vunpack.c.h.b16 %v401
    %v1629 = vunpack.c.l.b16 %v402
    %v1630 = vunpack.c.h.b16 %v402
    %v1631 = vunpack.c.l.b16 %v403
    %v1632 = vunpack.c.h.b16 %v403
    %v1633 = vunpack.c.l.b16 %v404
    %v1634 = vunpack.c.h.b16 %v404
    %v1635 = vunpack.c.l.b16 %v405
    %v1636 = vunpack.c.h.b16 %v405
    %v1637 = vunpack.c.l.b16 %v406
    %v1638 = vunpack.c.h.b16 %v406
    %v1639 = vunpack.c.l.b16 %v407
    %v1640 = vunpack.c.h.b16 %v407
    %v1641 = vunpack.c.l.b16 %v408
    %v1642 = vunpack.c.h.b16 %v408
    %v1643 = vunpack.c.l.b16 %v409
    %v1644 = vunpack.c.h.b16 %v409
    %v1645 = vunpack.c.l.b16 %v410
    %v1646 = vunpack.c.h.b16 %v410
    %v1647 = vunpack.c.l.b16 %v411
    %v1648 = vunpack.c.h.b16 %v411
    %v1649 = vunpack.c.l.b16 %v412
    %v1650 = vunpack.c.h.b16 %v412
    %v1651 = vunpack.c.l.b16 %v413
    %v1652 = vunpack.c.h.b16 %v413
    %v1653 = vunpack.c.l.b16 %v414
    %v1654 = vunpack.c.h.b16 %v414
    %v1655 = vunpack.c.l.b16 %v415
    %v1656 = vunpack.c.h.b16 %v415
    %v1657 = vunpack.c.l.b16 %v416
    %v1658 = vunpack.c.h.b16 %v416
    %v1659 = vunpack.c.l.b16 %v417
    %v1660 = vunpack.c.h.b16 %v417
    %v1661 = vunpack.c.l.b16 %v418
    %v1662 = vunpack.c.h.b16 %v418
    %v1663 = vunpack.c.l.b16 %v419
    %v1664 = vunpack.c.h.b16 %v419
    %v1665 = vunpack.c.l.b16 %v420
    %v1666 = vunpack.c.h.b16 %v420
    %v1667 = vunpack.c.l.b16 %v421
    %v1668 = vunpack.c.h.b16 %v421
    %v1669 = vunpack.c.l.b16 %v422
    %v1670 = vunpack.c.h.b16 %v422
    %v1671 = vunpack.c.l.b16 %v423
    %v1672 = vunpack.c.h.b16 %v423
    %v1673 = vunpack.c.l.b16 %v424
    %v1674 = vunpack.c.h.b16 %v424
    %v1675 = vunpack.c.l.b16 %v425
    %v1676 = vunpack.c.h.b16 %v425
    %v1677 = vunpack.c.l.b16 %v426
    %v1678 = vunpack.c.h.b16 %v426
    %v1679 = vunpack.c.l.b16 %v427
    %v1680 = vunpack.c.h.b16 %v427
    %v1681 = vunpack.c.l.b16 %v428
    %v1682 = vunpack.c.h.b16 %v428
    %v1683 = vunpack.c.l.b16 %v429
    %v1684 = vunpack.c.h.b16 %v429
    %v1685 = vunpack.c.l.b16 %v430
    %v1686 = vunpack.c.h.b16 %v430
    %v1687 = vunpack.c.l.b16 %v431
    %v1688 = vunpack.c.h.b16 %v431
    %v1689 = vunpack.c.l.b16 %v432
    %v1690 = vunpack.c.h.b16 %v432
    %v1691 = vunpack.c.l.b16 %v433
    %v1692 = vunpack.c.h.b16 %v433
    %v1693 = vunpack.c.l.b16 %v434
    %v1694 = vunpack.c.h.b16 %v434
    %v1695 = vunpack.c.l.b16 %v435
    %v1696 = vunpack.c.h.b16 %v435
    %v1697 = vunpack.c.l.b16 %v436
    %v1698 = vunpack.c.h.b16 %v436
    %v1699 = vunpack.c.l.b16 %v437
    %v1700 = vunpack.c.h.b16 %v437
    %v1701 = vunpack.c.l.b16 %v438
    %v1702 = vunpack.c.h.b16 %v438
    %v1703 = vunpack.c.l.b16 %v439
    %v1704 = vunpack.c.h.b16 %v439
    %v1705 = vunpack.c.l.b16 %v440
    %v1706 = vunpack.c.h.b16 %v440
    %v1707 = vunpack.c.l.b16 %v441
    %v1708 = vunpack.c.h.b16 %v441
    %v1709 = vunpack.c.l.b16 %v442
    %v1710 = vunpack.c.h.b16 %v442
    %v1711 = vunpack.c.l.b16 %v443
    %v1712 = vunpack.c.h.b16 %v443
    %v1713 = vunpack.c.l.b16 %v444
    %v1714 = vunpack.c.h.b16 %v444
    %v1715 = vunpack.c.l.b16 %v445
    %v1716 = vunpack.c.h.b16 %v445
    %v1717 = vunpack.c.l.b16 %v446
    %v1718 = vunpack.c.h.b16 %v446
    %v1719 = vunpack.c.l.b16 %v447
    %v1720 = vunpack.c.h.b16 %v447
    %v1721 = vunpack.c.l.b16 %v448
    %v1722 = vunpack.c.h.b16 %v448
    %v1723 = vunpack.c.l.b16 %v449
    %v1724 = vunpack.c.h.b16 %v449
    %v1725 = vunpack.c.l.b16 %v450
    %v1726 = vunpack.c.h.b16 %v450
    %v1727 = vunpack.c.l.b16 %v451
    %v1728 = vunpack.c.h.b16 %v451
    %v1729 = vunpack.c.l.b16 %v452
    %v1730 = vunpack.c.h.b16 %v452
    %v1731 = vunpack.c.l.b16 %v453
    %v1732 = vunpack.c.h.b16 %v453
    %v1733 = vunpack.c.l.b16 %v454
    %v1734 = vunpack.c.h.b16 %v454
    %v1735 = vunpack.c.l.b16 %v455
    %v1736 = vunpack.c.h.b16 %v455
    %v1737 = vunpack.c.l.b16 %v456
    %v1738 = vunpack.c.h.b16 %v456
    %v1739 = vunpack.c.l.b16 %v457
    %v1740 = vunpack.c.h.b16 %v457
    %v1741 = vunpack.c.l.b16 %v458
    %v1742 = vunpack.c.h.b16 %v458
    %v1743 = vunpack.c.l.b16 %v459
    %v1744 = vunpack.c.h.b16 %v459
    %v1745 = vunpack.c.l.b16 %v460
    %v1746 = vunpack.c.h.b16 %v460
    %v1747 = vunpack.c.l.b16 %v461
    %v1748 = vunpack.c.h.b16 %v461
    %v1749 = vunpack.c.l.b16 %v462
    %v1750 = vunpack.c.h.b16 %v462
    %v1751 = vunpack.c.l.b16 %v463
    %v1752 = vunpack.c.h.b16 %v463
    %v1753 = vunpack.c.l.b16 %v464
    %v1754 = vunpack.c.h.b16 %v464
    %v1755 = vunpack.c.l.b16 %v465
    %v1756 = vunpack.c.h.b16 %v465
    %v1757 = vunpack.c.l.b16 %v466
    %v1758 = vunpack.c.h.b16 %v466
    %v1759 = vunpack.c.l.b16 %v467
    %v1760 = vunpack.c.h.b16 %v467
    %v1761 = vunpack.c.l.b16 %v468
    %v1762 = vunpack.c.h.b16 %v468
    %v1763 = vunpack.c.l.b16 %v469
    %v1764 = vunpack.c.h.b16 %v469
    %v1765 = vunpack.c.l.b16 %v470
    %v1766 = vunpack.c.h.b16 %v470
    %v1767 = vunpack.c.l.b16 %v471
    %v1768 = vunpack.c.h.b16 %v471
    %v1769 = vunpack.c.l.b16 %v472
    %v1770 = vunpack.c.h.b16 %v472
    %v1771 = vunpack.c.l.b16 %v473
    %v1772 = vunpack.c.h.b16 %v473
    %v1773 = vunpack.c.l.b16 %v474
    %v1774 = vunpack.c.h.b16 %v474
    %v1775 = vunpack.c.l.b16 %v475
    %v1776 = vunpack.c.h.b16 %v475
    %v1777 = vunpack.c.l.b16 %v476
    %v1778 = vunpack.c.h.b16 %v476
    %v1779 = vunpack.c.l.b16 %v477
    %v1780 = vunpack.c.h.b16 %v477
    %v1781 = vunpack.c.l.b16 %v478
    %v1782 = vunpack.c.h.b16 %v478
    %v1783 = vunpack.c.l.b16 %v479
    %v1784 = vunpack.c.h.b16 %v479
    %v1785 = vunpack.c.l.b16 %v480
    %v1786 = vunpack.c.h.b16 %v480
    %v1787 = vunpack.c.l.b16 %v481
    %v1788 = vunpack.c.h.b16 %v481
    %v1789 = vunpack.c.l.b16 %v482
    %v1790 = vunpack.c.h.b16 %v482
    %v1791 = vunpack.c.l.b16 %v483
    %v1792 = vunpack.c.h.b16 %v483
    %v1793 = vunpack.c.l.b16 %v484
    %v1794 = vunpack.c.h.b16 %v484
    %v1795 = vunpack.c.l.b16 %v485
    %v1796 = vunpack.c.h.b16 %v485
    %v1797 = vunpack.c.l.b16 %v486
    %v1798 = vunpack.c.h.b16 %v486
    %v1799 = vunpack.c.l.b16 %v487
    %v1800 = vunpack.c.h.b16 %v487
    %v1801 = vunpack.c.l.b16 %v488
    %v1802 = vunpack.c.h.b16 %v488
    %v1803 = vunpack.c.l.b16 %v489
    %v1804 = vunpack.c.h.b16 %v489
    %v1805 = vunpack.c.l.b16 %v490
    %v1806 = vunpack.c.h.b16 %v490
    %v1807 = vunpack.c.l.b16 %v491
    %v1808 = vunpack.c.h.b16 %v491
    %v1809 = vunpack.c.l.b16 %v492
    %v1810 = vunpack.c.h.b16 %v492
    %v1811 = vunpack.c.l.b16 %v493
    %v1812 = vunpack.c.h.b16 %v493
    %v1813 = vunpack.c.l.b16 %v494
    %v1814 = vunpack.c.h.b16 %v494
    %v1815 = vunpack.c.l.b16 %v495
    %v1816 = vunpack.c.h.b16 %v495
    %v1817 = vunpack.c.l.b16 %v496
    %v1818 = vunpack.c.h.b16 %v496
    %v1819 = vunpack.c.l.b16 %v497
    %v1820 = vunpack.c.h.b16 %v497
    %v1821 = vunpack.c.l.b16 %v498
    %v1822 = vunpack.c.h.b16 %v498
    %v1823 = vunpack.c.l.b16 %v499
    %v1824 = vunpack.c.h.b16 %v499
    %v1825 = vunpack.c.l.b16 %v500
    %v1826 = vunpack.c.h.b16 %v500
    %v1827 = vunpack.c.l.b16 %v501
    %v1828 = vunpack.c.h.b16 %v501
    %v1829 = vunpack.c.l.b16 %v502
    %v1830 = vunpack.c.h.b16 %v502
    %v1831 = vunpack.c.l.b16 %v503
    %v1832 = vunpack.c.h.b16 %v503
    %v1833 = vunpack.c.l.b16 %v504
    %v1834 = vunpack.c.h.b16 %v504
    %v1835 = vunpack.c.l.b16 %v505
    %v1836 = vunpack.c.h.b16 %v505
    %v1837 = vunpack.c.l.b16 %v506
    %v1838 = vunpack.c.h.b16 %v506
    %v1839 = vunpack.c.l.b16 %v507
    %v1840 = vunpack.c.h.b16 %v507
    %v1841 = vunpack.c.l.b16 %v508
    %v1842 = vunpack.c.h.b16 %v508
    %v1843 = vunpack.c.l.b16 %v509
    %v1844 = vunpack.c.h.b16 %v509
    %v1845 = vunpack.c.l.b16 %v510
    %v1846 = vunpack.c.h.b16 %v510
    %v1847 = vunpack.c.l.b16 %v511
    %v1848 = vunpack.c.h.b16 %v511
    %v1849 = vunpack.c.l.b16 %v512
    %v1850 = vunpack.c.h.b16 %v512
    %v1851 = vunpack.c.l.b16 %v513
    %v1852 = vunpack.c.h.b16 %v513
    %v1853 = vunpack.c.l.b16 %v514
    %v1854 = vunpack.c.h.b16 %v514
    %v1855 = vunpack.c.l.b16 %v515
    %v1856 = vunpack.c.h.b16 %v515
    %v1857 = vunpack.c.l.b16 %v516
    %v1858 = vunpack.c.h.b16 %v516
    %v1859 = vunpack.c.l.b16 %v517
    %v1860 = vunpack.c.h.b16 %v517
    %v1861 = vunpack.c.l.b16 %v518
    %v1862 = vunpack.c.h.b16 %v518
    %v1863 = vunpack.c.l.b16 %v519
    %v1864 = vunpack.c.h.b16 %v519
    %v1865 = vunpack.c.l.b16 %v520
    %v1866 = vunpack.c.h.b16 %v520
    %v1867 = vunpack.c.l.b16 %v521
    %v1868 = vunpack.c.h.b16 %v521
    %v1869 = vunpack.c.l.b16 %v522
    %v1870 = vunpack.c.h.b16 %v522
    %v1871 = vunpack.c.l.b16 %v523
    %v1872 = vunpack.c.h.b16 %v523
    %v1873 = vunpack.c.l.b16 %v524
    %v1874 = vunpack.c.h.b16 %v524
    %v1875 = vunpack.c.l.b16 %v525
    %v1876 = vunpack.c.h.b16 %v525
    %v1877 = vunpack.c.l.b16 %v526
    %v1878 = vunpack.c.h.b16 %v526
    %v1879 = vunpack.c.l.b16 %v527
    %v1880 = vunpack.c.h.b16 %v527
    %v1881 = vunpack.c.l.b16 %v528
    %v1882 = vunpack.c.h.b16 %v528
    %v1883 = vunpack.c.l.b16 %v529
    %v1884 = vunpack.c.h.b16 %v529
    %v1885 = vunpack.c.l.b16 %v530
    %v1886 = vunpack.c.h.b16 %v530
    %v1887 = vunpack.c.l.b16 %v531
    %v1888 = vunpack.c.h.b16 %v531
    %v1889 = vunpack.c.l.b16 %v532
    %v1890 = vunpack.c.h.b16 %v532
    %v1891 = vunpack.c.l.b16 %v533
    %v1892 = vunpack.c.h.b16 %v533
    %v1893 = vunpack.c.l.b16 %v534
    %v1894 = vunpack.c.h.b16 %v534
    %v1895 = vunpack.c.l.b16 %v535
    %v1896 = vunpack.c.h.b16 %v535
    %v1897 = vunpack.c.l.b16 %v536
    %v1898 = vunpack.c.h.b16 %v536
    %v1899 = vunpack.c.l.b16 %v537
    %v1900 = vunpack.c.h.b16 %v537
    %v1901 = vunpack.c.l.b16 %v538
    %v1902 = vunpack.c.h.b16 %v538
    %v1903 = vunpack.c.l.b16 %v539
    %v1904 = vunpack.c.h.b16 %v539
    %v1905 = vunpack.c.l.b16 %v540
    %v1906 = vunpack.c.h.b16 %v540
    %v1907 = vunpack.c.l.b16 %v541
    %v1908 = vunpack.c.h.b16 %v541
    %v1909 = vunpack.c.l.b16 %v542
    %v1910 = vunpack.c.h.b16 %v542
    %v1911 = vunpack.c.l.b16 %v543
    %v1912 = vunpack.c.h.b16 %v543
    %v1913 = vunpack.c.l.b16 %v544
    %v1914 = vunpack.c.h.b16 %v544
    %v1915 = vunpack.c.l.b16 %v545
    %v1916 = vunpack.c.h.b16 %v545
    %v1917 = vunpack.c.l.b16 %v546
    %v1918 = vunpack.c.h.b16 %v546
    %v1919 = vunpack.c.l.b16 %v547
    %v1920 = vunpack.c.h.b16 %v547
    %v1921 = vunpack.c.l.b16 %v548
    %v1922 = vunpack.c.h.b16 %v548
    %v1923 = vunpack.c.l.b16 %v549
    %v1924 = vunpack.c.h.b16 %v549
    %v1925 = vunpack.c.l.b16 %v550
    %v1926 = vunpack.c.h.b16 %v550
    %v1927 = vunpack.c.l.b16 %v551
    %v1928 = vunpack.c.h.b16 %v551
    %v1929 = vunpack.c.l.b16 %v552
    %v1930 = vunpack.c.h.b16 %v552
    %v1931 = vunpack.c.l.b16 %v553
    %v1932 = vunpack.c.h.b16 %v553
    %v1933 = vunpack.c.l.b16 %v554
    %v1934 = vunpack.c.h.b16 %v554
    %v1935 = vunpack.c.l.b16 %v555
    %v1936 = vunpack.c.h.b16 %v555
    %v1937 = vunpack.c.l.b16 %v556
    %v1938 = vunpack.c.h.b16 %v556
    %v1939 = vunpack.c.l.b16 %v557
    %v1940 = vunpack.c.h.b16 %v557
    %v1941 = vunpack.c.l.b16 %v558
    %v1942 = vunpack.c.h.b16 %v558
    %v1943 = vunpack.c.l.b16 %v559
    %v1944 = vunpack.c.h.b16 %v559
    %v1945 = vunpack.c.l.b16 %v560
    %v1946 = vunpack.c.h.b16 %v560
    %v1947 = vunpack.c.l.b16 %v561
    %v1948 = vunpack.c.h.b16 %v561
    %v1949 = vunpack.c.l.b16 %v562
    %v1950 = vunpack.c.h.b16 %v562
    %v1951 = vunpack.c.l.b16 %v563
    %v1952 = vunpack.c.h.b16 %v563
    %v1953 = vunpack.c.l.b16 %v564
    %v1954 = vunpack.c.h.b16 %v564
    %v1955 = vunpack.c.l.b16 %v565
    %v1956 = vunpack.c.h.b16 %v565
    %v1957 = vunpack.c.l.b16 %v566
    %v1958 = vunpack.c.h.b16 %v566
    %v1959 = vunpack.c.l.b16 %v567
    %v1960 = vunpack.c.h.b16 %v567
    %v1961 = vunpack.c.l.b16 %v568
    %v1962 = vunpack.c.h.b16 %v568
    %v1963 = vunpack.c.l.b16 %v569
    %v1964 = vunpack.c.h.b16 %v569
    %v1965 = vunpack.c.l.b16 %v570
    %v1966 = vunpack.c.h.b16 %v570
    %v1967 = vunpack.c.l.b16 %v571
    %v1968 = vunpack.c.h.b16 %v571
    %v1969 = vunpack.c.l.b16 %v572
    %v1970 = vunpack.c.h.b16 %v572
    %v1971 = vunpack.c.l.b16 %v573
    %v1972 = vunpack.c.h.b16 %v573
    %v1973 = vunpack.c.l.b16 %v574
    %v1974 = vunpack.c.h.b16 %v574
    %v1975 = vunpack.c.l.b16 %v575
    %v1976 = vunpack.c.h.b16 %v575
    %v1977 = vunpack.c.l.b16 %v576
    %v1978 = vunpack.c.h.b16 %v576
    %v1979 = vunpack.c.l.b16 %v577
    %v1980 = vunpack.c.h.b16 %v577
    %v1981 = vunpack.c.l.b16 %v578
    %v1982 = vunpack.c.h.b16 %v578
    %v1983 = vunpack.c.l.b16 %v579
    %v1984 = vunpack.c.h.b16 %v579
    %v1985 = vunpack.c.l.b16 %v580
    %v1986 = vunpack.c.h.b16 %v580
    %v1987 = vunpack.c.l.b16 %v581
    %v1988 = vunpack.c.h.b16 %v581
    %v1989 = vunpack.c.l.b16 %v582
    %v1990 = vunpack.c.h.b16 %v582
    %v1991 = vunpack.c.l.b16 %v583
    %v1992 = vunpack.c.h.b16 %v583
    %v1993 = vunpack.c.l.b16 %v584
    %v1994 = vunpack.c.h.b16 %v584
    %v1995 = vunpack.c.l.b16 %v585
    %v1996 = vunpack.c.h.b16 %v585
    %v1997 = vpack.c.b16 %v1109, %v1101
    %v1998 = vpack.c.b16 %v1110, %v1102
    %v1999 = vpack.c.b16 %v1111, %v1103
    %v2000 = vpack.c.b16 %v1112, %v1104
    %v2001 = vpack.c.b16 %v1113, %v1105
    %v2002 = vpack.c.b16 %v1114, %v1106
    %v2003 = vpack.c.b16 %v1115, %v1107
    %v2004 = vpack.c.b16 %v1116, %v1108
    %v2005 = vpack.c.b16 %v1125, %v1117
    %v2006 = vpack.c.b16 %v1126, %v1118
    %v2007 = vpack.c.b16 %v1127, %v1119
    %v2008 = vpack.c.b16 %v1128, %v1120
    %v2009 = vpack.c.b16 %v1129, %v1121
    %v2010 = vpack.c.b16 %v1130, %v1122
    %v2011 = vpack.c.b16 %v1131, %v1123
    %v2012 = vpack.c.b16 %v1132, %v1124
    %v2013 = vpack.c.b16 %v1141, %v1133
    %v2014 = vpack.c.b16 %v1142, %v1134
    %v2015 = vpack.c.b16 %v1143, %v1135
    %v2016 = vpack.c.b16 %v1144, %v1136
    %v2017 = vpack.c.b16 %v1145, %v1137
    %v2018 = vpack.c.b16 %v1146, %v1138
    %v2019 = vpack.c.b16 %v1147, %v1139
    %v2020 = vpack.c.b16 %v1148, %v1140
    %v2021 = vpack.c.b16 %v1157, %v1149
    %v2022 = vpack.c.b16 %v1158, %v1150
    %v2023 = vpack.c.b16 %v1159, %v1151
    %v2024 = vpack.c.b16 %v1160, %v1152
    %v2025 = vpack.c.b16 %v1161, %v1153
    %v2026 = vpack.c.b16 %v1162, %v1154
    %v2027 = vpack.c.b16 %v1163, %v1155
    %v2028 = vpack.c.b16 %v1164, %v1156
    %v2029 = vpack.c.b16 %v1173, %v1165
    %v2030 = vpack.c.b16 %v1174, %v1166
    %v2031 = vpack.c.b16 %v1175, %v1167
    %v2032 = vpack.c.b16 %v1176, %v1168
    %v2033 = vpack.c.b16 %v1177, %v1169
    %v2034 = vpack.c.b16 %v1178, %v1170
    %v2035 = vpack.c.b16 %v1179, %v1171
    %v2036 = vpack.c.b16 %v1180, %v1172
    %v2037 = vpack.c.b16 %v1189, %v1181
    %v2038 = vpack.c.b16 %v1190, %v1182
    %v2039 = vpack.c.b16 %v1191, %v1183
    %v2040 = vpack.c.b16 %v1192, %v1184
    %v2041 = vpack.c.b16 %v1193, %v1185
    %v2042 = vpack.c.b16 %v1194, %v1186
    %v2043 = vpack.c.b16 %v1195, %v1187
    %v2044 = vpack.c.b16 %v1196, %v1188
    %v2045 = vpack.c.b16 %v1205, %v1197
    %v2046 = vpack.c.b16 %v1206, %v1198
    %v2047 = vpack.c.b16 %v1207, %v1199
    %v2048 = vpack.c.b16 %v1208, %v1200
    %v2049 = vpack.c.b16 %v1209, %v1201
    %v2050 = vpack.c.b16 %v1210, %v1202
    %v2051 = vpack.c.b16 %v1211, %v1203
    %v2052 = vpack.c.b16 %v1212, %v1204
    %v2053 = vpack.c.b16 %v1221, %v1213
    %v2054 = vpack.c.b16 %v1222, %v1214
    %v2055 = vpack.c.b16 %v1223, %v1215
    %v2056 = vpack.c.b16 %v1224, %v1216
    %v2057 = vpack.c.b16 %v1225, %v1217
    %v2058 = vpack.c.b16 %v1226, %v1218
    %v2059 = vpack.c.b16 %v1227, %v1219
    %v2060 = vpack.c.b16 %v1228, %v1220
    %v2061 = vpack.c.b16 %v1237, %v1229
    %v2062 = vpack.c.b16 %v1238, %v1230
    %v2063 = vpack.c.b16 %v1239, %v1231
    %v2064 = vpack.c.b16 %v1240, %v1232
    %v2065 = vpack.c.b16 %v1241, %v1233
    %v2066 = vpack.c.b16 %v1242, %v1234
    %v2067 = vpack.c.b16 %v1243, %v1235
    %v2068 = vpack.c.b16 %v1244, %v1236
    %v2069 = vpack.c.b16 %v1253, %v1245
    %v2070 = vpack.c.b16 %v1254, %v1246
    %v2071 = vpack.c.b16 %v1255, %v1247
    %v2072 = vpack.c.b16 %v1256, %v1248
    %v2073 = vpack.c.b16 %v1257, %v1249
    %v2074 = vpack.c.b16 %v1258, %v1250
    %v2075 = vpack.c.b16 %v1259, %v1251
    %v2076 = vpack.c.b16 %v1260, %v1252
    %v2077 = vpack.c.b16 %v1269, %v1261
    %v2078 = vpack.c.b16 %v1270, %v1262
    %v2079 = vpack.c.b16 %v1271, %v1263
    %v2080 = vpack.c.b16 %v1272, %v1264
    %v2081 = vpack.c.b16 %v1273, %v1265
    %v2082 = vpack.c.b16 %v1274, %v1266
    %v2083 = vpack.c.b16 %v1275, %v1267
    %v2084 = vpack.c.b16 %v1276, %v1268
    %v2085 = vpack.c.b16 %v1285, %v1277
    %v2086 = vpack.c.b16 %v1286, %v1278
    %v2087 = vpack.c.b16 %v1287, %v1279
    %v2088 = vpack.c.b16 %v1288, %v1280
    %v2089 = vpack.c.b16 %v1289, %v1281
    %v2090 = vpack.c.b16 %v1290, %v1282
    %v2091 = vpack.c.b16 %v1291, %v1283
    %v2092 = vpack.c.b16 %v1292, %v1284
    %v2093 = vpack.c.b16 %v1301, %v1293
    %v2094 = vpack.c.b16 %v1302, %v1294
    %v2095 = vpack.c.b16 %v1303, %v1295
    %v2096 = vpack.c.b16 %v1304, %v1296
    %v2097 = vpack.c.b16 %v1305, %v1297
    %v2098 = vpack.c.b16 %v1306, %v1298
    %v2099 = vpack.c.b16 %v1307, %v1299
    %v2100 = vpack.c.b16 %v1308, %v1300
    %v2101 = vpack.c.b16 %v1317, %v1309
    %v2102 = vpack.c.b16 %v1318, %v1310
    %v2103 = vpack.c.b16 %v1319, %v1311
    %v2104 = vpack.c.b16 %v1320, %v1312
    %v2105 = vpack.c.b16 %v1321, %v1313
    %v2106 = vpack.c.b16 %v1322, %v1314
    %v2107 = vpack.c.b16 %v1323, %v1315
    %v2108 = vpack.c.b16 %v1324, %v1316
    %v2109 = vpack.c.b16 %v1333, %v1325
    %v2110 = vpack.c.b16 %v1334, %v1326
    %v2111 = vpack.c.b16 %v1335, %v1327
    %v2112 = vpack.c.b16 %v1336, %v1328
    %v2113 = vpack.c.b16 %v1337, %v1329
    %v2114 = vpack.c.b16 %v1338, %v1330
    %v2115 = vpack.c.b16 %v1339, %v1331
    %v2116 = vpack.c.b16 %v1340, %v1332
    %v2117 = vpack.c.b16 %v1349, %v1341
    %v2118 = vpack.c.b16 %v1350, %v1342
    %v2119 = vpack.c.b16 %v1351, %v1343
    %v2120 = vpack.c.b16 %v1352, %v1344
    %v2121 = vpack.c.b16 %v1353, %v1345
    %v2122 = vpack.c.b16 %v1354, %v1346
    %v2123 = vpack.c.b16 %v1355, %v1347
    %v2124 = vpack.c.b16 %v1356, %v1348
    %v2125 = vpack.c.b16 %v1365, %v1357
    %v2126 = vpack.c.b16 %v1366, %v1358
    %v2127 = vpack.c.b16 %v1367, %v1359
    %v2128 = vpack.c.b16 %v1368, %v1360
    %v2129 = vpack.c.b16 %v1369, %v1361
    %v2130 = vpack.c.b16 %v1370, %v1362
    %v2131 = vpack.c.b16 %v1371, %v1363
    %v2132 = vpack.c.b16 %v1372, %v1364
    %v2133 = vpack.c.b16 %v1381, %v1373
    %v2134 = vpack.c.b16 %v1382, %v1374
    %v2135 = vpack.c.b16 %v1383, %v1375
    %v2136 = vpack.c.b16 %v1384, %v1376
    %v2137 = vpack.c.b16 %v1385, %v1377
    %v2138 = vpack.c.b16 %v1386, %v1378
    %v2139 = vpack.c.b16 %v1387, %v1379
    %v2140 = vpack.c.b16 %v1388, %v1380
    %v2141 = vpack.c.b16 %v1397, %v1389
    %v2142 = vpack.c.b16 %v1398, %v1390
    %v2143 = vpack.c.b16 %v1399, %v1391
    %v2144 = vpack.c.b16 %v1400, %v1392
    %v2145 = vpack.c.b16 %v1401, %v1393
    %v2146 = vpack.c.b16 %v1402, %v1394
    %v2147 = vpack.c.b16 %v1403, %v1395
    %v2148 = vpack.c.b16 %v1404, %v1396
    %v2149 = vpack.c.b16 %v1413, %v1405
    %v2150 = vpack.c.b16 %v1414, %v1406
    %v2151 = vpack.c.b16 %v1415, %v1407
    %v2152 = vpack.c.b16 %v1416, %v1408
    %v2153 = vpack.c.b16 %v1417, %v1409
    %v2154 = vpack.c.b16 %v1418, %v1410
    %v2155 = vpack.c.b16 %v1419, %v1411
    %v2156 = vpack.c.b16 %v1420, %v1412
    %v2157 = vpack.c.b16 %v1429, %v1421
    %v2158 = vpack.c.b16 %v1430, %v1422
    %v2159 = vpack.c.b16 %v1431, %v1423
    %v2160 = vpack.c.b16 %v1432, %v1424
    %v2161 = vpack.c.b16 %v1433, %v1425
    %v2162 = vpack.c.b16 %v1434, %v1426
    %v2163 = vpack.c.b16 %v1435, %v1427
    %v2164 = vpack.c.b16 %v1436, %v1428
    %v2165 = vpack.c.b16 %v1445, %v1437
    %v2166 = vpack.c.b16 %v1446, %v1438
    %v2167 = vpack.c.b16 %v1447, %v1439
    %v2168 = vpack.c.b16 %v1448, %v1440
    %v2169 = vpack.c.b16 %v1449, %v1441
    %v2170 = vpack.c.b16 %v1450, %v1442
    %v2171 = vpack.c.b16 %v1451, %v1443
    %v2172 = vpack.c.b16 %v1452, %v1444
    %v2173 = vpack.c.b16 %v1461, %v1453
    %v2174 = vpack.c.b16 %v1462, %v1454
    %v2175 = vpack.c.b16 %v1463, %v1455
    %v2176 = vpack.c.b16 %v1464, %v1456
    %v2177 = vpack.c.b16 %v1465, %v1457
    %v2178 = vpack.c.b16 %v1466, %v1458
    %v2179 = vpack.c.b16 %v1467, %v1459
    %v2180 = vpack.c.b16 %v1468, %v1460
    %v2181 = vpack.c.b16 %v1477, %v1469
    %v2182 = vpack.c.b16 %v1478, %v1470
    %v2183 = vpack.c.b16 %v1479, %v1471
    %v2184 = vpack.c.b16 %v1480, %v1472
    %v2185 = vpack.c.b16 %v1481, %v1473
    %v2186 = vpack.c.b16 %v1482, %v1474
    %v2187 = vpack.c.b16 %v1483, %v1475
    %v2188 = vpack.c.b16 %v1484, %v1476
    %v2189 = vpack.c.b16 %v1493, %v1485
    %v2190 = vpack.c.b16 %v1494, %v1486
    %v2191 = vpack.c.b16 %v1495, %v1487
    %v2192 = vpack.c.b16 %v1496, %v1488
    %v2193 = vpack.c.b16 %v1497, %v1489
    %v2194 = vpack.c.b16 %v1498, %v1490
    %v2195 = vpack.c.b16 %v1499, %v1491
    %v2196 = vpack.c.b16 %v1500, %v1492
    %v2197 = vpack.c.b16 %v1509, %v1501
    %v2198 = vpack.c.b16 %v1510, %v1502
    %v2199 = vpack.c.b16 %v1511, %v1503
    %v2200 = vpack.c.b16 %v1512, %v1504
    %v2201 = vpack.c.b16 %v1513, %v1505
    %v2202 = vpack.c.b16 %v1514, %v1506
    %v2203 = vpack.c.b16 %v1515, %v1507
    %v2204 = vpack.c.b16 %v1516, %v1508
    %v2205 = vpack.c.b16 %v1525, %v1517
    %v2206 = vpack.c.b16 %v1526, %v1518
    %v2207 = vpack.c.b16 %v1527, %v1519
    %v2208 = vpack.c.b16 %v1528, %v1520
    %v2209 = vpack.c.b16 %v1529, %v1521
    %v2210 = vpack.c.b16 %v1530, %v1522
    %v2211 = vpack.c.b16 %v1531, %v1523
    %v2212 = vpack.c.b16 %v1532, %v1524
    %v2213 = vpack.c.b16 %v1541, %v1533
    %v2214 = vpack.c.b16 %v1542, %v1534
    %v2215 = vpack.c.b16 %v1543, %v1535
    %v2216 = vpack.c.b16 %v1544, %v1536
    %v2217 = vpack.c.b16 %v1545, %v1537
    %v2218 = vpack.c.b16 %v1546, %v1538
    %v2219 = vpack.c.b16 %v1547, %v1539
    %v2220 = vpack.c.b16 %v1548, %v1540
    %v2221 = vpack.c.b16 %v1557, %v1549
    %v2222 = vpack.c.b16 %v1558, %v1550
    %v2223 = vpack.c.b16 %v1559, %v1551
    %v2224 = vpack.c.b16 %v1560, %v1552
    %v2225 = vpack.c.b16 %v1561, %v1553
    %v2226 = vpack.c.b16 %v1562, %v1554
    %v2227 = vpack.c.b16 %v1563, %v1555
    %v2228 = vpack.c.b16 %v1564, %v1556
    %v2229 = vpack.c.b16 %v1573, %v1565
    %v2230 = vpack.c.b16 %v1574, %v1566
    %v2231 = vpack.c.b16 %v1575, %v1567
    %v2232 = vpack.c.b16 %v1576, %v1568
    %v2233 = vpack.c.b16 %v1577, %v1569
    %v2234 = vpack.c.b16 %v1578, %v1570
    %v2235 = vpack.c.b16 %v1579, %v1571
    %v2236 = vpack.c.b16 %v1580, %v1572
    %v2237 = vpack.c.b16 %v1589, %v1581
    %v2238 = vpack.c.b16 %v1590, %v1582
    %v2239 = vpack.c.b16 %v1591, %v1583
    %v2240 = vpack.c.b16 %v1592, %v1584
    %v2241 = vpack.c.b16 %v1593, %v1585
    %v2242 = vpack.c.b16 %v1594, %v1586
    %v2243 = vpack.c.b16 %v1595, %v1587
    %v2244 = vpack.c.b16 %v1596, %v1588
    %v2245 = vpack.c.b16 %v1605, %v1597
    %v2246 = vpack.c.b16 %v1606, %v1598
    %v2247 = vpack.c.b16 %v1607, %v1599
    %v2248 = vpack.c.b16 %v1608, %v1600
    %v2249 = vpack.c.b16 %v1609, %v1601
    %v2250 = vpack.c.b16 %v1610, %v1602
    %v2251 = vpack.c.b16 %v1611, %v1603
    %v2252 = vpack.c.b16 %v1612, %v1604
    %v2253 = vpack.c.b16 %v1621, %v1613
    %v2254 = vpack.c.b16 %v1622, %v1614
    %v2255 = vpack.c.b16 %v1623, %v1615
    %v2256 = vpack.c.b16 %v1624, %v1616
    %v2257 = vpack.c.b16 %v1625, %v1617
    %v2258 = vpack.c.b16 %v1626, %v1618
    %v2259 = vpack.c.b16 %v1627, %v1619
    %v2260 = vpack.c.b16 %v1628, %v1620
    %v2261 = vpack.c.b16 %v1637, %v1629
    %v2262 = vpack.c.b16 %v1638, %v1630
    %v2263 = vpack.c.b16 %v1639, %v1631
    %v2264 = vpack.c.b16 %v1640, %v1632
    %v2265 = vpack.c.b16 %v1641, %v1633
    %v2266 = vpack.c.b16 %v1642, %v1634
    %v2267 = vpack.c.b16 %v1643, %v1635
    %v2268 = vpack.c.b16 %v1644, %v1636
    %v2269 = vpack.c.b16 %v1653, %v1645
    %v2270 = vpack.c.b16 %v1654, %v1646
    %v2271 = vpack.c.b16 %v1655, %v1647
    %v2272 = vpack.c.b16 %v1656, %v1648
    %v2273 = vpack.c.b16 %v1657, %v1649
    %v2274 = vpack.c.b16 %v1658, %v1650
    %v2275 = vpack.c.b16 %v1659, %v1651
    %v2276 = vpack.c.b16 %v1660, %v1652
    %v2277 = vpack.c.b16 %v1669, %v1661
    %v2278 = vpack.c.b16 %v1670, %v1662
    %v2279 = vpack.c.b16 %v1671, %v1663
    %v2280 = vpack.c.b16 %v1672, %v1664
    %v2281 = vpack.c.b16 %v1673, %v1665
    %v2282 = vpack.c.b16 %v1674, %v1666
    %v2283 = vpack.c.b16 %v1675, %v1667
    %v2284 = vpack.c.b16 %v1676, %v1668
    %v2285 = vpack.c.b16 %v1685, %v1677
    %v2286 = vpack.c.b16 %v1686, %v1678
    %v2287 = vpack.c.b16 %v1687, %v1679
    %v2288 = vpack.c.b16 %v1688, %v1680
    %v2289 = vpack.c.b16 %v1689, %v1681
    %v2290 = vpack.c.b16 %v1690, %v1682
    %v2291 = vpack.c.b16 %v1691, %v1683
    %v2292 = vpack.c.b16 %v1692, %v1684
    %v2293 = vpack.c.b16 %v1701, %v1693
    %v2294 = vpack.c.b16 %v1702, %v1694
    %v2295 = vpack.c.b16 %v1703, %v1695
    %v2296 = vpack.c.b16 %v1704, %v1696
    %v2297 = vpack.c.b16 %v1705, %v1697
    %v2298 = vpack.c.b16 %v1706, %v1698
    %v2299 = vpack.c.b16 %v1707, %v1699
    %v2300 = vpack.c.b16 %v1708, %v1700
    %v2301 = vpack.c.b16 %v1717, %v1709
    %v2302 = vpack.c.b16 %v1718, %v1710
    %v2303 = vpack.c.b16 %v1719, %v1711
    %v2304 = vpack.c.b16 %v1720, %v1712
    %v2305 = vpack.c.b16 %v1721, %v1713
    %v2306 = vpack.c.b16 %v1722, %v1714
    %v2307 = vpack.c.b16 %v1723, %v1715
    %v2308 = vpack.c.b16 %v1724, %v1716
    %v2309 = vpack.c.b16 %v1733, %v1725
    %v2310 = vpack.c.b16 %v1734, %v1726
    %v2311 = vpack.c.b16 %v1735, %v1727
    %v2312 = vpack.c.b16 %v1736, %v1728
    %v2313 = vpack.c.b16 %v1737, %v1729
    %v2314 = vpack.c.b16 %v1738, %v1730
    %v2315 = vpack.c.b16 %v1739, %v1731
    %v2316 = vpack.c.b16 %v1740, %v1732
    %v2317 = vpack.c.b16 %v1749, %v1741
    %v2318 = vpack.c.b16 %v1750, %v1742
    %v2319 = vpack.c.b16 %v1751, %v1743
    %v2320 = vpack.c.b16 %v1752, %v1744
    %v2321 = vpack.c.b16 %v1753, %v1745
    %v2322 = vpack.c.b16 %v1754, %v1746
    %v2323 = vpack.c.b16 %v1755, %v1747
    %v2324 = vpack.c.b16 %v1756, %v1748
    %v2325 = vpack.c.b16 %v1765, %v1757
    %v2326 = vpack.c.b16 %v1766, %v1758
    %v2327 = vpack.c.b16 %v1767, %v1759
    %v2328 = vpack.c.b16 %v1768, %v1760
    %v2329 = vpack.c.b16 %v1769, %v1761
    %v2330 = vpack.c.b16 %v1770, %v1762
    %v2331 = vpack.c.b16 %v1771, %v1763
    %v2332 = vpack.c.b16 %v1772, %v1764
    %v2333 = vpack.c.b16 %v1781, %v1773
    %v2334 = vpack.c.b16 %v1782, %v1774
    %v2335 = vpack.c.b16 %v1783, %v1775
    %v2336 = vpack.c.b16 %v1784, %v1776
    %v2337 = vpack.c.b16 %v1785, %v1777
    %v2338 = vpack.c.b16 %v1786, %v1778
    %v2339 = vpack.c.b16 %v1787, %v1779
    %v2340 = vpack.c.b16 %v1788, %v1780
    %v2341 = vpack.c.b16 %v1797, %v1789
    %v2342 = vpack.c.b16 %v1798, %v1790
    %v2343 = vpack.c.b16 %v1799, %v1791
    %v2344 = vpack.c.b16 %v1800, %v1792
    %v2345 = vpack.c.b16 %v1801, %v1793
    %v2346 = vpack.c.b16 %v1802, %v1794
    %v2347 = vpack.c.b16 %v1803, %v1795
    %v2348 = vpack.c.b16 %v1804, %v1796
    %v2349 = vpack.c.b16 %v1813, %v1805
    %v2350 = vpack.c.b16 %v1814, %v1806
    %v2351 = vpack.c.b16 %v1815, %v1807
    %v2352 = vpack.c.b16 %v1816, %v1808
    %v2353 = vpack.c.b16 %v1817, %v1809
    %v2354 = vpack.c.b16 %v1818, %v1810
    %v2355 = vpack.c.b16 %v1819, %v1811
    %v2356 = vpack.c.b16 %v1820, %v1812
    %v2357 = vpack.c.b16 %v1829, %v1821
    %v2358 = vpack.c.b16 %v1830, %v1822
    %v2359 = vpack.c.b16 %v1831, %v1823
    %v2360 = vpack.c.b16 %v1832, %v1824
    %v2361 = vpack.c.b16 %v1833, %v1825
    %v2362 = vpack.c.b16 %v1834, %v1826
    %v2363 = vpack.c.b16 %v1835, %v1827
    %v2364 = vpack.c.b16 %v1836, %v1828
    %v2365 = vpack.c.b16 %v1845, %v1837
    %v2366 = vpack.c.b16 %v1846, %v1838
    %v2367 = vpack.c.b16 %v1847, %v1839
    %v2368 = vpack.c.b16 %v1848, %v1840
    %v2369 = vpack.c.b16 %v1849, %v1841
    %v2370 = vpack.c.b16 %v1850, %v1842
    %v2371 = vpack.c.b16 %v1851, %v1843
    %v2372 = vpack.c.b16 %v1852, %v1844
    %v2373 = vpack.c.b16 %v1861, %v1853
    %v2374 = vpack.c.b16 %v1862, %v1854
    %v2375 = vpack.c.b16 %v1863, %v1855
    %v2376 = vpack.c.b16 %v1864, %v1856
    %v2377 = vpack.c.b16 %v1865, %v1857
    %v2378 = vpack.c.b16 %v1866, %v1858
    %v2379 = vpack.c.b16 %v1867, %v1859
    %v2380 = vpack.c.b16 %v1868, %v1860
    %v2381 = vpack.c.b16 %v1877, %v1869
    %v2382 = vpack.c.b16 %v1878, %v1870
    %v2383 = vpack.c.b16 %v1879, %v1871
    %v2384 = vpack.c.b16 %v1880, %v1872
    %v2385 = vpack.c.b16 %v1881, %v1873
    %v2386 = vpack.c.b16 %v1882, %v1874
    %v2387 = vpack.c.b16 %v1883, %v1875
    %v2388 = vpack.c.b16 %v1884, %v1876
    %v2389 = vpack.c.b16 %v1893, %v1885
    %v2390 = vpack.c.b16 %v1894, %v1886
    %v2391 = vpack.c.b16 %v1895, %v1887
    %v2392 = vpack.c.b16 %v1896, %v1888
    %v2393 = vpack.c.b16 %v1897, %v1889
    %v2394 = vpack.c.b16 %v1898, %v1890
    %v2395 = vpack.c.b16 %v1899, %v1891
    %v2396 = vpack.c.b16 %v1900, %v1892
    %v2397 = vpack.c.b16 %v1909, %v1901
    %v2398 = vpack.c.b16 %v1910, %v1902
    %v2399 = vpack.c.b16 %v1911, %v1903
    %v2400 = vpack.c.b16 %v1912, %v1904
    %v2401 = vpack.c.b16 %v1913, %v1905
    %v2402 = vpack.c.b16 %v1914, %v1906
    %v2403 = vpack.c.b16 %v1915, %v1907
    %v2404 = vpack.c.b16 %v1916, %v1908
    %v2405 = vpack.c.b16 %v1925, %v1917
    %v2406 = vpack.c.b16 %v1926, %v1918
    %v2407 = vpack.c.b16 %v1927, %v1919
    %v2408 = vpack.c.b16 %v1928, %v1920
    %v2409 = vpack.c.b16 %v1929, %v1921
    %v2410 = vpack.c.b16 %v1930, %v1922
    %v2411 = vpack.c.b16 %v1931, %v1923
    %v2412 = vpack.c.b16 %v1932, %v1924
    %v2413 = vpack.c.b16 %v1941, %v1933
    %v2414 = vpack.c.b16 %v1942, %v1934
    %v2415 = vpack.c.b16 %v1943, %v1935
    %v2416 = vpack.c.b16 %v1944, %v1936
    %v2417 = vpack.c.b16 %v1945, %v1937
    %v2418 = vpack.c.b16 %v1946, %v1938
    %v2419 = vpack.c.b16 %v1947, %v1939
    %v2420 = vpack.c.b16 %v1948, %v1940
    %v2421 = vpack.c.b16 %v1957, %v1949
    %v2422 = vpack.c.b16 %v1958, %v1950
    %v2423 = vpack.c.b16 %v1959, %v1951
    %v2424 = vpack.c.b16 %v1960, %v1952
    %v2425 = vpack.c.b16 %v1961, %v1953
    %v2426 = vpack.c.b16 %v1962, %v1954
    %v2427 = vpack.c.b16 %v1963, %v1955
    %v2428 = vpack.c.b16 %v1964, %v1956
    %v2429 = vpack.c.b16 %v1973, %v1965
    %v2430 = vpack.c.b16 %v1974, %v1966
    %v2431 = vpack.c.b16 %v1975, %v1967
    %v2432 = vpack.c.b16 %v1976, %v1968
    %v2433 = vpack.c.b16 %v1977, %v1969
    %v2434 = vpack.c.b16 %v1978, %v1970
    %v2435 = vpack.c.b16 %v1979, %v1971
    %v2436 = vpack.c.b16 %v1980, %v1972
    %v2437 = vpack.c.b16 %v1989, %v1981
    %v2438 = vpack.c.b16 %v1990, %v1982
    %v2439 = vpack.c.b16 %v1991, %v1983
    %v2440 = vpack.c.b16 %v1992, %v1984
    %v2441 = vpack.c.b16 %v1993, %v1985
    %v2442 = vpack.c.b16 %v1994, %v1986
    %v2443 = vpack.c.b16 %v1995, %v1987
    %v2444 = vpack.c.b16 %v1996, %v1988
    %2893 = vmatprep.subr.bf16.mxu0 %v1998
    %2894 = vmatpush1.bf16.msra.mxu0 %v1997
    %2895 = vmatprep.subr.bf16.mxu0 %v2006
    %2896 = vmatpush1.bf16.msra.mxu0 %v2005
    %2897 = vmatprep.subr.bf16.mxu0 %v2014
    %2898 = vmatpush1.bf16.msra.mxu0 %v2013
    %2899 = vmatprep.subr.bf16.mxu0 %v2022
    %2900 = vmatpush1.bf16.msra.mxu0 %v2021
    %2901 = vmatprep.subr.bf16.mxu0 %v2030
    %2902 = vmatpush1.bf16.msra.mxu0 %v2029
    %2903 = vmatprep.subr.bf16.mxu0 %v2038
    %2904 = vmatpush1.bf16.msra.mxu0 %v2037
    %2905 = vmatprep.subr.bf16.mxu0 %v2046
    %2906 = vmatpush1.bf16.msra.mxu0 %v2045
    %2907 = vmatprep.subr.bf16.mxu0 %v2054
    %2908 = vmatpush1.bf16.msra.mxu0 %v2053
    %2909 = vmatprep.subr.bf16.mxu0 %v2062
    %2910 = vmatpush1.bf16.msra.mxu0 %v2061
    %2911 = vmatprep.subr.bf16.mxu0 %v2070
    %2912 = vmatpush1.bf16.msra.mxu0 %v2069
    %2913 = vmatprep.subr.bf16.mxu0 %v2078
    %2914 = vmatpush1.bf16.msra.mxu0 %v2077
    %2915 = vmatprep.subr.bf16.mxu0 %v2086
    %2916 = vmatpush1.bf16.msra.mxu0 %v2085
    %2917 = vmatprep.subr.bf16.mxu0 %v2094
    %2918 = vmatpush1.bf16.msra.mxu0 %v2093
    %2919 = vmatprep.subr.bf16.mxu0 %v2102
    %2920 = vmatpush1.bf16.msra.mxu0 %v2101
    %2921 = vmatprep.subr.bf16.mxu0 %v2110
    %2922 = vmatpush1.bf16.msra.mxu0 %v2109
    %2923 = vmatprep.subr.bf16.mxu0 %v2118
    %2924 = vmatpush1.bf16.msra.mxu0 %v2117
    %2925 = vmatprep.mubr.bf16.mxu0 %v640
    %2926 = vmatmul.mubr.bf16.gmra.mrb[0].mxu0 %v639
    %v2927 = vpop.f32.mrb[0].mxu0
    %v2928 = vadd.f32 %v591, %v2927
    %v2929 = vpop.f32.mrb[0].mxu0
    %v2930 = vadd.f32 %v595, %v2929
    %v2931 = vpop.f32.mrb[0].mxu0
    %v2932 = vpop.f32.mrb[0].mxu0
    %2933 = vdwg.mxu0
    %2934 = vmatprep.subr.bf16.mxu0 %v2126
    %2935 = vmatpush1.bf16.msra.mxu0 %v2125
    %2936 = vmatprep.subr.bf16.mxu0 %v2134
    %2937 = vmatpush1.bf16.msra.mxu0 %v2133
    %2938 = vmatprep.subr.bf16.mxu0 %v2142
    %2939 = vmatpush1.bf16.msra.mxu0 %v2141
    %2940 = vmatprep.subr.bf16.mxu0 %v2150
    %2941 = vmatpush1.bf16.msra.mxu0 %v2149
    %2942 = vmatprep.subr.bf16.mxu0 %v2158
    %2943 = vmatpush1.bf16.msra.mxu0 %v2157
    %2944 = vmatprep.subr.bf16.mxu0 %v2166
    %2945 = vmatpush1.bf16.msra.mxu0 %v2165
    %2946 = vmatprep.subr.bf16.mxu0 %v2174
    %2947 = vmatpush1.bf16.msra.mxu0 %v2173
    %2948 = vmatprep.subr.bf16.mxu0 %v2182
    %2949 = vmatpush1.bf16.msra.mxu0 %v2181
    %2950 = vmatprep.subr.bf16.mxu0 %v2190
    %2951 = vmatpush1.bf16.msra.mxu0 %v2189
    %2952 = vmatprep.subr.bf16.mxu0 %v2198
    %2953 = vmatpush1.bf16.msra.mxu0 %v2197
    %2954 = vmatprep.subr.bf16.mxu0 %v2206
    %2955 = vmatpush1.bf16.msra.mxu0 %v2205
    %2956 = vmatprep.subr.bf16.mxu0 %v2214
    %2957 = vmatpush1.bf16.msra.mxu0 %v2213
    %2958 = vmatprep.subr.bf16.mxu0 %v2222
    %2959 = vmatpush1.bf16.msra.mxu0 %v2221
    %2960 = vmatprep.subr.bf16.mxu0 %v2230
    %2961 = vmatpush1.bf16.msra.mxu0 %v2229
    %2962 = vmatprep.subr.bf16.mxu0 %v2238
    %2963 = vmatpush1.bf16.msra.mxu0 %v2237
    %2964 = vmatprep.subr.bf16.mxu0 %v2246
    %2965 = vmatpush1.bf16.msra.mxu0 %v2245
    %2966 = vmatprep.mubr.bf16.mxu0 %v642
    %2967 = vmatmul.mubr.bf16.gmra.mrb[0].mxu0 %v641
    %v2968 = vpop.f32.mrb[0].mxu0
    %v2969 = vadd.f32 %v2928, %v2968
    %v2970 = vpop.f32.mrb[0].mxu0
    %v2971 = vadd.f32 %v2930, %v2970
    %v2972 = vpop.f32.mrb[0].mxu0
    %v2973 = vpop.f32.mrb[0].mxu0
    %2974 = vdwg.mxu0
    %2975 = vmatprep.subr.bf16.mxu0 %v2254
    %2976 = vmatpush1.bf16.msra.mxu0 %v2253
    %2977 = vmatprep.subr.bf16.mxu0 %v2262
    %2978 = vmatpush1.bf16.msra.mxu0 %v2261
    %2979 = vmatprep.subr.bf16.mxu0 %v2270
    %2980 = vmatpush1.bf16.msra.mxu0 %v2269
    %2981 = vmatprep.subr.bf16.mxu0 %v2278
    %2982 = vmatpush1.bf16.msra.mxu0 %v2277
    %2983 = vmatprep.subr.bf16.mxu0 %v2286
    %2984 = vmatpush1.bf16.msra.mxu0 %v2285
    %2985 = vmatprep.subr.bf16.mxu0 %v2294
    %2986 = vmatpush1.bf16.msra.mxu0 %v2293
    %2987 = vmatprep.subr.bf16.mxu0 %v2302
    %2988 = vmatpush1.bf16.msra.mxu0 %v2301
    %2989 = vmatprep.subr.bf16.mxu0 %v2310
    %2990 = vmatpush1.bf16.msra.mxu0 %v2309
    %2991 = vmatprep.subr.bf16.mxu0 %v2318
    %2992 = vmatpush1.bf16.msra.mxu0 %v2317
    %2993 = vmatprep.subr.bf16.mxu0 %v2326
    %2994 = vmatpush1.bf16.msra.mxu0 %v2325
    %2995 = vmatprep.subr.bf16.mxu0 %v2334
    %2996 = vmatpush1.bf16.msra.mxu0 %v2333
    %2997 = vmatprep.subr.bf16.mxu0 %v2342
    %2998 = vmatpush1.bf16.msra.mxu0 %v2341
    %2999 = vmatprep.subr.bf16.mxu0 %v2350
    %3000 = vmatpush1.bf16.msra.mxu0 %v2349
    %3001 = vmatprep.subr.bf16.mxu0 %v2358
    %3002 = vmatpush1.bf16.msra.mxu0 %v2357
    %3003 = vmatprep.subr.bf16.mxu0 %v2366
    %3004 = vmatpush1.bf16.msra.mxu0 %v2365
    %3005 = vmatprep.subr.bf16.mxu0 %v2374
    %3006 = vmatpush1.bf16.msra.mxu0 %v2373
    %3007 = vmatprep.mubr.bf16.mxu0 %v644
    %3008 = vmatmul.mubr.bf16.gmra.mrb[0].mxu0 %v643
    %v3009 = vpop.f32.mrb[0].mxu0
    %v3010 = vadd.f32 %v2969, %v3009
    %v3011 = vpop.f32.mrb[0].mxu0
    %v3012 = vadd.f32 %v2971, %v3011
    %v3013 = vpop.f32.mrb[0].mxu0
    %v3014 = vpop.f32.mrb[0].mxu0
    %3015 = vdwg.mxu0
    %3016 = vmatprep.subr.bf16.mxu0 %v2382
    %3017 = vmatpush1.bf16.msra.mxu0 %v2381
    %3018 = vmatprep.subr.bf16.mxu0 %v2390
    %3019 = vmatpush1.bf16.msra.mxu0 %v2389
    %3020 = vmatprep.subr.bf16.mxu0 %v2398
    %3021 = vmatpush1.bf16.msra.mxu0 %v2397
    %3022 = vmatprep.subr.bf16.mxu0 %v2406
    %3023 = vmatpush1.bf16.msra.mxu0 %v2405
    %3024 = vmatprep.subr.bf16.mxu0 %v2414
    %3025 = vmatpush1.bf16.msra.mxu0 %v2413
    %3026 = vmatprep.subr.bf16.mxu0 %v2422
    %3027 = vmatpush1.bf16.msra.mxu0 %v2421
    %3028 = vmatprep.subr.bf16.mxu0 %v2430
    %3029 = vmatpush1.bf16.msra.mxu0 %v2429
    %3030 = vmatprep.subr.bf16.mxu0 %v2438
    %3031 = vmatpush1.bf16.msra.mxu0 %v2437
    %3032 = vmatprep.subr.bf16.mxu0 0
    %3033 = vmatpush1.bf16.msra.mxu0 0
    %3034 = vmatprep.subr.bf16.mxu0 0
    %3035 = vmatpush1.bf16.msra.mxu0 0
    %3036 = vmatprep.subr.bf16.mxu0 0
    %3037 = vmatpush1.bf16.msra.mxu0 0
    %3038 = vmatprep.subr.bf16.mxu0 0
    %3039 = vmatpush1.bf16.msra.mxu0 0
    %3040 = vmatprep.subr.bf16.mxu0 0
    %3041 = vmatpush1.bf16.msra.mxu0 0
    %3042 = vmatprep.subr.bf16.mxu0 0
    %3043 = vmatpush1.bf16.msra.mxu0 0
    %3044 = vmatprep.subr.bf16.mxu0 0
    %3045 = vmatpush1.bf16.msra.mxu0 0
    %3046 = vmatprep.subr.bf16.mxu0 0
    %3047 = vmatpush1.bf16.msra.mxu0 0
    %3048 = vmatprep.mubr.bf16.mxu0 0
    %3049 = vmatmul.mubr.bf16.gmra.mrb[0].mxu0 %v645
    %v3050 = vpop.f32.mrb[0].mxu0
    %v3051 = vadd.f32 %v3010, %v3050
    %v3052 = vpop.f32.mrb[0].mxu0
    %v3053 = vadd.f32 %v3012, %v3052
    %v3054 = vpop.f32.mrb[0].mxu0
    %v3055 = vpop.f32.mrb[0].mxu0
    %3056 = vdwg.mxu0
    %3057 = vmatprep.subr.bf16.mxu0 %v2000
    %3058 = vmatpush1.bf16.msra.mxu0 %v1999
    %3059 = vmatprep.subr.bf16.mxu0 %v2008
    %3060 = vmatpush1.bf16.msra.mxu0 %v2007
    %3061 = vmatprep.subr.bf16.mxu0 %v2016
    %3062 = vmatpush1.bf16.msra.mxu0 %v2015
    %3063 = vmatprep.subr.bf16.mxu0 %v2024
    %3064 = vmatpush1.bf16.msra.mxu0 %v2023
    %3065 = vmatprep.subr.bf16.mxu0 %v2032
    %3066 = vmatpush1.bf16.msra.mxu0 %v2031
    %3067 = vmatprep.subr.bf16.mxu0 %v2040
    %3068 = vmatpush1.bf16.msra.mxu0 %v2039
    %3069 = vmatprep.subr.bf16.mxu0 %v2048
    %3070 = vmatpush1.bf16.msra.mxu0 %v2047
    %3071 = vmatprep.subr.bf16.mxu0 %v2056
    %3072 = vmatpush1.bf16.msra.mxu0 %v2055
    %3073 = vmatprep.subr.bf16.mxu0 %v2064
    %3074 = vmatpush1.bf16.msra.mxu0 %v2063
    %3075 = vmatprep.subr.bf16.mxu0 %v2072
    %3076 = vmatpush1.bf16.msra.mxu0 %v2071
    %3077 = vmatprep.subr.bf16.mxu0 %v2080
    %3078 = vmatpush1.bf16.msra.mxu0 %v2079
    %3079 = vmatprep.subr.bf16.mxu0 %v2088
    %3080 = vmatpush1.bf16.msra.mxu0 %v2087
    %3081 = vmatprep.subr.bf16.mxu0 %v2096
    %3082 = vmatpush1.bf16.msra.mxu0 %v2095
    %3083 = vmatprep.subr.bf16.mxu0 %v2104
    %3084 = vmatpush1.bf16.msra.mxu0 %v2103
    %3085 = vmatprep.subr.bf16.mxu0 %v2112
    %3086 = vmatpush1.bf16.msra.mxu0 %v2111
    %3087 = vmatprep.subr.bf16.mxu0 %v2120
    %3088 = vmatpush1.bf16.msra.mxu0 %v2119
    %3089 = vmatprep.mubr.bf16.mxu0 %v640
    %3090 = vmatmul.mubr.bf16.gmra.mrb[0].mxu0 %v639
    %v3091 = vpop.f32.mrb[0].mxu0
    %v3092 = vadd.f32 %v599, %v3091
    %v3093 = vpop.f32.mrb[0].mxu0
    %v3094 = vadd.f32 %v603, %v3093
    %v3095 = vpop.f32.mrb[0].mxu0
    %v3096 = vpop.f32.mrb[0].mxu0
    %3097 = vdwg.mxu0
    %3098 = vmatprep.subr.bf16.mxu0 %v2128
    %3099 = vmatpush1.bf16.msra.mxu0 %v2127
    %3100 = vmatprep.subr.bf16.mxu0 %v2136
    %3101 = vmatpush1.bf16.msra.mxu0 %v2135
    %3102 = vmatprep.subr.bf16.mxu0 %v2144
    %3103 = vmatpush1.bf16.msra.mxu0 %v2143
    %3104 = vmatprep.subr.bf16.mxu0 %v2152
    %3105 = vmatpush1.bf16.msra.mxu0 %v2151
    %3106 = vmatprep.subr.bf16.mxu0 %v2160
    %3107 = vmatpush1.bf16.msra.mxu0 %v2159
    %3108 = vmatprep.subr.bf16.mxu0 %v2168
    %3109 = vmatpush1.bf16.msra.mxu0 %v2167
    %3110 = vmatprep.subr.bf16.mxu0 %v2176
    %3111 = vmatpush1.bf16.msra.mxu0 %v2175
    %3112 = vmatprep.subr.bf16.mxu0 %v2184
    %3113 = vmatpush1.bf16.msra.mxu0 %v2183
    %3114 = vmatprep.subr.bf16.mxu0 %v2192
    %3115 = vmatpush1.bf16.msra.mxu0 %v2191
    %3116 = vmatprep.subr.bf16.mxu0 %v2200
    %3117 = vmatpush1.bf16.msra.mxu0 %v2199
    %3118 = vmatprep.subr.bf16.mxu0 %v2208
    %3119 = vmatpush1.bf16.msra.mxu0 %v2207
    %3120 = vmatprep.subr.bf16.mxu0 %v2216
    %3121 = vmatpush1.bf16.msra.mxu0 %v2215
    %3122 = vmatprep.subr.bf16.mxu0 %v2224
    %3123 = vmatpush1.bf16.msra.mxu0 %v2223
    %3124 = vmatprep.subr.bf16.mxu0 %v2232
    %3125 = vmatpush1.bf16.msra.mxu0 %v2231
    %3126 = vmatprep.subr.bf16.mxu0 %v2240
    %3127 = vmatpush1.bf16.msra.mxu0 %v2239
    %3128 = vmatprep.subr.bf16.mxu0 %v2248
    %3129 = vmatpush1.bf16.msra.mxu0 %v2247
    %3130 = vmatprep.mubr.bf16.mxu0 %v642
    %3131 = vmatmul.mubr.bf16.gmra.mrb[0].mxu0 %v641
    %v3132 = vpop.f32.mrb[0].mxu0
    %v3133 = vadd.f32 %v3092, %v3132
    %v3134 = vpop.f32.mrb[0].mxu0
    %v3135 = vadd.f32 %v3094, %v3134
    %v3136 = vpop.f32.mrb[0].mxu0
    %v3137 = vpop.f32.mrb[0].mxu0
    %3138 = vdwg.mxu0
    %3139 = vmatprep.subr.bf16.mxu0 %v2256
    %3140 = vmatpush1.bf16.msra.mxu0 %v2255
    %3141 = vmatprep.subr.bf16.mxu0 %v2264
    %3142 = vmatpush1.bf16.msra.mxu0 %v2263
    %3143 = vmatprep.subr.bf16.mxu0 %v2272
    %3144 = vmatpush1.bf16.msra.mxu0 %v2271
    %3145 = vmatprep.subr.bf16.mxu0 %v2280
    %3146 = vmatpush1.bf16.msra.mxu0 %v2279
    %3147 = vmatprep.subr.bf16.mxu0 %v2288
    %3148 = vmatpush1.bf16.msra.mxu0 %v2287
    %3149 = vmatprep.subr.bf16.mxu0 %v2296
    %3150 = vmatpush1.bf16.msra.mxu0 %v2295
    %3151 = vmatprep.subr.bf16.mxu0 %v2304
    %3152 = vmatpush1.bf16.msra.mxu0 %v2303
    %3153 = vmatprep.subr.bf16.mxu0 %v2312
    %3154 = vmatpush1.bf16.msra.mxu0 %v2311
    %3155 = vmatprep.subr.bf16.mxu0 %v2320
    %3156 = vmatpush1.bf16.msra.mxu0 %v2319
    %3157 = vmatprep.subr.bf16.mxu0 %v2328
    %3158 = vmatpush1.bf16.msra.mxu0 %v2327
    %3159 = vmatprep.subr.bf16.mxu0 %v2336
    %3160 = vmatpush1.bf16.msra.mxu0 %v2335
    %3161 = vmatprep.subr.bf16.mxu0 %v2344
    %3162 = vmatpush1.bf16.msra.mxu0 %v2343
    %3163 = vmatprep.subr.bf16.mxu0 %v2352
    %3164 = vmatpush1.bf16.msra.mxu0 %v2351
    %3165 = vmatprep.subr.bf16.mxu0 %v2360
    %3166 = vmatpush1.bf16.msra.mxu0 %v2359
    %3167 = vmatprep.subr.bf16.mxu0 %v2368
    %3168 = vmatpush1.bf16.msra.mxu0 %v2367
    %3169 = vmatprep.subr.bf16.mxu0 %v2376
    %3170 = vmatpush1.bf16.msra.mxu0 %v2375
    %3171 = vmatprep.mubr.bf16.mxu0 %v644
    %3172 = vmatmul.mubr.bf16.gmra.mrb[0].mxu0 %v643
    %v3173 = vpop.f32.mrb[0].mxu0
    %v3174 = vadd.f32 %v3133, %v3173
    %v3175 = vpop.f32.mrb[0].mxu0
    %v3176 = vadd.f32 %v3135, %v3175
    %v3177 = vpop.f32.mrb[0].mxu0
    %v3178 = vpop.f32.mrb[0].mxu0
    %3179 = vdwg.mxu0
    %3180 = vmatprep.subr.bf16.mxu0 %v2384
    %3181 = vmatpush1.bf16.msra.mxu0 %v2383
    %3182 = vmatprep.subr.bf16.mxu0 %v2392
    %3183 = vmatpush1.bf16.msra.mxu0 %v2391
    %3184 = vmatprep.subr.bf16.mxu0 %v2400
    %3185 = vmatpush1.bf16.msra.mxu0 %v2399
    %3186 = vmatprep.subr.bf16.mxu0 %v2408
    %3187 = vmatpush1.bf16.msra.mxu0 %v2407
    %3188 = vmatprep.subr.bf16.mxu0 %v2416
    %3189 = vmatpush1.bf16.msra.mxu0 %v2415
    %3190 = vmatprep.subr.bf16.mxu0 %v2424
    %3191 = vmatpush1.bf16.msra.mxu0 %v2423
    %3192 = vmatprep.subr.bf16.mxu0 %v2432
    %3193 = vmatpush1.bf16.msra.mxu0 %v2431
    %3194 = vmatprep.subr.bf16.mxu0 %v2440
    %3195 = vmatpush1.bf16.msra.mxu0 %v2439
    %3196 = vmatprep.subr.bf16.mxu0 0
    %3197 = vmatpush1.bf16.msra.mxu0 0
    %3198 = vmatprep.subr.bf16.mxu0 0
    %3199 = vmatpush1.bf16.msra.mxu0 0
    %3200 = vmatprep.subr.bf16.mxu0 0
    %3201 = vmatpush1.bf16.msra.mxu0 0
    %3202 = vmatprep.subr.bf16.mxu0 0
    %3203 = vmatpush1.bf16.msra.mxu0 0
    %3204 = vmatprep.subr.bf16.mxu0 0
    %3205 = vmatpush1.bf16.msra.mxu0 0
    %3206 = vmatprep.subr.bf16.mxu0 0
    %3207 = vmatpush1.bf16.msra.mxu0 0
    %3208 = vmatprep.subr.bf16.mxu0 0
    %3209 = vmatpush1.bf16.msra.mxu0 0
    %3210 = vmatprep.subr.bf16.mxu0 0
    %3211 = vmatpush1.bf16.msra.mxu0 0
    %3212 = vmatprep.mubr.bf16.mxu0 0
    %3213 = vmatmul.mubr.bf16.gmra.mrb[0].mxu0 %v645
    %v3214 = vpop.f32.mrb[0].mxu0
    %v3215 = vadd.f32 %v3174, %v3214
    %v3216 = vpop.f32.mrb[0].mxu0
    %v3217 = vadd.f32 %v3176, %v3216
    %v3218 = vpop.f32.mrb[0].mxu0
    %v3219 = vpop.f32.mrb[0].mxu0
    %3220 = vdwg.mxu0
    %3221 = vmatprep.subr.bf16.mxu0 %v2002
    %3222 = vmatpush1.bf16.msra.mxu0 %v2001
    %3223 = vmatprep.subr.bf16.mxu0 %v2010
    %3224 = vmatpush1.bf16.msra.mxu0 %v2009
    %3225 = vmatprep.subr.bf16.mxu0 %v2018
    %3226 = vmatpush1.bf16.msra.mxu0 %v2017
    %3227 = vmatprep.subr.bf16.mxu0 %v2026
    %3228 = vmatpush1.bf16.msra.mxu0 %v2025
    %3229 = vmatprep.subr.bf16.mxu0 %v2034
    %3230 = vmatpush1.bf16.msra.mxu0 %v2033
    %3231 = vmatprep.subr.bf16.mxu0 %v2042
    %3232 = vmatpush1.bf16.msra.mxu0 %v2041
    %3233 = vmatprep.subr.bf16.mxu0 %v2050
    %3234 = vmatpush1.bf16.msra.mxu0 %v2049
    %3235 = vmatprep.subr.bf16.mxu0 %v2058
    %3236 = vmatpush1.bf16.msra.mxu0 %v2057
    %3237 = vmatprep.subr.bf16.mxu0 %v2066
    %3238 = vmatpush1.bf16.msra.mxu0 %v2065
    %3239 = vmatprep.subr.bf16.mxu0 %v2074
    %3240 = vmatpush1.bf16.msra.mxu0 %v2073
    %3241 = vmatprep.subr.bf16.mxu0 %v2082
    %3242 = vmatpush1.bf16.msra.mxu0 %v2081
    %3243 = vmatprep.subr.bf16.mxu0 %v2090
    %3244 = vmatpush1.bf16.msra.mxu0 %v2089
    %3245 = vmatprep.subr.bf16.mxu0 %v2098
    %3246 = vmatpush1.bf16.msra.mxu0 %v2097
    %3247 = vmatprep.subr.bf16.mxu0 %v2106
    %3248 = vmatpush1.bf16.msra.mxu0 %v2105
    %3249 = vmatprep.subr.bf16.mxu0 %v2114
    %3250 = vmatpush1.bf16.msra.mxu0 %v2113
    %3251 = vmatprep.subr.bf16.mxu0 %v2122
    %3252 = vmatpush1.bf16.msra.mxu0 %v2121
    %3253 = vmatprep.mubr.bf16.mxu0 %v640
    %3254 = vmatmul.mubr.bf16.gmra.mrb[0].mxu0 %v639
    %v3255 = vpop.f32.mrb[0].mxu0
    %v3256 = vadd.f32 %v607, %v3255
    %v3257 = vpop.f32.mrb[0].mxu0
    %v3258 = vadd.f32 %v611, %v3257
    %v3259 = vpop.f32.mrb[0].mxu0
    %v3260 = vpop.f32.mrb[0].mxu0
    %3261 = vdwg.mxu0
    %3262 = vmatprep.subr.bf16.mxu0 %v2130
    %3263 = vmatpush1.bf16.msra.mxu0 %v2129
    %3264 = vmatprep.subr.bf16.mxu0 %v2138
    %3265 = vmatpush1.bf16.msra.mxu0 %v2137
    %3266 = vmatprep.subr.bf16.mxu0 %v2146
    %3267 = vmatpush1.bf16.msra.mxu0 %v2145
    %3268 = vmatprep.subr.bf16.mxu0 %v2154
    %3269 = vmatpush1.bf16.msra.mxu0 %v2153
    %3270 = vmatprep.subr.bf16.mxu0 %v2162
    %3271 = vmatpush1.bf16.msra.mxu0 %v2161
    %3272 = vmatprep.subr.bf16.mxu0 %v2170
    %3273 = vmatpush1.bf16.msra.mxu0 %v2169
    %3274 = vmatprep.subr.bf16.mxu0 %v2178
    %3275 = vmatpush1.bf16.msra.mxu0 %v2177
    %3276 = vmatprep.subr.bf16.mxu0 %v2186
    %3277 = vmatpush1.bf16.msra.mxu0 %v2185
    %3278 = vmatprep.subr.bf16.mxu0 %v2194
    %3279 = vmatpush1.bf16.msra.mxu0 %v2193
    %3280 = vmatprep.subr.bf16.mxu0 %v2202
    %3281 = vmatpush1.bf16.msra.mxu0 %v2201
    %3282 = vmatprep.subr.bf16.mxu0 %v2210
    %3283 = vmatpush1.bf16.msra.mxu0 %v2209
    %3284 = vmatprep.subr.bf16.mxu0 %v2218
    %3285 = vmatpush1.bf16.msra.mxu0 %v2217
    %3286 = vmatprep.subr.bf16.mxu0 %v2226
    %3287 = vmatpush1.bf16.msra.mxu0 %v2225
    %3288 = vmatprep.subr.bf16.mxu0 %v2234
    %3289 = vmatpush1.bf16.msra.mxu0 %v2233
    %3290 = vmatprep.subr.bf16.mxu0 %v2242
    %3291 = vmatpush1.bf16.msra.mxu0 %v2241
    %3292 = vmatprep.subr.bf16.mxu0 %v2250
    %3293 = vmatpush1.bf16.msra.mxu0 %v2249
    %3294 = vmatprep.mubr.bf16.mxu0 %v642
    %3295 = vmatmul.mubr.bf16.gmra.mrb[0].mxu0 %v641
    %v3296 = vpop.f32.mrb[0].mxu0
    %v3297 = vadd.f32 %v3256, %v3296
    %v3298 = vpop.f32.mrb[0].mxu0
    %v3299 = vadd.f32 %v3258, %v3298
    %v3300 = vpop.f32.mrb[0].mxu0
    %v3301 = vpop.f32.mrb[0].mxu0
    %3302 = vdwg.mxu0
    %3303 = vmatprep.subr.bf16.mxu0 %v2258
    %3304 = vmatpush1.bf16.msra.mxu0 %v2257
    %3305 = vmatprep.subr.bf16.mxu0 %v2266
    %3306 = vmatpush1.bf16.msra.mxu0 %v2265
    %3307 = vmatprep.subr.bf16.mxu0 %v2274
    %3308 = vmatpush1.bf16.msra.mxu0 %v2273
    %3309 = vmatprep.subr.bf16.mxu0 %v2282
    %3310 = vmatpush1.bf16.msra.mxu0 %v2281
    %3311 = vmatprep.subr.bf16.mxu0 %v2290
    %3312 = vmatpush1.bf16.msra.mxu0 %v2289
    %3313 = vmatprep.subr.bf16.mxu0 %v2298
    %3314 = vmatpush1.bf16.msra.mxu0 %v2297
    %3315 = vmatprep.subr.bf16.mxu0 %v2306
    %3316 = vmatpush1.bf16.msra.mxu0 %v2305
    %3317 = vmatprep.subr.bf16.mxu0 %v2314
    %3318 = vmatpush1.bf16.msra.mxu0 %v2313
    %3319 = vmatprep.subr.bf16.mxu0 %v2322
    %3320 = vmatpush1.bf16.msra.mxu0 %v2321
    %3321 = vmatprep.subr.bf16.mxu0 %v2330
    %3322 = vmatpush1.bf16.msra.mxu0 %v2329
    %3323 = vmatprep.subr.bf16.mxu0 %v2338
    %3324 = vmatpush1.bf16.msra.mxu0 %v2337
    %3325 = vmatprep.subr.bf16.mxu0 %v2346
    %3326 = vmatpush1.bf16.msra.mxu0 %v2345
    %3327 = vmatprep.subr.bf16.mxu0 %v2354
    %3328 = vmatpush1.bf16.msra.mxu0 %v2353
    %3329 = vmatprep.subr.bf16.mxu0 %v2362
    %3330 = vmatpush1.bf16.msra.mxu0 %v2361
    %3331 = vmatprep.subr.bf16.mxu0 %v2370
    %3332 = vmatpush1.bf16.msra.mxu0 %v2369
    %3333 = vmatprep.subr.bf16.mxu0 %v2378
    %3334 = vmatpush1.bf16.msra.mxu0 %v2377
    %3335 = vmatprep.mubr.bf16.mxu0 %v644
    %3336 = vmatmul.mubr.bf16.gmra.mrb[0].mxu0 %v643
    %v3337 = vpop.f32.mrb[0].mxu0
    %v3338 = vadd.f32 %v3297, %v3337
    %v3339 = vpop.f32.mrb[0].mxu0
    %v3340 = vadd.f32 %v3299, %v3339
    %v3341 = vpop.f32.mrb[0].mxu0
    %v3342 = vpop.f32.mrb[0].mxu0
    %3343 = vdwg.mxu0
    %3344 = vmatprep.subr.bf16.mxu0 %v2386
    %3345 = vmatpush1.bf16.msra.mxu0 %v2385
    %3346 = vmatprep.subr.bf16.mxu0 %v2394
    %3347 = vmatpush1.bf16.msra.mxu0 %v2393
    %3348 = vmatprep.subr.bf16.mxu0 %v2402
    %3349 = vmatpush1.bf16.msra.mxu0 %v2401
    %3350 = vmatprep.subr.bf16.mxu0 %v2410
    %3351 = vmatpush1.bf16.msra.mxu0 %v2409
    %3352 = vmatprep.subr.bf16.mxu0 %v2418
    %3353 = vmatpush1.bf16.msra.mxu0 %v2417
    %3354 = vmatprep.subr.bf16.mxu0 %v2426
    %3355 = vmatpush1.bf16.msra.mxu0 %v2425
    %3356 = vmatprep.subr.bf16.mxu0 %v2434
    %3357 = vmatpush1.bf16.msra.mxu0 %v2433
    %3358 = vmatprep.subr.bf16.mxu0 %v2442
    %3359 = vmatpush1.bf16.msra.mxu0 %v2441
    %3360 = vmatprep.subr.bf16.mxu0 0
    %3361 = vmatpush1.bf16.msra.mxu0 0
    %3362 = vmatprep.subr.bf16.mxu0 0
    %3363 = vmatpush1.bf16.msra.mxu0 0
    %3364 = vmatprep.subr.bf16.mxu0 0
    %3365 = vmatpush1.bf16.msra.mxu0 0
    %3366 = vmatprep.subr.bf16.mxu0 0
    %3367 = vmatpush1.bf16.msra.mxu0 0
    %3368 = vmatprep.subr.bf16.mxu0 0
    %3369 = vmatpush1.bf16.msra.mxu0 0
    %3370 = vmatprep.subr.bf16.mxu0 0
    %3371 = vmatpush1.bf16.msra.mxu0 0
    %3372 = vmatprep.subr.bf16.mxu0 0
    %3373 = vmatpush1.bf16.msra.mxu0 0
    %3374 = vmatprep.subr.bf16.mxu0 0
    %3375 = vmatpush1.bf16.msra.mxu0 0
    %3376 = vmatprep.mubr.bf16.mxu0 0
    %3377 = vmatmul.mubr.bf16.gmra.mrb[0].mxu0 %v645
    %v3378 = vpop.f32.mrb[0].mxu0
    %v3379 = vadd.f32 %v3338, %v3378
    %v3380 = vpop.f32.mrb[0].mxu0
    %v3381 = vadd.f32 %v3340, %v3380
    %v3382 = vpop.f32.mrb[0].mxu0
    %v3383 = vpop.f32.mrb[0].mxu0
    %3384 = vdwg.mxu0
    %3385 = vmatprep.subr.bf16.mxu0 %v2004
    %3386 = vmatpush1.bf16.msra.mxu0 %v2003
    %3387 = vmatprep.subr.bf16.mxu0 %v2012
    %3388 = vmatpush1.bf16.msra.mxu0 %v2011
    %3389 = vmatprep.subr.bf16.mxu0 %v2020
    %3390 = vmatpush1.bf16.msra.mxu0 %v2019
    %3391 = vmatprep.subr.bf16.mxu0 %v2028
    %3392 = vmatpush1.bf16.msra.mxu0 %v2027
    %3393 = vmatprep.subr.bf16.mxu0 %v2036
    %3394 = vmatpush1.bf16.msra.mxu0 %v2035
    %3395 = vmatprep.subr.bf16.mxu0 %v2044
    %3396 = vmatpush1.bf16.msra.mxu0 %v2043
    %3397 = vmatprep.subr.bf16.mxu0 %v2052
    %3398 = vmatpush1.bf16.msra.mxu0 %v2051
    %3399 = vmatprep.subr.bf16.mxu0 %v2060
    %3400 = vmatpush1.bf16.msra.mxu0 %v2059
    %3401 = vmatprep.subr.bf16.mxu0 %v2068
    %3402 = vmatpush1.bf16.msra.mxu0 %v2067
    %3403 = vmatprep.subr.bf16.mxu0 %v2076
    %3404 = vmatpush1.bf16.msra.mxu0 %v2075
    %3405 = vmatprep.subr.bf16.mxu0 %v2084
    %3406 = vmatpush1.bf16.msra.mxu0 %v2083
    %3407 = vmatprep.subr.bf16.mxu0 %v2092
    %3408 = vmatpush1.bf16.msra.mxu0 %v2091
    %3409 = vmatprep.subr.bf16.mxu0 %v2100
    %3410 = vmatpush1.bf16.msra.mxu0 %v2099
    %3411 = vmatprep.subr.bf16.mxu0 %v2108
    %3412 = vmatpush1.bf16.msra.mxu0 %v2107
    %3413 = vmatprep.subr.bf16.mxu0 %v2116
    %3414 = vmatpush1.bf16.msra.mxu0 %v2115
    %3415 = vmatprep.subr.bf16.mxu0 %v2124
    %3416 = vmatpush1.bf16.msra.mxu0 %v2123
    %3417 = vmatprep.mubr.bf16.mxu0 %v640
    %3418 = vmatmul.mubr.bf16.gmra.mrb[0].mxu0 %v639
    %v3419 = vpop.f32.mrb[0].mxu0
    %v3420 = vadd.f32 %v615, %v3419
    %v3421 = vpop.f32.mrb[0].mxu0
    %v3422 = vadd.f32 %v619, %v3421
    %v3423 = vpop.f32.mrb[0].mxu0
    %v3424 = vpop.f32.mrb[0].mxu0
    %3425 = vdwg.mxu0
    %3426 = vmatprep.subr.bf16.mxu0 %v2132
    %3427 = vmatpush1.bf16.msra.mxu0 %v2131
    %3428 = vmatprep.subr.bf16.mxu0 %v2140
    %3429 = vmatpush1.bf16.msra.mxu0 %v2139
    %3430 = vmatprep.subr.bf16.mxu0 %v2148
    %3431 = vmatpush1.bf16.msra.mxu0 %v2147
    %3432 = vmatprep.subr.bf16.mxu0 %v2156
    %3433 = vmatpush1.bf16.msra.mxu0 %v2155
    %3434 = vmatprep.subr.bf16.mxu0 %v2164
    %3435 = vmatpush1.bf16.msra.mxu0 %v2163
    %3436 = vmatprep.subr.bf16.mxu0 %v2172
    %3437 = vmatpush1.bf16.msra.mxu0 %v2171
    %3438 = vmatprep.subr.bf16.mxu0 %v2180
    %3439 = vmatpush1.bf16.msra.mxu0 %v2179
    %3440 = vmatprep.subr.bf16.mxu0 %v2188
    %3441 = vmatpush1.bf16.msra.mxu0 %v2187
    %3442 = vmatprep.subr.bf16.mxu0 %v2196
    %3443 = vmatpush1.bf16.msra.mxu0 %v2195
    %3444 = vmatprep.subr.bf16.mxu0 %v2204
    %3445 = vmatpush1.bf16.msra.mxu0 %v2203
    %3446 = vmatprep.subr.bf16.mxu0 %v2212
    %3447 = vmatpush1.bf16.msra.mxu0 %v2211
    %3448 = vmatprep.subr.bf16.mxu0 %v2220
    %3449 = vmatpush1.bf16.msra.mxu0 %v2219
    %3450 = vmatprep.subr.bf16.mxu0 %v2228
    %3451 = vmatpush1.bf16.msra.mxu0 %v2227
    %3452 = vmatprep.subr.bf16.mxu0 %v2236
    %3453 = vmatpush1.bf16.msra.mxu0 %v2235
    %3454 = vmatprep.subr.bf16.mxu0 %v2244
    %3455 = vmatpush1.bf16.msra.mxu0 %v2243
    %3456 = vmatprep.subr.bf16.mxu0 %v2252
    %3457 = vmatpush1.bf16.msra.mxu0 %v2251
    %3458 = vmatprep.mubr.bf16.mxu0 %v642
    %3459 = vmatmul.mubr.bf16.gmra.mrb[0].mxu0 %v641
    %v3460 = vpop.f32.mrb[0].mxu0
    %v3461 = vadd.f32 %v3420, %v3460
    %v3462 = vpop.f32.mrb[0].mxu0
    %v3463 = vadd.f32 %v3422, %v3462
    %v3464 = vpop.f32.mrb[0].mxu0
    %v3465 = vpop.f32.mrb[0].mxu0
    %3466 = vdwg.mxu0
    %3467 = vmatprep.subr.bf16.mxu0 %v2260
    %3468 = vmatpush1.bf16.msra.mxu0 %v2259
    %3469 = vmatprep.subr.bf16.mxu0 %v2268
    %3470 = vmatpush1.bf16.msra.mxu0 %v2267
    %3471 = vmatprep.subr.bf16.mxu0 %v2276
    %3472 = vmatpush1.bf16.msra.mxu0 %v2275
    %3473 = vmatprep.subr.bf16.mxu0 %v2284
    %3474 = vmatpush1.bf16.msra.mxu0 %v2283
    %3475 = vmatprep.subr.bf16.mxu0 %v2292
    %3476 = vmatpush1.bf16.msra.mxu0 %v2291
    %3477 = vmatprep.subr.bf16.mxu0 %v2300
    %3478 = vmatpush1.bf16.msra.mxu0 %v2299
    %3479 = vmatprep.subr.bf16.mxu0 %v2308
    %3480 = vmatpush1.bf16.msra.mxu0 %v2307
    %3481 = vmatprep.subr.bf16.mxu0 %v2316
    %3482 = vmatpush1.bf16.msra.mxu0 %v2315
    %3483 = vmatprep.subr.bf16.mxu0 %v2324
    %3484 = vmatpush1.bf16.msra.mxu0 %v2323
    %3485 = vmatprep.subr.bf16.mxu0 %v2332
    %3486 = vmatpush1.bf16.msra.mxu0 %v2331
    %3487 = vmatprep.subr.bf16.mxu0 %v2340
    %3488 = vmatpush1.bf16.msra.mxu0 %v2339
    %3489 = vmatprep.subr.bf16.mxu0 %v2348
    %3490 = vmatpush1.bf16.msra.mxu0 %v2347
    %3491 = vmatprep.subr.bf16.mxu0 %v2356
    %3492 = vmatpush1.bf16.msra.mxu0 %v2355
    %3493 = vmatprep.subr.bf16.mxu0 %v2364
    %3494 = vmatpush1.bf16.msra.mxu0 %v2363
    %3495 = vmatprep.subr.bf16.mxu0 %v2372
    %3496 = vmatpush1.bf16.msra.mxu0 %v2371
    %3497 = vmatprep.subr.bf16.mxu0 %v2380
    %3498 = vmatpush1.bf16.msra.mxu0 %v2379
    %3499 = vmatprep.mubr.bf16.mxu0 %v644
    %3500 = vmatmul.mubr.bf16.gmra.mrb[0].mxu0 %v643
    %v3501 = vpop.f32.mrb[0].mxu0
    %v3502 = vadd.f32 %v3461, %v3501
    %v3503 = vpop.f32.mrb[0].mxu0
    %v3504 = vadd.f32 %v3463, %v3503
    %v3505 = vpop.f32.mrb[0].mxu0
    %v3506 = vpop.f32.mrb[0].mxu0
    %3507 = vdwg.mxu0
    %3508 = vmatprep.subr.bf16.mxu0 %v2388
    %3509 = vmatpush1.bf16.msra.mxu0 %v2387
    %3510 = vmatprep.subr.bf16.mxu0 %v2396
    %3511 = vmatpush1.bf16.msra.mxu0 %v2395
    %3512 = vmatprep.subr.bf16.mxu0 %v2404
    %3513 = vmatpush1.bf16.msra.mxu0 %v2403
    %3514 = vmatprep.subr.bf16.mxu0 %v2412
    %3515 = vmatpush1.bf16.msra.mxu0 %v2411
    %3516 = vmatprep.subr.bf16.mxu0 %v2420
    %3517 = vmatpush1.bf16.msra.mxu0 %v2419
    %3518 = vmatprep.subr.bf16.mxu0 %v2428
    %3519 = vmatpush1.bf16.msra.mxu0 %v2427
    %3520 = vmatprep.subr.bf16.mxu0 %v2436
    %3521 = vmatpush1.bf16.msra.mxu0 %v2435
    %3522 = vmatprep.subr.bf16.mxu0 %v2444
    %3523 = vmatpush1.bf16.msra.mxu0 %v2443
    %3524 = vmatprep.subr.bf16.mxu0 0
    %3525 = vmatpush1.bf16.msra.mxu0 0
    %3526 = vmatprep.subr.bf16.mxu0 0
    %3527 = vmatpush1.bf16.msra.mxu0 0
    %3528 = vmatprep.subr.bf16.mxu0 0
    %3529 = vmatpush1.bf16.msra.mxu0 0
    %3530 = vmatprep.subr.bf16.mxu0 0
    %3531 = vmatpush1.bf16.msra.mxu0 0
    %3532 = vmatprep.subr.bf16.mxu0 0
    %3533 = vmatpush1.bf16.msra.mxu0 0
    %3534 = vmatprep.subr.bf16.mxu0 0
    %3535 = vmatpush1.bf16.msra.mxu0 0
    %3536 = vmatprep.subr.bf16.mxu0 0
    %3537 = vmatpush1.bf16.msra.mxu0 0
    %3538 = vmatprep.subr.bf16.mxu0 0
    %3539 = vmatpush1.bf16.msra.mxu0 0
    %3540 = vmatprep.mubr.bf16.mxu0 0
    %3541 = vmatmul.mubr.bf16.gmra.mrb[0].mxu0 %v645
    %v3542 = vpop.f32.mrb[0].mxu0
    %v3543 = vadd.f32 %v3502, %v3542
    %v3544 = vpop.f32.mrb[0].mxu0
    %v3545 = vadd.f32 %v3504, %v3544
    %v3546 = vpop.f32.mrb[0].mxu0
    %v3547 = vpop.f32.mrb[0].mxu0
    %3548 = vdwg.mxu0
    %vm3549 = vcmp.gt.f32.partialorder %v3051, 0.0
    %vm3550 = vcmp.gt.f32.partialorder %v3053, 0.0
    %vm3551 = vcmp.gt.f32.partialorder %v3215, 0.0
    %vm3552 = vcmp.gt.f32.partialorder %v3217, 0.0
    %vm3553 = vcmp.gt.f32.partialorder %v3379, 0.0
    %vm3554 = vcmp.gt.f32.partialorder %v3381, 0.0
    %vm3555 = vcmp.gt.f32.partialorder %v3543, 0.0
    %vm3556 = vcmp.gt.f32.partialorder %v3545, 0.0
    %v3557 = vmul.f32 %v3051, 0.2
    %v3558 = vmul.f32 %v3053, 0.2
    %v3559 = vmul.f32 %v3215, 0.2
    %v3560 = vmul.f32 %v3217, 0.2
    %v3561 = vmul.f32 %v3379, 0.2
    %v3562 = vmul.f32 %v3381, 0.2
    %v3563 = vmul.f32 %v3543, 0.2
    %v3564 = vmul.f32 %v3545, 0.2
    %v3565 = vsel %vm3549, %v3051, %v3557
    %v3566 = vsel %vm3550, %v3053, %v3558
    %v3567 = vsel %vm3551, %v3215, %v3559
    %v3568 = vsel %vm3552, %v3217, %v3560
    %v3569 = vsel %vm3553, %v3379, %v3561
    %v3570 = vsel %vm3554, %v3381, %v3562
    %v3571 = vsel %vm3555, %v3543, %v3563
    %v3572 = vsel %vm3556, %v3545, %v3564
    %v3573 = vpack.c.bf16 %v3565, %v3565
    %v3574 = vpack.c.bf16 %v3566, %v3566
    %v3575 = vpack.c.bf16 %v3567, %v3567
    %v3576 = vpack.c.bf16 %v3568, %v3568
    %v3577 = vpack.c.bf16 %v3569, %v3569
    %v3578 = vpack.c.bf16 %v3570, %v3570
    %v3579 = vpack.c.bf16 %v3571, %v3571
    %v3580 = vpack.c.bf16 %v3572, %v3572
    %v3581 = vld [vmem:[#allocation8] sm:$0xff]
    %v3582 = vld [vmem:[#allocation8 + $0x8] sm:$0xff]
    %v3583 = vld [vmem:[#allocation8 + $0x10] sm:$0xff]
    %v3584 = vld [vmem:[#allocation8 + $0x18] sm:$0xff]
    %v3585 = vld [vmem:[#allocation8 + $0x20] sm:$0xff]
    %v3586 = vld [vmem:[#allocation8 + $0x28] sm:$0xff]
    %v3587 = vld [vmem:[#allocation8 + $0x30] sm:$0xff]
    %v3588 = vld [vmem:[#allocation8 + $0x38] sm:$0xff]
    %v3589 = vld [vmem:[#allocation8 + $0x40] sm:$0xff]
    %v3590 = vld [vmem:[#allocation8 + $0x48] sm:$0xff]
    %v3591 = vld [vmem:[#allocation8 + $0x50] sm:$0xff]
    %v3592 = vld [vmem:[#allocation8 + $0x58] sm:$0xff]
    %v3593 = vld [vmem:[#allocation8 + $0x60] sm:$0xff]
    %v3594 = vld [vmem:[#allocation8 + $0x68] sm:$0xff]
    %v3595 = vld [vmem:[#allocation8 + $0x70] sm:$0xff]
    %v3596 = vld [vmem:[#allocation8 + $0x78] sm:$0xff]
    %v3597 = vld [vmem:[#allocation8 + $0x80] sm:$0xff]
    %v3598 = vld [vmem:[#allocation8 + $0x88] sm:$0xff]
    %v3599 = vld [vmem:[#allocation8 + $0x90] sm:$0xff]
    %v3600 = vld [vmem:[#allocation8 + $0x98] sm:$0xff]
    %v3601 = vld [vmem:[#allocation8 + $0xa0] sm:$0xff]
    %v3602 = vld [vmem:[#allocation8 + $0xa8] sm:$0xff]
    %v3603 = vld [vmem:[#allocation8 + $0xb0] sm:$0xff]
    %v3604 = vld [vmem:[#allocation8 + $0xb8] sm:$0xff]
    %v3605 = vld [vmem:[#allocation8 + $0xc0] sm:$0xff]
    %v3606 = vld [vmem:[#allocation8 + $0xc8] sm:$0xff]
    %v3607 = vld [vmem:[#allocation8 + $0xd0] sm:$0xff]
    %v3608 = vld [vmem:[#allocation8 + $0xd8] sm:$0xff]
    %v3609 = vld [vmem:[#allocation8 + $0xe0] sm:$0xff]
    %v3610 = vld [vmem:[#allocation8 + $0xe8] sm:$0xff]
    %v3611 = vld [vmem:[#allocation8 + $0xf0] sm:$0xff]
    %v3612 = vld [vmem:[#allocation8 + $0xf8] sm:$0xff]
    %v3613 = vld [vmem:[#allocation8 + $0x100] sm:$0xff]
    %v3614 = vld [vmem:[#allocation8 + $0x108] sm:$0xff]
    %v3615 = vld [vmem:[#allocation8 + $0x110] sm:$0xff]
    %v3616 = vld [vmem:[#allocation8 + $0x118] sm:$0xff]
    %v3617 = vld [vmem:[#allocation8 + $0x120] sm:$0xff]
    %v3618 = vld [vmem:[#allocation8 + $0x128] sm:$0xff]
    %v3619 = vld [vmem:[#allocation8 + $0x130] sm:$0xff]
    %v3620 = vld [vmem:[#allocation8 + $0x138] sm:$0xff]
    %v3621 = vld [vmem:[#allocation8 + $0x140] sm:$0xff]
    %v3622 = vld [vmem:[#allocation8 + $0x148] sm:$0xff]
    %v3623 = vld [vmem:[#allocation8 + $0x150] sm:$0xff]
    %v3624 = vld [vmem:[#allocation8 + $0x158] sm:$0xff]
    %v3625 = vld [vmem:[#allocation8 + $0x160] sm:$0xff]
    %v3626 = vld [vmem:[#allocation8 + $0x168] sm:$0xff]
    %v3627 = vld [vmem:[#allocation8 + $0x170] sm:$0xff]
    %v3628 = vld [vmem:[#allocation8 + $0x178] sm:$0xff]
    %v3629 = vld [vmem:[#allocation8 + $0x180] sm:$0xff]
    %v3630 = vld [vmem:[#allocation8 + $0x188] sm:$0xff]
    %v3631 = vld [vmem:[#allocation8 + $0x190] sm:$0xff]
    %v3632 = vld [vmem:[#allocation8 + $0x198] sm:$0xff]
    %v3633 = vld [vmem:[#allocation8 + $0x1a0] sm:$0xff]
    %v3634 = vld [vmem:[#allocation8 + $0x1a8] sm:$0xff]
    %v3635 = vld [vmem:[#allocation8 + $0x1b0] sm:$0xff]
    %v3636 = vld [vmem:[#allocation8 + $0x1b8] sm:$0xff]
    %v3637 = vld [vmem:[#allocation8 + $0x1c0] sm:$0xff]
    %v3638 = vld [vmem:[#allocation8 + $0x1c8] sm:$0xff]
    %v3639 = vld [vmem:[#allocation8 + $0x1d0] sm:$0xff]
    %v3640 = vld [vmem:[#allocation8 + $0x1d8] sm:$0xff]
    %v3641 = vld [vmem:[#allocation8 + $0x1e0] sm:$0xff]
    %v3642 = vld [vmem:[#allocation8 + $0x1e8] sm:$0xff]
    %v3643 = vld [vmem:[#allocation8 + $0x1f0] sm:$0xff]
    %v3644 = vld [vmem:[#allocation8 + $0x1f8] sm:$0xff]
    %v3645 = vld [vmem:[#allocation8 + $0x200] sm:$0xff]
    %v3646 = vld [vmem:[#allocation8 + $0x208] sm:$0xff]
    %v3647 = vld [vmem:[#allocation8 + $0x210] sm:$0xff]
    %v3648 = vld [vmem:[#allocation8 + $0x218] sm:$0xff]
    %v3649 = vld [vmem:[#allocation8 + $0x220] sm:$0xff]
    %v3650 = vld [vmem:[#allocation8 + $0x228] sm:$0xff]
    %v3651 = vld [vmem:[#allocation8 + $0x230] sm:$0xff]
    %v3652 = vld [vmem:[#allocation8 + $0x238] sm:$0xff]
    %v3653 = vld [vmem:[#allocation8 + $0x240] sm:$0xff]
    %v3654 = vld [vmem:[#allocation8 + $0x248] sm:$0xff]
    %v3655 = vld [vmem:[#allocation8 + $0x250] sm:$0xff]
    %v3656 = vld [vmem:[#allocation8 + $0x258] sm:$0xff]
    %v3657 = vld [vmem:[#allocation8 + $0x260] sm:$0xff]
    %v3658 = vld [vmem:[#allocation8 + $0x268] sm:$0xff]
    %v3659 = vld [vmem:[#allocation8 + $0x270] sm:$0xff]
    %v3660 = vld [vmem:[#allocation8 + $0x278] sm:$0xff]
    %v3661 = vld [vmem:[#allocation8 + $0x280] sm:$0xff]
    %v3662 = vld [vmem:[#allocation8 + $0x288] sm:$0xff]
    %v3663 = vld [vmem:[#allocation8 + $0x290] sm:$0xff]
    %v3664 = vld [vmem:[#allocation8 + $0x298] sm:$0xff]
    %v3665 = vld [vmem:[#allocation8 + $0x2a0] sm:$0xff]
    %v3666 = vld [vmem:[#allocation8 + $0x2a8] sm:$0xff]
    %v3667 = vld [vmem:[#allocation8 + $0x2b0] sm:$0xff]
    %v3668 = vld [vmem:[#allocation8 + $0x2b8] sm:$0xff]
    %v3669 = vld [vmem:[#allocation8 + $0x2c0] sm:$0xff]
    %v3670 = vld [vmem:[#allocation8 + $0x2c8] sm:$0xff]
    %v3671 = vld [vmem:[#allocation8 + $0x2d0] sm:$0xff]
    %v3672 = vld [vmem:[#allocation8 + $0x2d8] sm:$0xff]
    %v3673 = vld [vmem:[#allocation8 + $0x2e0] sm:$0xff]
    %v3674 = vld [vmem:[#allocation8 + $0x2e8] sm:$0xff]
    %v3675 = vld [vmem:[#allocation8 + $0x2f0] sm:$0xff]
    %v3676 = vld [vmem:[#allocation8 + $0x2f8] sm:$0xff]
    %v3677 = vld [vmem:[#allocation8 + $0x300] sm:$0xff]
    %v3678 = vld [vmem:[#allocation8 + $0x308] sm:$0xff]
    %v3679 = vld [vmem:[#allocation8 + $0x310] sm:$0xff]
    %v3680 = vld [vmem:[#allocation8 + $0x318] sm:$0xff]
    %v3681 = vld [vmem:[#allocation8 + $0x320] sm:$0xff]
    %v3682 = vld [vmem:[#allocation8 + $0x328] sm:$0xff]
    %v3683 = vld [vmem:[#allocation8 + $0x330] sm:$0xff]
    %v3684 = vld [vmem:[#allocation8 + $0x338] sm:$0xff]
    %v3685 = vld [vmem:[#allocation8 + $0x340] sm:$0xff]
    %v3686 = vld [vmem:[#allocation8 + $0x348] sm:$0xff]
    %v3687 = vld [vmem:[#allocation8 + $0x350] sm:$0xff]
    %v3688 = vld [vmem:[#allocation8 + $0x358] sm:$0xff]
    %v3689 = vld [vmem:[#allocation8 + $0x360] sm:$0xff]
    %v3690 = vld [vmem:[#allocation8 + $0x368] sm:$0xff]
    %v3691 = vld [vmem:[#allocation8 + $0x370] sm:$0xff]
    %v3692 = vld [vmem:[#allocation8 + $0x378] sm:$0xff]
    %v3693 = vld [vmem:[#allocation8 + $0x380] sm:$0xff]
    %v3694 = vld [vmem:[#allocation8 + $0x388] sm:$0xff]
    %v3695 = vld [vmem:[#allocation8 + $0x390] sm:$0xff]
    %v3696 = vld [vmem:[#allocation8 + $0x398] sm:$0xff]
    %v3697 = vld [vmem:[#allocation8 + $0x3a0] sm:$0xff]
    %v3698 = vld [vmem:[#allocation8 + $0x3a8] sm:$0xff]
    %v3699 = vld [vmem:[#allocation8 + $0x3b0] sm:$0xff]
    %v3700 = vld [vmem:[#allocation8 + $0x3b8] sm:$0xff]
    %v3701 = vld [vmem:[#allocation8 + $0x3c0] sm:$0xff]
    %v3702 = vld [vmem:[#allocation8 + $0x3c8] sm:$0xff]
    %v3703 = vld [vmem:[#allocation8 + $0x3d0] sm:$0xff]
    %v3704 = vld [vmem:[#allocation8 + $0x3d8] sm:$0xff]
    %v3705 = vld [vmem:[#allocation8 + $0x3e0] sm:$0xff]
    %v3706 = vld [vmem:[#allocation8 + $0x3e8] sm:$0xff]
    %v3707 = vld [vmem:[#allocation8 + $0x3f0] sm:$0xff]
    %v3708 = vld [vmem:[#allocation8 + $0x3f8] sm:$0xff]
    %v3709 = vld [vmem:[#allocation8 + $0x400] sm:$0xff]
    %v3710 = vld [vmem:[#allocation8 + $0x408] sm:$0xff]
    %v3711 = vld [vmem:[#allocation8 + $0x410] sm:$0xff]
    %v3712 = vld [vmem:[#allocation8 + $0x418] sm:$0xff]
    %v3713 = vld [vmem:[#allocation8 + $0x420] sm:$0xff]
    %v3714 = vld [vmem:[#allocation8 + $0x428] sm:$0xff]
    %v3715 = vld [vmem:[#allocation8 + $0x430] sm:$0xff]
    %v3716 = vld [vmem:[#allocation8 + $0x438] sm:$0xff]
    %v3717 = vld [vmem:[#allocation8 + $0x440] sm:$0xff]
    %v3718 = vld [vmem:[#allocation8 + $0x448] sm:$0xff]
    %v3719 = vld [vmem:[#allocation8 + $0x450] sm:$0xff]
    %v3720 = vld [vmem:[#allocation8 + $0x458] sm:$0xff]
    %v3721 = vld [vmem:[#allocation8 + $0x460] sm:$0xff]
    %v3722 = vld [vmem:[#allocation8 + $0x468] sm:$0xff]
    %v3723 = vld [vmem:[#allocation8 + $0x470] sm:$0xff]
    %v3724 = vld [vmem:[#allocation8 + $0x478] sm:$0xff]
    %v3725 = vld [vmem:[#allocation8 + $0x480] sm:$0xff]
    %v3726 = vld [vmem:[#allocation8 + $0x488] sm:$0xff]
    %v3727 = vld [vmem:[#allocation8 + $0x490] sm:$0xff]
    %v3728 = vld [vmem:[#allocation8 + $0x498] sm:$0xff]
    %v3729 = vld [vmem:[#allocation8 + $0x4a0] sm:$0xff]
    %v3730 = vld [vmem:[#allocation8 + $0x4a8] sm:$0xff]
    %v3731 = vld [vmem:[#allocation8 + $0x4b0] sm:$0xff]
    %v3732 = vld [vmem:[#allocation8 + $0x4b8] sm:$0xff]
    %v3733 = vld [vmem:[#allocation8 + $0x4c0] sm:$0xff]
    %v3734 = vld [vmem:[#allocation8 + $0x4c8] sm:$0xff]
    %v3735 = vld [vmem:[#allocation8 + $0x4d0] sm:$0xff]
    %v3736 = vld [vmem:[#allocation8 + $0x4d8] sm:$0xff]
    %v3737 = vld [vmem:[#allocation8 + $0x4e0] sm:$0xff]
    %v3738 = vld [vmem:[#allocation8 + $0x4e8] sm:$0xff]
    %v3739 = vld [vmem:[#allocation8 + $0x4f0] sm:$0xff]
    %v3740 = vld [vmem:[#allocation8 + $0x4f8] sm:$0xff]
    %v3741 = vld [vmem:[#allocation8 + $0x500] sm:$0xff]
    %v3742 = vld [vmem:[#allocation8 + $0x508] sm:$0xff]
    %v3743 = vld [vmem:[#allocation8 + $0x510] sm:$0xff]
    %v3744 = vld [vmem:[#allocation8 + $0x518] sm:$0xff]
    %v3745 = vld [vmem:[#allocation8 + $0x520] sm:$0xff]
    %v3746 = vld [vmem:[#allocation8 + $0x528] sm:$0xff]
    %v3747 = vld [vmem:[#allocation8 + $0x530] sm:$0xff]
    %v3748 = vld [vmem:[#allocation8 + $0x538] sm:$0xff]
    %v3749 = vld [vmem:[#allocation8 + $0x540] sm:$0xff]
    %v3750 = vld [vmem:[#allocation8 + $0x548] sm:$0xff]
    %v3751 = vld [vmem:[#allocation8 + $0x550] sm:$0xff]
    %v3752 = vld [vmem:[#allocation8 + $0x558] sm:$0xff]
    %v3753 = vld [vmem:[#allocation8 + $0x560] sm:$0xff]
    %v3754 = vld [vmem:[#allocation8 + $0x568] sm:$0xff]
    %v3755 = vld [vmem:[#allocation8 + $0x570] sm:$0xff]
    %v3756 = vld [vmem:[#allocation8 + $0x578] sm:$0xff]
    %v3757 = vld [vmem:[#allocation8 + $0x580] sm:$0xff]
    %v3758 = vld [vmem:[#allocation8 + $0x588] sm:$0xff]
    %v3759 = vld [vmem:[#allocation8 + $0x590] sm:$0xff]
    %v3760 = vld [vmem:[#allocation8 + $0x598] sm:$0xff]
    %v3761 = vld [vmem:[#allocation8 + $0x5a0] sm:$0xff]
    %v3762 = vld [vmem:[#allocation8 + $0x5a8] sm:$0xff]
    %v3763 = vld [vmem:[#allocation8 + $0x5b0] sm:$0xff]
    %v3764 = vld [vmem:[#allocation8 + $0x5b8] sm:$0xff]
    %v3765 = vld [vmem:[#allocation8 + $0x5c0] sm:$0xff]
    %v3766 = vld [vmem:[#allocation8 + $0x5c8] sm:$0xff]
    %v3767 = vld [vmem:[#allocation8 + $0x5d0] sm:$0xff]
    %v3768 = vld [vmem:[#allocation8 + $0x5d8] sm:$0xff]
    %v3769 = vld [vmem:[#allocation8 + $0x5e0] sm:$0xff]
    %v3770 = vld [vmem:[#allocation8 + $0x5e8] sm:$0xff]
    %v3771 = vld [vmem:[#allocation8 + $0x5f0] sm:$0xff]
    %v3772 = vld [vmem:[#allocation8 + $0x5f8] sm:$0xff]
    %v3773 = vld [vmem:[#allocation8 + $0x600] sm:$0xff]
    %v3774 = vld [vmem:[#allocation8 + $0x608] sm:$0xff]
    %v3775 = vld [vmem:[#allocation8 + $0x610] sm:$0xff]
    %v3776 = vld [vmem:[#allocation8 + $0x618] sm:$0xff]
    %v3777 = vld [vmem:[#allocation8 + $0x620] sm:$0xff]
    %v3778 = vld [vmem:[#allocation8 + $0x628] sm:$0xff]
    %v3779 = vld [vmem:[#allocation8 + $0x630] sm:$0xff]
    %v3780 = vld [vmem:[#allocation8 + $0x638] sm:$0xff]
    %v3781 = vld [vmem:[#allocation8 + $0x640] sm:$0xff]
    %v3782 = vld [vmem:[#allocation8 + $0x648] sm:$0xff]
    %v3783 = vld [vmem:[#allocation8 + $0x650] sm:$0xff]
    %v3784 = vld [vmem:[#allocation8 + $0x658] sm:$0xff]
    %v3785 = vld [vmem:[#allocation8 + $0x660] sm:$0xff]
    %v3786 = vld [vmem:[#allocation8 + $0x668] sm:$0xff]
    %v3787 = vld [vmem:[#allocation8 + $0x670] sm:$0xff]
    %v3788 = vld [vmem:[#allocation8 + $0x678] sm:$0xff]
    %v3789 = vld [vmem:[#allocation8 + $0x680] sm:$0xff]
    %v3790 = vld [vmem:[#allocation8 + $0x688] sm:$0xff]
    %v3791 = vld [vmem:[#allocation8 + $0x690] sm:$0xff]
    %v3792 = vld [vmem:[#allocation8 + $0x698] sm:$0xff]
    %v3793 = vld [vmem:[#allocation8 + $0x6a0] sm:$0xff]
    %v3794 = vld [vmem:[#allocation8 + $0x6a8] sm:$0xff]
    %v3795 = vld [vmem:[#allocation8 + $0x6b0] sm:$0xff]
    %v3796 = vld [vmem:[#allocation8 + $0x6b8] sm:$0xff]
    %v3797 = vld [vmem:[#allocation8 + $0x6c0] sm:$0xff]
    %v3798 = vld [vmem:[#allocation8 + $0x6c8] sm:$0xff]
    %v3799 = vld [vmem:[#allocation8 + $0x6d0] sm:$0xff]
    %v3800 = vld [vmem:[#allocation8 + $0x6d8] sm:$0xff]
    %v3801 = vld [vmem:[#allocation8 + $0x6e0] sm:$0xff]
    %v3802 = vld [vmem:[#allocation8 + $0x6e8] sm:$0xff]
    %v3803 = vld [vmem:[#allocation8 + $0x6f0] sm:$0xff]
    %v3804 = vld [vmem:[#allocation8 + $0x6f8] sm:$0xff]
    %v3805 = vld [vmem:[#allocation8 + $0x700] sm:$0xff]
    %v3806 = vld [vmem:[#allocation8 + $0x708] sm:$0xff]
    %v3807 = vld [vmem:[#allocation8 + $0x710] sm:$0xff]
    %v3808 = vld [vmem:[#allocation8 + $0x718] sm:$0xff]
    %v3809 = vld [vmem:[#allocation8 + $0x720] sm:$0xff]
    %v3810 = vld [vmem:[#allocation8 + $0x728] sm:$0xff]
    %v3811 = vld [vmem:[#allocation8 + $0x730] sm:$0xff]
    %v3812 = vld [vmem:[#allocation8 + $0x738] sm:$0xff]
    %v3813 = vld [vmem:[#allocation8 + $0x740] sm:$0xff]
    %v3814 = vld [vmem:[#allocation8 + $0x748] sm:$0xff]
    %v3815 = vld [vmem:[#allocation8 + $0x750] sm:$0xff]
    %v3816 = vld [vmem:[#allocation8 + $0x758] sm:$0xff]
    %v3817 = vld [vmem:[#allocation8 + $0x760] sm:$0xff]
    %v3818 = vld [vmem:[#allocation8 + $0x768] sm:$0xff]
    %v3819 = vld [vmem:[#allocation8 + $0x770] sm:$0xff]
    %v3820 = vld [vmem:[#allocation8 + $0x778] sm:$0xff]
    %v3821 = vld [vmem:[#allocation8 + $0x780] sm:$0xff]
    %v3822 = vld [vmem:[#allocation8 + $0x788] sm:$0xff]
    %v3823 = vld [vmem:[#allocation8 + $0x790] sm:$0xff]
    %v3824 = vld [vmem:[#allocation8 + $0x798] sm:$0xff]
    %v3825 = vld [vmem:[#allocation8 + $0x7a0] sm:$0xff]
    %v3826 = vld [vmem:[#allocation8 + $0x7a8] sm:$0xff]
    %v3827 = vld [vmem:[#allocation8 + $0x7b0] sm:$0xff]
    %v3828 = vld [vmem:[#allocation8 + $0x7b8] sm:$0xff]
    %v3829 = vld [vmem:[#allocation8 + $0x7c0] sm:$0xff]
    %v3830 = vld [vmem:[#allocation8 + $0x7c8] sm:$0xff]
    %v3831 = vld [vmem:[#allocation8 + $0x7d0] sm:$0xff]
    %v3832 = vld [vmem:[#allocation8 + $0x7d8] sm:$0xff]
    %v3833 = vld [vmem:[#allocation8 + $0x7e0] sm:$0xff]
    %v3834 = vld [vmem:[#allocation8 + $0x7e8] sm:$0xff]
    %v3835 = vld [vmem:[#allocation8 + $0x7f0] sm:$0xff]
    %v3836 = vld [vmem:[#allocation8 + $0x7f8] sm:$0xff]
    %v3837 = vld [vmem:[#allocation10] sm:$0xf]
    %v3839 = vlaneseq
    %v3840 = vshrl.u32 %v3839, 7
    %v3841 = vsub.s32 0, %v3840
    %v3842 = vrot.slane %v3837, %v3841
    %v3843 = vlaneseq
    %v3844 = vshrl.u32 %v3843, 7
    %v3845 = vsub.s32 1, %v3844
    %v3846 = vrot.slane %v3837, %v3845
    %v3847 = vlaneseq
    %v3848 = vshrl.u32 %v3847, 7
    %v3849 = vsub.s32 2, %v3848
    %v3850 = vrot.slane %v3837, %v3849
    %v3851 = vlaneseq
    %v3852 = vshrl.u32 %v3851, 7
    %v3853 = vsub.s32 3, %v3852
    %v3854 = vrot.slane %v3837, %v3853
    %v4115 = vunpack.c.l.b16 %v3581
    %v4116 = vunpack.c.h.b16 %v3581
    %v4117 = vunpack.c.l.b16 %v3582
    %v4118 = vunpack.c.h.b16 %v3582
    %v4119 = vunpack.c.l.b16 %v3583
    %v4120 = vunpack.c.h.b16 %v3583
    %v4121 = vunpack.c.l.b16 %v3584
    %v4122 = vunpack.c.h.b16 %v3584
    %v4123 = vunpack.c.l.b16 %v3585
    %v4124 = vunpack.c.h.b16 %v3585
    %v4125 = vunpack.c.l.b16 %v3586
    %v4126 = vunpack.c.h.b16 %v3586
    %v4127 = vunpack.c.l.b16 %v3587
    %v4128 = vunpack.c.h.b16 %v3587
    %v4129 = vunpack.c.l.b16 %v3588
    %v4130 = vunpack.c.h.b16 %v3588
    %v4131 = vunpack.c.l.b16 %v3589
    %v4132 = vunpack.c.h.b16 %v3589
    %v4133 = vunpack.c.l.b16 %v3590
    %v4134 = vunpack.c.h.b16 %v3590
    %v4135 = vunpack.c.l.b16 %v3591
    %v4136 = vunpack.c.h.b16 %v3591
    %v4137 = vunpack.c.l.b16 %v3592
    %v4138 = vunpack.c.h.b16 %v3592
    %v4139 = vunpack.c.l.b16 %v3593
    %v4140 = vunpack.c.h.b16 %v3593
    %v4141 = vunpack.c.l.b16 %v3594
    %v4142 = vunpack.c.h.b16 %v3594
    %v4143 = vunpack.c.l.b16 %v3595
    %v4144 = vunpack.c.h.b16 %v3595
    %v4145 = vunpack.c.l.b16 %v3596
    %v4146 = vunpack.c.h.b16 %v3596
    %v4147 = vunpack.c.l.b16 %v3597
    %v4148 = vunpack.c.h.b16 %v3597
    %v4149 = vunpack.c.l.b16 %v3598
    %v4150 = vunpack.c.h.b16 %v3598
    %v4151 = vunpack.c.l.b16 %v3599
    %v4152 = vunpack.c.h.b16 %v3599
    %v4153 = vunpack.c.l.b16 %v3600
    %v4154 = vunpack.c.h.b16 %v3600
    %v4155 = vunpack.c.l.b16 %v3601
    %v4156 = vunpack.c.h.b16 %v3601
    %v4157 = vunpack.c.l.b16 %v3602
    %v4158 = vunpack.c.h.b16 %v3602
    %v4159 = vunpack.c.l.b16 %v3603
    %v4160 = vunpack.c.h.b16 %v3603
    %v4161 = vunpack.c.l.b16 %v3604
    %v4162 = vunpack.c.h.b16 %v3604
    %v4163 = vunpack.c.l.b16 %v3605
    %v4164 = vunpack.c.h.b16 %v3605
    %v4165 = vunpack.c.l.b16 %v3606
    %v4166 = vunpack.c.h.b16 %v3606
    %v4167 = vunpack.c.l.b16 %v3607
    %v4168 = vunpack.c.h.b16 %v3607
    %v4169 = vunpack.c.l.b16 %v3608
    %v4170 = vunpack.c.h.b16 %v3608
    %v4171 = vunpack.c.l.b16 %v3609
    %v4172 = vunpack.c.h.b16 %v3609
    %v4173 = vunpack.c.l.b16 %v3610
    %v4174 = vunpack.c.h.b16 %v3610
    %v4175 = vunpack.c.l.b16 %v3611
    %v4176 = vunpack.c.h.b16 %v3611
    %v4177 = vunpack.c.l.b16 %v3612
    %v4178 = vunpack.c.h.b16 %v3612
    %v4179 = vunpack.c.l.b16 %v3613
    %v4180 = vunpack.c.h.b16 %v3613
    %v4181 = vunpack.c.l.b16 %v3614
    %v4182 = vunpack.c.h.b16 %v3614
    %v4183 = vunpack.c.l.b16 %v3615
    %v4184 = vunpack.c.h.b16 %v3615
    %v4185 = vunpack.c.l.b16 %v3616
    %v4186 = vunpack.c.h.b16 %v3616
    %v4187 = vunpack.c.l.b16 %v3617
    %v4188 = vunpack.c.h.b16 %v3617
    %v4189 = vunpack.c.l.b16 %v3618
    %v4190 = vunpack.c.h.b16 %v3618
    %v4191 = vunpack.c.l.b16 %v3619
    %v4192 = vunpack.c.h.b16 %v3619
    %v4193 = vunpack.c.l.b16 %v3620
    %v4194 = vunpack.c.h.b16 %v3620
    %v4195 = vunpack.c.l.b16 %v3621
    %v4196 = vunpack.c.h.b16 %v3621
    %v4197 = vunpack.c.l.b16 %v3622
    %v4198 = vunpack.c.h.b16 %v3622
    %v4199 = vunpack.c.l.b16 %v3623
    %v4200 = vunpack.c.h.b16 %v3623
    %v4201 = vunpack.c.l.b16 %v3624
    %v4202 = vunpack.c.h.b16 %v3624
    %v4203 = vunpack.c.l.b16 %v3625
    %v4204 = vunpack.c.h.b16 %v3625
    %v4205 = vunpack.c.l.b16 %v3626
    %v4206 = vunpack.c.h.b16 %v3626
    %v4207 = vunpack.c.l.b16 %v3627
    %v4208 = vunpack.c.h.b16 %v3627
    %v4209 = vunpack.c.l.b16 %v3628
    %v4210 = vunpack.c.h.b16 %v3628
    %v4211 = vunpack.c.l.b16 %v3629
    %v4212 = vunpack.c.h.b16 %v3629
    %v4213 = vunpack.c.l.b16 %v3630
    %v4214 = vunpack.c.h.b16 %v3630
    %v4215 = vunpack.c.l.b16 %v3631
    %v4216 = vunpack.c.h.b16 %v3631
    %v4217 = vunpack.c.l.b16 %v3632
    %v4218 = vunpack.c.h.b16 %v3632
    %v4219 = vunpack.c.l.b16 %v3633
    %v4220 = vunpack.c.h.b16 %v3633
    %v4221 = vunpack.c.l.b16 %v3634
    %v4222 = vunpack.c.h.b16 %v3634
    %v4223 = vunpack.c.l.b16 %v3635
    %v4224 = vunpack.c.h.b16 %v3635
    %v4225 = vunpack.c.l.b16 %v3636
    %v4226 = vunpack.c.h.b16 %v3636
    %v4227 = vunpack.c.l.b16 %v3637
    %v4228 = vunpack.c.h.b16 %v3637
    %v4229 = vunpack.c.l.b16 %v3638
    %v4230 = vunpack.c.h.b16 %v3638
    %v4231 = vunpack.c.l.b16 %v3639
    %v4232 = vunpack.c.h.b16 %v3639
    %v4233 = vunpack.c.l.b16 %v3640
    %v4234 = vunpack.c.h.b16 %v3640
    %v4235 = vunpack.c.l.b16 %v3641
    %v4236 = vunpack.c.h.b16 %v3641
    %v4237 = vunpack.c.l.b16 %v3642
    %v4238 = vunpack.c.h.b16 %v3642
    %v4239 = vunpack.c.l.b16 %v3643
    %v4240 = vunpack.c.h.b16 %v3643
    %v4241 = vunpack.c.l.b16 %v3644
    %v4242 = vunpack.c.h.b16 %v3644
    %v4243 = vunpack.c.l.b16 %v3645
    %v4244 = vunpack.c.h.b16 %v3645
    %v4245 = vunpack.c.l.b16 %v3646
    %v4246 = vunpack.c.h.b16 %v3646
    %v4247 = vunpack.c.l.b16 %v3647
    %v4248 = vunpack.c.h.b16 %v3647
    %v4249 = vunpack.c.l.b16 %v3648
    %v4250 = vunpack.c.h.b16 %v3648
    %v4251 = vunpack.c.l.b16 %v3649
    %v4252 = vunpack.c.h.b16 %v3649
    %v4253 = vunpack.c.l.b16 %v3650
    %v4254 = vunpack.c.h.b16 %v3650
    %v4255 = vunpack.c.l.b16 %v3651
    %v4256 = vunpack.c.h.b16 %v3651
    %v4257 = vunpack.c.l.b16 %v3652
    %v4258 = vunpack.c.h.b16 %v3652
    %v4259 = vunpack.c.l.b16 %v3653
    %v4260 = vunpack.c.h.b16 %v3653
    %v4261 = vunpack.c.l.b16 %v3654
    %v4262 = vunpack.c.h.b16 %v3654
    %v4263 = vunpack.c.l.b16 %v3655
    %v4264 = vunpack.c.h.b16 %v3655
    %v4265 = vunpack.c.l.b16 %v3656
    %v4266 = vunpack.c.h.b16 %v3656
    %v4267 = vunpack.c.l.b16 %v3657
    %v4268 = vunpack.c.h.b16 %v3657
    %v4269 = vunpack.c.l.b16 %v3658
    %v4270 = vunpack.c.h.b16 %v3658
    %v4271 = vunpack.c.l.b16 %v3659
    %v4272 = vunpack.c.h.b16 %v3659
    %v4273 = vunpack.c.l.b16 %v3660
    %v4274 = vunpack.c.h.b16 %v3660
    %v4275 = vunpack.c.l.b16 %v3661
    %v4276 = vunpack.c.h.b16 %v3661
    %v4277 = vunpack.c.l.b16 %v3662
    %v4278 = vunpack.c.h.b16 %v3662
    %v4279 = vunpack.c.l.b16 %v3663
    %v4280 = vunpack.c.h.b16 %v3663
    %v4281 = vunpack.c.l.b16 %v3664
    %v4282 = vunpack.c.h.b16 %v3664
    %v4283 = vunpack.c.l.b16 %v3665
    %v4284 = vunpack.c.h.b16 %v3665
    %v4285 = vunpack.c.l.b16 %v3666
    %v4286 = vunpack.c.h.b16 %v3666
    %v4287 = vunpack.c.l.b16 %v3667
    %v4288 = vunpack.c.h.b16 %v3667
    %v4289 = vunpack.c.l.b16 %v3668
    %v4290 = vunpack.c.h.b16 %v3668
    %v4291 = vunpack.c.l.b16 %v3669
    %v4292 = vunpack.c.h.b16 %v3669
    %v4293 = vunpack.c.l.b16 %v3670
    %v4294 = vunpack.c.h.b16 %v3670
    %v4295 = vunpack.c.l.b16 %v3671
    %v4296 = vunpack.c.h.b16 %v3671
    %v4297 = vunpack.c.l.b16 %v3672
    %v4298 = vunpack.c.h.b16 %v3672
    %v4299 = vunpack.c.l.b16 %v3673
    %v4300 = vunpack.c.h.b16 %v3673
    %v4301 = vunpack.c.l.b16 %v3674
    %v4302 = vunpack.c.h.b16 %v3674
    %v4303 = vunpack.c.l.b16 %v3675
    %v4304 = vunpack.c.h.b16 %v3675
    %v4305 = vunpack.c.l.b16 %v3676
    %v4306 = vunpack.c.h.b16 %v3676
    %v4307 = vunpack.c.l.b16 %v3677
    %v4308 = vunpack.c.h.b16 %v3677
    %v4309 = vunpack.c.l.b16 %v3678
    %v4310 = vunpack.c.h.b16 %v3678
    %v4311 = vunpack.c.l.b16 %v3679
    %v4312 = vunpack.c.h.b16 %v3679
    %v4313 = vunpack.c.l.b16 %v3680
    %v4314 = vunpack.c.h.b16 %v3680
    %v4315 = vunpack.c.l.b16 %v3681
    %v4316 = vunpack.c.h.b16 %v3681
    %v4317 = vunpack.c.l.b16 %v3682
    %v4318 = vunpack.c.h.b16 %v3682
    %v4319 = vunpack.c.l.b16 %v3683
    %v4320 = vunpack.c.h.b16 %v3683
    %v4321 = vunpack.c.l.b16 %v3684
    %v4322 = vunpack.c.h.b16 %v3684
    %v4323 = vunpack.c.l.b16 %v3685
    %v4324 = vunpack.c.h.b16 %v3685
    %v4325 = vunpack.c.l.b16 %v3686
    %v4326 = vunpack.c.h.b16 %v3686
    %v4327 = vunpack.c.l.b16 %v3687
    %v4328 = vunpack.c.h.b16 %v3687
    %v4329 = vunpack.c.l.b16 %v3688
    %v4330 = vunpack.c.h.b16 %v3688
    %v4331 = vunpack.c.l.b16 %v3689
    %v4332 = vunpack.c.h.b16 %v3689
    %v4333 = vunpack.c.l.b16 %v3690
    %v4334 = vunpack.c.h.b16 %v3690
    %v4335 = vunpack.c.l.b16 %v3691
    %v4336 = vunpack.c.h.b16 %v3691
    %v4337 = vunpack.c.l.b16 %v3692
    %v4338 = vunpack.c.h.b16 %v3692
    %v4339 = vunpack.c.l.b16 %v3693
    %v4340 = vunpack.c.h.b16 %v3693
    %v4341 = vunpack.c.l.b16 %v3694
    %v4342 = vunpack.c.h.b16 %v3694
    %v4343 = vunpack.c.l.b16 %v3695
    %v4344 = vunpack.c.h.b16 %v3695
    %v4345 = vunpack.c.l.b16 %v3696
    %v4346 = vunpack.c.h.b16 %v3696
    %v4347 = vunpack.c.l.b16 %v3697
    %v4348 = vunpack.c.h.b16 %v3697
    %v4349 = vunpack.c.l.b16 %v3698
    %v4350 = vunpack.c.h.b16 %v3698
    %v4351 = vunpack.c.l.b16 %v3699
    %v4352 = vunpack.c.h.b16 %v3699
    %v4353 = vunpack.c.l.b16 %v3700
    %v4354 = vunpack.c.h.b16 %v3700
    %v4355 = vunpack.c.l.b16 %v3701
    %v4356 = vunpack.c.h.b16 %v3701
    %v4357 = vunpack.c.l.b16 %v3702
    %v4358 = vunpack.c.h.b16 %v3702
    %v4359 = vunpack.c.l.b16 %v3703
    %v4360 = vunpack.c.h.b16 %v3703
    %v4361 = vunpack.c.l.b16 %v3704
    %v4362 = vunpack.c.h.b16 %v3704
    %v4363 = vunpack.c.l.b16 %v3705
    %v4364 = vunpack.c.h.b16 %v3705
    %v4365 = vunpack.c.l.b16 %v3706
    %v4366 = vunpack.c.h.b16 %v3706
    %v4367 = vunpack.c.l.b16 %v3707
    %v4368 = vunpack.c.h.b16 %v3707
    %v4369 = vunpack.c.l.b16 %v3708
    %v4370 = vunpack.c.h.b16 %v3708
    %v4371 = vunpack.c.l.b16 %v3709
    %v4372 = vunpack.c.h.b16 %v3709
    %v4373 = vunpack.c.l.b16 %v3710
    %v4374 = vunpack.c.h.b16 %v3710
    %v4375 = vunpack.c.l.b16 %v3711
    %v4376 = vunpack.c.h.b16 %v3711
    %v4377 = vunpack.c.l.b16 %v3712
    %v4378 = vunpack.c.h.b16 %v3712
    %v4379 = vunpack.c.l.b16 %v3713
    %v4380 = vunpack.c.h.b16 %v3713
    %v4381 = vunpack.c.l.b16 %v3714
    %v4382 = vunpack.c.h.b16 %v3714
    %v4383 = vunpack.c.l.b16 %v3715
    %v4384 = vunpack.c.h.b16 %v3715
    %v4385 = vunpack.c.l.b16 %v3716
    %v4386 = vunpack.c.h.b16 %v3716
    %v4387 = vunpack.c.l.b16 %v3717
    %v4388 = vunpack.c.h.b16 %v3717
    %v4389 = vunpack.c.l.b16 %v3718
    %v4390 = vunpack.c.h.b16 %v3718
    %v4391 = vunpack.c.l.b16 %v3719
    %v4392 = vunpack.c.h.b16 %v3719
    %v4393 = vunpack.c.l.b16 %v3720
    %v4394 = vunpack.c.h.b16 %v3720
    %v4395 = vunpack.c.l.b16 %v3721
    %v4396 = vunpack.c.h.b16 %v3721
    %v4397 = vunpack.c.l.b16 %v3722
    %v4398 = vunpack.c.h.b16 %v3722
    %v4399 = vunpack.c.l.b16 %v3723
    %v4400 = vunpack.c.h.b16 %v3723
    %v4401 = vunpack.c.l.b16 %v3724
    %v4402 = vunpack.c.h.b16 %v3724
    %v4403 = vunpack.c.l.b16 %v3725
    %v4404 = vunpack.c.h.b16 %v3725
    %v4405 = vunpack.c.l.b16 %v3726
    %v4406 = vunpack.c.h.b16 %v3726
    %v4407 = vunpack.c.l.b16 %v3727
    %v4408 = vunpack.c.h.b16 %v3727
    %v4409 = vunpack.c.l.b16 %v3728
    %v4410 = vunpack.c.h.b16 %v3728
    %v4411 = vunpack.c.l.b16 %v3729
    %v4412 = vunpack.c.h.b16 %v3729
    %v4413 = vunpack.c.l.b16 %v3730
    %v4414 = vunpack.c.h.b16 %v3730
    %v4415 = vunpack.c.l.b16 %v3731
    %v4416 = vunpack.c.h.b16 %v3731
    %v4417 = vunpack.c.l.b16 %v3732
    %v4418 = vunpack.c.h.b16 %v3732
    %v4419 = vunpack.c.l.b16 %v3733
    %v4420 = vunpack.c.h.b16 %v3733
    %v4421 = vunpack.c.l.b16 %v3734
    %v4422 = vunpack.c.h.b16 %v3734
    %v4423 = vunpack.c.l.b16 %v3735
    %v4424 = vunpack.c.h.b16 %v3735
    %v4425 = vunpack.c.l.b16 %v3736
    %v4426 = vunpack.c.h.b16 %v3736
    %v4427 = vunpack.c.l.b16 %v3737
    %v4428 = vunpack.c.h.b16 %v3737
    %v4429 = vunpack.c.l.b16 %v3738
    %v4430 = vunpack.c.h.b16 %v3738
    %v4431 = vunpack.c.l.b16 %v3739
    %v4432 = vunpack.c.h.b16 %v3739
    %v4433 = vunpack.c.l.b16 %v3740
    %v4434 = vunpack.c.h.b16 %v3740
    %v4435 = vunpack.c.l.b16 %v3741
    %v4436 = vunpack.c.h.b16 %v3741
    %v4437 = vunpack.c.l.b16 %v3742
    %v4438 = vunpack.c.h.b16 %v3742
    %v4439 = vunpack.c.l.b16 %v3743
    %v4440 = vunpack.c.h.b16 %v3743
    %v4441 = vunpack.c.l.b16 %v3744
    %v4442 = vunpack.c.h.b16 %v3744
    %v4443 = vunpack.c.l.b16 %v3745
    %v4444 = vunpack.c.h.b16 %v3745
    %v4445 = vunpack.c.l.b16 %v3746
    %v4446 = vunpack.c.h.b16 %v3746
    %v4447 = vunpack.c.l.b16 %v3747
    %v4448 = vunpack.c.h.b16 %v3747
    %v4449 = vunpack.c.l.b16 %v3748
    %v4450 = vunpack.c.h.b16 %v3748
    %v4451 = vunpack.c.l.b16 %v3749
    %v4452 = vunpack.c.h.b16 %v3749
    %v4453 = vunpack.c.l.b16 %v3750
    %v4454 = vunpack.c.h.b16 %v3750
    %v4455 = vunpack.c.l.b16 %v3751
    %v4456 = vunpack.c.h.b16 %v3751
    %v4457 = vunpack.c.l.b16 %v3752
    %v4458 = vunpack.c.h.b16 %v3752
    %v4459 = vunpack.c.l.b16 %v3753
    %v4460 = vunpack.c.h.b16 %v3753
    %v4461 = vunpack.c.l.b16 %v3754
    %v4462 = vunpack.c.h.b16 %v3754
    %v4463 = vunpack.c.l.b16 %v3755
    %v4464 = vunpack.c.h.b16 %v3755
    %v4465 = vunpack.c.l.b16 %v3756
    %v4466 = vunpack.c.h.b16 %v3756
    %v4467 = vunpack.c.l.b16 %v3757
    %v4468 = vunpack.c.h.b16 %v3757
    %v4469 = vunpack.c.l.b16 %v3758
    %v4470 = vunpack.c.h.b16 %v3758
    %v4471 = vunpack.c.l.b16 %v3759
    %v4472 = vunpack.c.h.b16 %v3759
    %v4473 = vunpack.c.l.b16 %v3760
    %v4474 = vunpack.c.h.b16 %v3760
    %v4475 = vunpack.c.l.b16 %v3761
    %v4476 = vunpack.c.h.b16 %v3761
    %v4477 = vunpack.c.l.b16 %v3762
    %v4478 = vunpack.c.h.b16 %v3762
    %v4479 = vunpack.c.l.b16 %v3763
    %v4480 = vunpack.c.h.b16 %v3763
    %v4481 = vunpack.c.l.b16 %v3764
    %v4482 = vunpack.c.h.b16 %v3764
    %v4483 = vunpack.c.l.b16 %v3765
    %v4484 = vunpack.c.h.b16 %v3765
    %v4485 = vunpack.c.l.b16 %v3766
    %v4486 = vunpack.c.h.b16 %v3766
    %v4487 = vunpack.c.l.b16 %v3767
    %v4488 = vunpack.c.h.b16 %v3767
    %v4489 = vunpack.c.l.b16 %v3768
    %v4490 = vunpack.c.h.b16 %v3768
    %v4491 = vunpack.c.l.b16 %v3769
    %v4492 = vunpack.c.h.b16 %v3769
    %v4493 = vunpack.c.l.b16 %v3770
    %v4494 = vunpack.c.h.b16 %v3770
    %v4495 = vunpack.c.l.b16 %v3771
    %v4496 = vunpack.c.h.b16 %v3771
    %v4497 = vunpack.c.l.b16 %v3772
    %v4498 = vunpack.c.h.b16 %v3772
    %v4499 = vunpack.c.l.b16 %v3773
    %v4500 = vunpack.c.h.b16 %v3773
    %v4501 = vunpack.c.l.b16 %v3774
    %v4502 = vunpack.c.h.b16 %v3774
    %v4503 = vunpack.c.l.b16 %v3775
    %v4504 = vunpack.c.h.b16 %v3775
    %v4505 = vunpack.c.l.b16 %v3776
    %v4506 = vunpack.c.h.b16 %v3776
    %v4507 = vunpack.c.l.b16 %v3777
    %v4508 = vunpack.c.h.b16 %v3777
    %v4509 = vunpack.c.l.b16 %v3778
    %v4510 = vunpack.c.h.b16 %v3778
    %v4511 = vunpack.c.l.b16 %v3779
    %v4512 = vunpack.c.h.b16 %v3779
    %v4513 = vunpack.c.l.b16 %v3780
    %v4514 = vunpack.c.h.b16 %v3780
    %v4515 = vunpack.c.l.b16 %v3781
    %v4516 = vunpack.c.h.b16 %v3781
    %v4517 = vunpack.c.l.b16 %v3782
    %v4518 = vunpack.c.h.b16 %v3782
    %v4519 = vunpack.c.l.b16 %v3783
    %v4520 = vunpack.c.h.b16 %v3783
    %v4521 = vunpack.c.l.b16 %v3784
    %v4522 = vunpack.c.h.b16 %v3784
    %v4523 = vunpack.c.l.b16 %v3785
    %v4524 = vunpack.c.h.b16 %v3785
    %v4525 = vunpack.c.l.b16 %v3786
    %v4526 = vunpack.c.h.b16 %v3786
    %v4527 = vunpack.c.l.b16 %v3787
    %v4528 = vunpack.c.h.b16 %v3787
    %v4529 = vunpack.c.l.b16 %v3788
    %v4530 = vunpack.c.h.b16 %v3788
    %v4531 = vunpack.c.l.b16 %v3789
    %v4532 = vunpack.c.h.b16 %v3789
    %v4533 = vunpack.c.l.b16 %v3790
    %v4534 = vunpack.c.h.b16 %v3790
    %v4535 = vunpack.c.l.b16 %v3791
    %v4536 = vunpack.c.h.b16 %v3791
    %v4537 = vunpack.c.l.b16 %v3792
    %v4538 = vunpack.c.h.b16 %v3792
    %v4539 = vunpack.c.l.b16 %v3793
    %v4540 = vunpack.c.h.b16 %v3793
    %v4541 = vunpack.c.l.b16 %v3794
    %v4542 = vunpack.c.h.b16 %v3794
    %v4543 = vunpack.c.l.b16 %v3795
    %v4544 = vunpack.c.h.b16 %v3795
    %v4545 = vunpack.c.l.b16 %v3796
    %v4546 = vunpack.c.h.b16 %v3796
    %v4547 = vunpack.c.l.b16 %v3797
    %v4548 = vunpack.c.h.b16 %v3797
    %v4549 = vunpack.c.l.b16 %v3798
    %v4550 = vunpack.c.h.b16 %v3798
    %v4551 = vunpack.c.l.b16 %v3799
    %v4552 = vunpack.c.h.b16 %v3799
    %v4553 = vunpack.c.l.b16 %v3800
    %v4554 = vunpack.c.h.b16 %v3800
    %v4555 = vunpack.c.l.b16 %v3801
    %v4556 = vunpack.c.h.b16 %v3801
    %v4557 = vunpack.c.l.b16 %v3802
    %v4558 = vunpack.c.h.b16 %v3802
    %v4559 = vunpack.c.l.b16 %v3803
    %v4560 = vunpack.c.h.b16 %v3803
    %v4561 = vunpack.c.l.b16 %v3804
    %v4562 = vunpack.c.h.b16 %v3804
    %v4563 = vunpack.c.l.b16 %v3805
    %v4564 = vunpack.c.h.b16 %v3805
    %v4565 = vunpack.c.l.b16 %v3806
    %v4566 = vunpack.c.h.b16 %v3806
    %v4567 = vunpack.c.l.b16 %v3807
    %v4568 = vunpack.c.h.b16 %v3807
    %v4569 = vunpack.c.l.b16 %v3808
    %v4570 = vunpack.c.h.b16 %v3808
    %v4571 = vunpack.c.l.b16 %v3809
    %v4572 = vunpack.c.h.b16 %v3809
    %v4573 = vunpack.c.l.b16 %v3810
    %v4574 = vunpack.c.h.b16 %v3810
    %v4575 = vunpack.c.l.b16 %v3811
    %v4576 = vunpack.c.h.b16 %v3811
    %v4577 = vunpack.c.l.b16 %v3812
    %v4578 = vunpack.c.h.b16 %v3812
    %v4579 = vunpack.c.l.b16 %v3813
    %v4580 = vunpack.c.h.b16 %v3813
    %v4581 = vunpack.c.l.b16 %v3814
    %v4582 = vunpack.c.h.b16 %v3814
    %v4583 = vunpack.c.l.b16 %v3815
    %v4584 = vunpack.c.h.b16 %v3815
    %v4585 = vunpack.c.l.b16 %v3816
    %v4586 = vunpack.c.h.b16 %v3816
    %v4587 = vunpack.c.l.b16 %v3817
    %v4588 = vunpack.c.h.b16 %v3817
    %v4589 = vunpack.c.l.b16 %v3818
    %v4590 = vunpack.c.h.b16 %v3818
    %v4591 = vunpack.c.l.b16 %v3819
    %v4592 = vunpack.c.h.b16 %v3819
    %v4593 = vunpack.c.l.b16 %v3820
    %v4594 = vunpack.c.h.b16 %v3820
    %v4595 = vunpack.c.l.b16 %v3821
    %v4596 = vunpack.c.h.b16 %v3821
    %v4597 = vunpack.c.l.b16 %v3822
    %v4598 = vunpack.c.h.b16 %v3822
    %v4599 = vunpack.c.l.b16 %v3823
    %v4600 = vunpack.c.h.b16 %v3823
    %v4601 = vunpack.c.l.b16 %v3824
    %v4602 = vunpack.c.h.b16 %v3824
    %v4603 = vunpack.c.l.b16 %v3825
    %v4604 = vunpack.c.h.b16 %v3825
    %v4605 = vunpack.c.l.b16 %v3826
    %v4606 = vunpack.c.h.b16 %v3826
    %v4607 = vunpack.c.l.b16 %v3827
    %v4608 = vunpack.c.h.b16 %v3827
    %v4609 = vunpack.c.l.b16 %v3828
    %v4610 = vunpack.c.h.b16 %v3828
    %v4611 = vunpack.c.l.b16 %v3829
    %v4612 = vunpack.c.h.b16 %v3829
    %v4613 = vunpack.c.l.b16 %v3830
    %v4614 = vunpack.c.h.b16 %v3830
    %v4615 = vunpack.c.l.b16 %v3831
    %v4616 = vunpack.c.h.b16 %v3831
    %v4617 = vunpack.c.l.b16 %v3832
    %v4618 = vunpack.c.h.b16 %v3832
    %v4619 = vunpack.c.l.b16 %v3833
    %v4620 = vunpack.c.h.b16 %v3833
    %v4621 = vunpack.c.l.b16 %v3834
    %v4622 = vunpack.c.h.b16 %v3834
    %v4623 = vunpack.c.l.b16 %v3835
    %v4624 = vunpack.c.h.b16 %v3835
    %v4625 = vunpack.c.l.b16 %v3836
    %v4626 = vunpack.c.h.b16 %v3836
    %v4627 = vpack.c.b16 %v4119, %v4115
    %v4628 = vpack.c.b16 %v4120, %v4116
    %v4629 = vpack.c.b16 %v4121, %v4117
    %v4630 = vpack.c.b16 %v4122, %v4118
    %v4631 = vpack.c.b16 %v4127, %v4123
    %v4632 = vpack.c.b16 %v4128, %v4124
    %v4633 = vpack.c.b16 %v4129, %v4125
    %v4634 = vpack.c.b16 %v4130, %v4126
    %v4635 = vpack.c.b16 %v4135, %v4131
    %v4636 = vpack.c.b16 %v4136, %v4132
    %v4637 = vpack.c.b16 %v4137, %v4133
    %v4638 = vpack.c.b16 %v4138, %v4134
    %v4639 = vpack.c.b16 %v4143, %v4139
    %v4640 = vpack.c.b16 %v4144, %v4140
    %v4641 = vpack.c.b16 %v4145, %v4141
    %v4642 = vpack.c.b16 %v4146, %v4142
    %v4643 = vpack.c.b16 %v4151, %v4147
    %v4644 = vpack.c.b16 %v4152, %v4148
    %v4645 = vpack.c.b16 %v4153, %v4149
    %v4646 = vpack.c.b16 %v4154, %v4150
    %v4647 = vpack.c.b16 %v4159, %v4155
    %v4648 = vpack.c.b16 %v4160, %v4156
    %v4649 = vpack.c.b16 %v4161, %v4157
    %v4650 = vpack.c.b16 %v4162, %v4158
    %v4651 = vpack.c.b16 %v4167, %v4163
    %v4652 = vpack.c.b16 %v4168, %v4164
    %v4653 = vpack.c.b16 %v4169, %v4165
    %v4654 = vpack.c.b16 %v4170, %v4166
    %v4655 = vpack.c.b16 %v4175, %v4171
    %v4656 = vpack.c.b16 %v4176, %v4172
    %v4657 = vpack.c.b16 %v4177, %v4173
    %v4658 = vpack.c.b16 %v4178, %v4174
    %v4659 = vpack.c.b16 %v4183, %v4179
    %v4660 = vpack.c.b16 %v4184, %v4180
    %v4661 = vpack.c.b16 %v4185, %v4181
    %v4662 = vpack.c.b16 %v4186, %v4182
    %v4663 = vpack.c.b16 %v4191, %v4187
    %v4664 = vpack.c.b16 %v4192, %v4188
    %v4665 = vpack.c.b16 %v4193, %v4189
    %v4666 = vpack.c.b16 %v4194, %v4190
    %v4667 = vpack.c.b16 %v4199, %v4195
    %v4668 = vpack.c.b16 %v4200, %v4196
    %v4669 = vpack.c.b16 %v4201, %v4197
    %v4670 = vpack.c.b16 %v4202, %v4198
    %v4671 = vpack.c.b16 %v4207, %v4203
    %v4672 = vpack.c.b16 %v4208, %v4204
    %v4673 = vpack.c.b16 %v4209, %v4205
    %v4674 = vpack.c.b16 %v4210, %v4206
    %v4675 = vpack.c.b16 %v4215, %v4211
    %v4676 = vpack.c.b16 %v4216, %v4212
    %v4677 = vpack.c.b16 %v4217, %v4213
    %v4678 = vpack.c.b16 %v4218, %v4214
    %v4679 = vpack.c.b16 %v4223, %v4219
    %v4680 = vpack.c.b16 %v4224, %v4220
    %v4681 = vpack.c.b16 %v4225, %v4221
    %v4682 = vpack.c.b16 %v4226, %v4222
    %v4683 = vpack.c.b16 %v4231, %v4227
    %v4684 = vpack.c.b16 %v4232, %v4228
    %v4685 = vpack.c.b16 %v4233, %v4229
    %v4686 = vpack.c.b16 %v4234, %v4230
    %v4687 = vpack.c.b16 %v4239, %v4235
    %v4688 = vpack.c.b16 %v4240, %v4236
    %v4689 = vpack.c.b16 %v4241, %v4237
    %v4690 = vpack.c.b16 %v4242, %v4238
    %v4691 = vpack.c.b16 %v4247, %v4243
    %v4692 = vpack.c.b16 %v4248, %v4244
    %v4693 = vpack.c.b16 %v4249, %v4245
    %v4694 = vpack.c.b16 %v4250, %v4246
    %v4695 = vpack.c.b16 %v4255, %v4251
    %v4696 = vpack.c.b16 %v4256, %v4252
    %v4697 = vpack.c.b16 %v4257, %v4253
    %v4698 = vpack.c.b16 %v4258, %v4254
    %v4699 = vpack.c.b16 %v4263, %v4259
    %v4700 = vpack.c.b16 %v4264, %v4260
    %v4701 = vpack.c.b16 %v4265, %v4261
    %v4702 = vpack.c.b16 %v4266, %v4262
    %v4703 = vpack.c.b16 %v4271, %v4267
    %v4704 = vpack.c.b16 %v4272, %v4268
    %v4705 = vpack.c.b16 %v4273, %v4269
    %v4706 = vpack.c.b16 %v4274, %v4270
    %v4707 = vpack.c.b16 %v4279, %v4275
    %v4708 = vpack.c.b16 %v4280, %v4276
    %v4709 = vpack.c.b16 %v4281, %v4277
    %v4710 = vpack.c.b16 %v4282, %v4278
    %v4711 = vpack.c.b16 %v4287, %v4283
    %v4712 = vpack.c.b16 %v4288, %v4284
    %v4713 = vpack.c.b16 %v4289, %v4285
    %v4714 = vpack.c.b16 %v4290, %v4286
    %v4715 = vpack.c.b16 %v4295, %v4291
    %v4716 = vpack.c.b16 %v4296, %v4292
    %v4717 = vpack.c.b16 %v4297, %v4293
    %v4718 = vpack.c.b16 %v4298, %v4294
    %v4719 = vpack.c.b16 %v4303, %v4299
    %v4720 = vpack.c.b16 %v4304, %v4300
    %v4721 = vpack.c.b16 %v4305, %v4301
    %v4722 = vpack.c.b16 %v4306, %v4302
    %v4723 = vpack.c.b16 %v4311, %v4307
    %v4724 = vpack.c.b16 %v4312, %v4308
    %v4725 = vpack.c.b16 %v4313, %v4309
    %v4726 = vpack.c.b16 %v4314, %v4310
    %v4727 = vpack.c.b16 %v4319, %v4315
    %v4728 = vpack.c.b16 %v4320, %v4316
    %v4729 = vpack.c.b16 %v4321, %v4317
    %v4730 = vpack.c.b16 %v4322, %v4318
    %v4731 = vpack.c.b16 %v4327, %v4323
    %v4732 = vpack.c.b16 %v4328, %v4324
    %v4733 = vpack.c.b16 %v4329, %v4325
    %v4734 = vpack.c.b16 %v4330, %v4326
    %v4735 = vpack.c.b16 %v4335, %v4331
    %v4736 = vpack.c.b16 %v4336, %v4332
    %v4737 = vpack.c.b16 %v4337, %v4333
    %v4738 = vpack.c.b16 %v4338, %v4334
    %v4739 = vpack.c.b16 %v4343, %v4339
    %v4740 = vpack.c.b16 %v4344, %v4340
    %v4741 = vpack.c.b16 %v4345, %v4341
    %v4742 = vpack.c.b16 %v4346, %v4342
    %v4743 = vpack.c.b16 %v4351, %v4347
    %v4744 = vpack.c.b16 %v4352, %v4348
    %v4745 = vpack.c.b16 %v4353, %v4349
    %v4746 = vpack.c.b16 %v4354, %v4350
    %v4747 = vpack.c.b16 %v4359, %v4355
    %v4748 = vpack.c.b16 %v4360, %v4356
    %v4749 = vpack.c.b16 %v4361, %v4357
    %v4750 = vpack.c.b16 %v4362, %v4358
    %v4751 = vpack.c.b16 %v4367, %v4363
    %v4752 = vpack.c.b16 %v4368, %v4364
    %v4753 = vpack.c.b16 %v4369, %v4365
    %v4754 = vpack.c.b16 %v4370, %v4366
    %v4755 = vpack.c.b16 %v4375, %v4371
    %v4756 = vpack.c.b16 %v4376, %v4372
    %v4757 = vpack.c.b16 %v4377, %v4373
    %v4758 = vpack.c.b16 %v4378, %v4374
    %v4759 = vpack.c.b16 %v4383, %v4379
    %v4760 = vpack.c.b16 %v4384, %v4380
    %v4761 = vpack.c.b16 %v4385, %v4381
    %v4762 = vpack.c.b16 %v4386, %v4382
    %v4763 = vpack.c.b16 %v4391, %v4387
    %v4764 = vpack.c.b16 %v4392, %v4388
    %v4765 = vpack.c.b16 %v4393, %v4389
    %v4766 = vpack.c.b16 %v4394, %v4390
    %v4767 = vpack.c.b16 %v4399, %v4395
    %v4768 = vpack.c.b16 %v4400, %v4396
    %v4769 = vpack.c.b16 %v4401, %v4397
    %v4770 = vpack.c.b16 %v4402, %v4398
    %v4771 = vpack.c.b16 %v4407, %v4403
    %v4772 = vpack.c.b16 %v4408, %v4404
    %v4773 = vpack.c.b16 %v4409, %v4405
    %v4774 = vpack.c.b16 %v4410, %v4406
    %v4775 = vpack.c.b16 %v4415, %v4411
    %v4776 = vpack.c.b16 %v4416, %v4412
    %v4777 = vpack.c.b16 %v4417, %v4413
    %v4778 = vpack.c.b16 %v4418, %v4414
    %v4779 = vpack.c.b16 %v4423, %v4419
    %v4780 = vpack.c.b16 %v4424, %v4420
    %v4781 = vpack.c.b16 %v4425, %v4421
    %v4782 = vpack.c.b16 %v4426, %v4422
    %v4783 = vpack.c.b16 %v4431, %v4427
    %v4784 = vpack.c.b16 %v4432, %v4428
    %v4785 = vpack.c.b16 %v4433, %v4429
    %v4786 = vpack.c.b16 %v4434, %v4430
    %v4787 = vpack.c.b16 %v4439, %v4435
    %v4788 = vpack.c.b16 %v4440, %v4436
    %v4789 = vpack.c.b16 %v4441, %v4437
    %v4790 = vpack.c.b16 %v4442, %v4438
    %v4791 = vpack.c.b16 %v4447, %v4443
    %v4792 = vpack.c.b16 %v4448, %v4444
    %v4793 = vpack.c.b16 %v4449, %v4445
    %v4794 = vpack.c.b16 %v4450, %v4446
    %v4795 = vpack.c.b16 %v4455, %v4451
    %v4796 = vpack.c.b16 %v4456, %v4452
    %v4797 = vpack.c.b16 %v4457, %v4453
    %v4798 = vpack.c.b16 %v4458, %v4454
    %v4799 = vpack.c.b16 %v4463, %v4459
    %v4800 = vpack.c.b16 %v4464, %v4460
    %v4801 = vpack.c.b16 %v4465, %v4461
    %v4802 = vpack.c.b16 %v4466, %v4462
    %v4803 = vpack.c.b16 %v4471, %v4467
    %v4804 = vpack.c.b16 %v4472, %v4468
    %v4805 = vpack.c.b16 %v4473, %v4469
    %v4806 = vpack.c.b16 %v4474, %v4470
    %v4807 = vpack.c.b16 %v4479, %v4475
    %v4808 = vpack.c.b16 %v4480, %v4476
    %v4809 = vpack.c.b16 %v4481, %v4477
    %v4810 = vpack.c.b16 %v4482, %v4478
    %v4811 = vpack.c.b16 %v4487, %v4483
    %v4812 = vpack.c.b16 %v4488, %v4484
    %v4813 = vpack.c.b16 %v4489, %v4485
    %v4814 = vpack.c.b16 %v4490, %v4486
    %v4815 = vpack.c.b16 %v4495, %v4491
    %v4816 = vpack.c.b16 %v4496, %v4492
    %v4817 = vpack.c.b16 %v4497, %v4493
    %v4818 = vpack.c.b16 %v4498, %v4494
    %v4819 = vpack.c.b16 %v4503, %v4499
    %v4820 = vpack.c.b16 %v4504, %v4500
    %v4821 = vpack.c.b16 %v4505, %v4501
    %v4822 = vpack.c.b16 %v4506, %v4502
    %v4823 = vpack.c.b16 %v4511, %v4507
    %v4824 = vpack.c.b16 %v4512, %v4508
    %v4825 = vpack.c.b16 %v4513, %v4509
    %v4826 = vpack.c.b16 %v4514, %v4510
    %v4827 = vpack.c.b16 %v4519, %v4515
    %v4828 = vpack.c.b16 %v4520, %v4516
    %v4829 = vpack.c.b16 %v4521, %v4517
    %v4830 = vpack.c.b16 %v4522, %v4518
    %v4831 = vpack.c.b16 %v4527, %v4523
    %v4832 = vpack.c.b16 %v4528, %v4524
    %v4833 = vpack.c.b16 %v4529, %v4525
    %v4834 = vpack.c.b16 %v4530, %v4526
    %v4835 = vpack.c.b16 %v4535, %v4531
    %v4836 = vpack.c.b16 %v4536, %v4532
    %v4837 = vpack.c.b16 %v4537, %v4533
    %v4838 = vpack.c.b16 %v4538, %v4534
    %v4839 = vpack.c.b16 %v4543, %v4539
    %v4840 = vpack.c.b16 %v4544, %v4540
    %v4841 = vpack.c.b16 %v4545, %v4541
    %v4842 = vpack.c.b16 %v4546, %v4542
    %v4843 = vpack.c.b16 %v4551, %v4547
    %v4844 = vpack.c.b16 %v4552, %v4548
    %v4845 = vpack.c.b16 %v4553, %v4549
    %v4846 = vpack.c.b16 %v4554, %v4550
    %v4847 = vpack.c.b16 %v4559, %v4555
    %v4848 = vpack.c.b16 %v4560, %v4556
    %v4849 = vpack.c.b16 %v4561, %v4557
    %v4850 = vpack.c.b16 %v4562, %v4558
    %v4851 = vpack.c.b16 %v4567, %v4563
    %v4852 = vpack.c.b16 %v4568, %v4564
    %v4853 = vpack.c.b16 %v4569, %v4565
    %v4854 = vpack.c.b16 %v4570, %v4566
    %v4855 = vpack.c.b16 %v4575, %v4571
    %v4856 = vpack.c.b16 %v4576, %v4572
    %v4857 = vpack.c.b16 %v4577, %v4573
    %v4858 = vpack.c.b16 %v4578, %v4574
    %v4859 = vpack.c.b16 %v4583, %v4579
    %v4860 = vpack.c.b16 %v4584, %v4580
    %v4861 = vpack.c.b16 %v4585, %v4581
    %v4862 = vpack.c.b16 %v4586, %v4582
    %v4863 = vpack.c.b16 %v4591, %v4587
    %v4864 = vpack.c.b16 %v4592, %v4588
    %v4865 = vpack.c.b16 %v4593, %v4589
    %v4866 = vpack.c.b16 %v4594, %v4590
    %v4867 = vpack.c.b16 %v4599, %v4595
    %v4868 = vpack.c.b16 %v4600, %v4596
    %v4869 = vpack.c.b16 %v4601, %v4597
    %v4870 = vpack.c.b16 %v4602, %v4598
    %v4871 = vpack.c.b16 %v4607, %v4603
    %v4872 = vpack.c.b16 %v4608, %v4604
    %v4873 = vpack.c.b16 %v4609, %v4605
    %v4874 = vpack.c.b16 %v4610, %v4606
    %v4875 = vpack.c.b16 %v4615, %v4611
    %v4876 = vpack.c.b16 %v4616, %v4612
    %v4877 = vpack.c.b16 %v4617, %v4613
    %v4878 = vpack.c.b16 %v4618, %v4614
    %v4879 = vpack.c.b16 %v4623, %v4619
    %v4880 = vpack.c.b16 %v4624, %v4620
    %v4881 = vpack.c.b16 %v4625, %v4621
    %v4882 = vpack.c.b16 %v4626, %v4622
    %5139 = vmatprep.subr.bf16.mxu0 %v4628
    %5140 = vmatpush1.bf16.msra.mxu0 %v4627
    %5141 = vmatprep.subr.bf16.mxu0 %v4632
    %5142 = vmatpush1.bf16.msra.mxu0 %v4631
    %5143 = vmatprep.subr.bf16.mxu0 %v4636
    %5144 = vmatpush1.bf16.msra.mxu0 %v4635
    %5145 = vmatprep.subr.bf16.mxu0 %v4640
    %5146 = vmatpush1.bf16.msra.mxu0 %v4639
    %5147 = vmatprep.subr.bf16.mxu0 %v4644
    %5148 = vmatpush1.bf16.msra.mxu0 %v4643
    %5149 = vmatprep.subr.bf16.mxu0 %v4648
    %5150 = vmatpush1.bf16.msra.mxu0 %v4647
    %5151 = vmatprep.subr.bf16.mxu0 %v4652
    %5152 = vmatpush1.bf16.msra.mxu0 %v4651
    %5153 = vmatprep.subr.bf16.mxu0 %v4656
    %5154 = vmatpush1.bf16.msra.mxu0 %v4655
    %5155 = vmatprep.subr.bf16.mxu0 %v4660
    %5156 = vmatpush1.bf16.msra.mxu0 %v4659
    %5157 = vmatprep.subr.bf16.mxu0 %v4664
    %5158 = vmatpush1.bf16.msra.mxu0 %v4663
    %5159 = vmatprep.subr.bf16.mxu0 %v4668
    %5160 = vmatpush1.bf16.msra.mxu0 %v4667
    %5161 = vmatprep.subr.bf16.mxu0 %v4672
    %5162 = vmatpush1.bf16.msra.mxu0 %v4671
    %5163 = vmatprep.subr.bf16.mxu0 %v4676
    %5164 = vmatpush1.bf16.msra.mxu0 %v4675
    %5165 = vmatprep.subr.bf16.mxu0 %v4680
    %5166 = vmatpush1.bf16.msra.mxu0 %v4679
    %5167 = vmatprep.subr.bf16.mxu0 %v4684
    %5168 = vmatpush1.bf16.msra.mxu0 %v4683
    %5169 = vmatprep.subr.bf16.mxu0 %v4688
    %5170 = vmatpush1.bf16.msra.mxu0 %v4687
    %5171 = vmatprep.mubr.bf16.mxu0 %v3574
    %5172 = vmatmul.mubr.bf16.gmra.mrb[0].mxu0 %v3573
    %v5173 = vpop.f32.mrb[0].mxu0
    %v5174 = vadd.f32 %v3842, %v5173
    %v5175 = vpop.f32.mrb[0].mxu0
    %v5176 = vadd.f32 %v3846, %v5175
    %v5177 = vpop.f32.mrb[0].mxu0
    %v5178 = vpop.f32.mrb[0].mxu0
    %5179 = vdwg.mxu0
    %5180 = vmatprep.subr.bf16.mxu0 %v4692
    %5181 = vmatpush1.bf16.msra.mxu0 %v4691
    %5182 = vmatprep.subr.bf16.mxu0 %v4696
    %5183 = vmatpush1.bf16.msra.mxu0 %v4695
    %5184 = vmatprep.subr.bf16.mxu0 %v4700
    %5185 = vmatpush1.bf16.msra.mxu0 %v4699
    %5186 = vmatprep.subr.bf16.mxu0 %v4704
    %5187 = vmatpush1.bf16.msra.mxu0 %v4703
    %5188 = vmatprep.subr.bf16.mxu0 %v4708
    %5189 = vmatpush1.bf16.msra.mxu0 %v4707
    %5190 = vmatprep.subr.bf16.mxu0 %v4712
    %5191 = vmatpush1.bf16.msra.mxu0 %v4711
    %5192 = vmatprep.subr.bf16.mxu0 %v4716
    %5193 = vmatpush1.bf16.msra.mxu0 %v4715
    %5194 = vmatprep.subr.bf16.mxu0 %v4720
    %5195 = vmatpush1.bf16.msra.mxu0 %v4719
    %5196 = vmatprep.subr.bf16.mxu0 %v4724
    %5197 = vmatpush1.bf16.msra.mxu0 %v4723
    %5198 = vmatprep.subr.bf16.mxu0 %v4728
    %5199 = vmatpush1.bf16.msra.mxu0 %v4727
    %5200 = vmatprep.subr.bf16.mxu0 %v4732
    %5201 = vmatpush1.bf16.msra.mxu0 %v4731
    %5202 = vmatprep.subr.bf16.mxu0 %v4736
    %5203 = vmatpush1.bf16.msra.mxu0 %v4735
    %5204 = vmatprep.subr.bf16.mxu0 %v4740
    %5205 = vmatpush1.bf16.msra.mxu0 %v4739
    %5206 = vmatprep.subr.bf16.mxu0 %v4744
    %5207 = vmatpush1.bf16.msra.mxu0 %v4743
    %5208 = vmatprep.subr.bf16.mxu0 %v4748
    %5209 = vmatpush1.bf16.msra.mxu0 %v4747
    %5210 = vmatprep.subr.bf16.mxu0 %v4752
    %5211 = vmatpush1.bf16.msra.mxu0 %v4751
    %5212 = vmatprep.mubr.bf16.mxu0 %v3576
    %5213 = vmatmul.mubr.bf16.gmra.mrb[0].mxu0 %v3575
    %v5214 = vpop.f32.mrb[0].mxu0
    %v5215 = vadd.f32 %v5174, %v5214
    %v5216 = vpop.f32.mrb[0].mxu0
    %v5217 = vadd.f32 %v5176, %v5216
    %v5218 = vpop.f32.mrb[0].mxu0
    %v5219 = vpop.f32.mrb[0].mxu0
    %5220 = vdwg.mxu0
    %5221 = vmatprep.subr.bf16.mxu0 %v4756
    %5222 = vmatpush1.bf16.msra.mxu0 %v4755
    %5223 = vmatprep.subr.bf16.mxu0 %v4760
    %5224 = vmatpush1.bf16.msra.mxu0 %v4759
    %5225 = vmatprep.subr.bf16.mxu0 %v4764
    %5226 = vmatpush1.bf16.msra.mxu0 %v4763
    %5227 = vmatprep.subr.bf16.mxu0 %v4768
    %5228 = vmatpush1.bf16.msra.mxu0 %v4767
    %5229 = vmatprep.subr.bf16.mxu0 %v4772
    %5230 = vmatpush1.bf16.msra.mxu0 %v4771
    %5231 = vmatprep.subr.bf16.mxu0 %v4776
    %5232 = vmatpush1.bf16.msra.mxu0 %v4775
    %5233 = vmatprep.subr.bf16.mxu0 %v4780
    %5234 = vmatpush1.bf16.msra.mxu0 %v4779
    %5235 = vmatprep.subr.bf16.mxu0 %v4784
    %5236 = vmatpush1.bf16.msra.mxu0 %v4783
    %5237 = vmatprep.subr.bf16.mxu0 %v4788
    %5238 = vmatpush1.bf16.msra.mxu0 %v4787
    %5239 = vmatprep.subr.bf16.mxu0 %v4792
    %5240 = vmatpush1.bf16.msra.mxu0 %v4791
    %5241 = vmatprep.subr.bf16.mxu0 %v4796
    %5242 = vmatpush1.bf16.msra.mxu0 %v4795
    %5243 = vmatprep.subr.bf16.mxu0 %v4800
    %5244 = vmatpush1.bf16.msra.mxu0 %v4799
    %5245 = vmatprep.subr.bf16.mxu0 %v4804
    %5246 = vmatpush1.bf16.msra.mxu0 %v4803
    %5247 = vmatprep.subr.bf16.mxu0 %v4808
    %5248 = vmatpush1.bf16.msra.mxu0 %v4807
    %5249 = vmatprep.subr.bf16.mxu0 %v4812
    %5250 = vmatpush1.bf16.msra.mxu0 %v4811
    %5251 = vmatprep.subr.bf16.mxu0 %v4816
    %5252 = vmatpush1.bf16.msra.mxu0 %v4815
    %5253 = vmatprep.mubr.bf16.mxu0 %v3578
    %5254 = vmatmul.mubr.bf16.gmra.mrb[0].mxu0 %v3577
    %v5255 = vpop.f32.mrb[0].mxu0
    %v5256 = vadd.f32 %v5215, %v5255
    %v5257 = vpop.f32.mrb[0].mxu0
    %v5258 = vadd.f32 %v5217, %v5257
    %v5259 = vpop.f32.mrb[0].mxu0
    %v5260 = vpop.f32.mrb[0].mxu0
    %5261 = vdwg.mxu0
    %5262 = vmatprep.subr.bf16.mxu0 %v4820
    %5263 = vmatpush1.bf16.msra.mxu0 %v4819
    %5264 = vmatprep.subr.bf16.mxu0 %v4824
    %5265 = vmatpush1.bf16.msra.mxu0 %v4823
    %5266 = vmatprep.subr.bf16.mxu0 %v4828
    %5267 = vmatpush1.bf16.msra.mxu0 %v4827
    %5268 = vmatprep.subr.bf16.mxu0 %v4832
    %5269 = vmatpush1.bf16.msra.mxu0 %v4831
    %5270 = vmatprep.subr.bf16.mxu0 %v4836
    %5271 = vmatpush1.bf16.msra.mxu0 %v4835
    %5272 = vmatprep.subr.bf16.mxu0 %v4840
    %5273 = vmatpush1.bf16.msra.mxu0 %v4839
    %5274 = vmatprep.subr.bf16.mxu0 %v4844
    %5275 = vmatpush1.bf16.msra.mxu0 %v4843
    %5276 = vmatprep.subr.bf16.mxu0 %v4848
    %5277 = vmatpush1.bf16.msra.mxu0 %v4847
    %5278 = vmatprep.subr.bf16.mxu0 %v4852
    %5279 = vmatpush1.bf16.msra.mxu0 %v4851
    %5280 = vmatprep.subr.bf16.mxu0 %v4856
    %5281 = vmatpush1.bf16.msra.mxu0 %v4855
    %5282 = vmatprep.subr.bf16.mxu0 %v4860
    %5283 = vmatpush1.bf16.msra.mxu0 %v4859
    %5284 = vmatprep.subr.bf16.mxu0 %v4864
    %5285 = vmatpush1.bf16.msra.mxu0 %v4863
    %5286 = vmatprep.subr.bf16.mxu0 %v4868
    %5287 = vmatpush1.bf16.msra.mxu0 %v4867
    %5288 = vmatprep.subr.bf16.mxu0 %v4872
    %5289 = vmatpush1.bf16.msra.mxu0 %v4871
    %5290 = vmatprep.subr.bf16.mxu0 %v4876
    %5291 = vmatpush1.bf16.msra.mxu0 %v4875
    %5292 = vmatprep.subr.bf16.mxu0 %v4880
    %5293 = vmatpush1.bf16.msra.mxu0 %v4879
    %5294 = vmatprep.mubr.bf16.mxu0 %v3580
    %5295 = vmatmul.mubr.bf16.gmra.mrb[0].mxu0 %v3579
    %v5296 = vpop.f32.mrb[0].mxu0
    %v5297 = vadd.f32 %v5256, %v5296
    %v5298 = vpop.f32.mrb[0].mxu0
    %v5299 = vadd.f32 %v5258, %v5298
    %v5300 = vpop.f32.mrb[0].mxu0
    %v5301 = vpop.f32.mrb[0].mxu0
    %5302 = vdwg.mxu0
    %5303 = vmatprep.subr.bf16.mxu0 %v4630
    %5304 = vmatpush1.bf16.msra.mxu0 %v4629
    %5305 = vmatprep.subr.bf16.mxu0 %v4634
    %5306 = vmatpush1.bf16.msra.mxu0 %v4633
    %5307 = vmatprep.subr.bf16.mxu0 %v4638
    %5308 = vmatpush1.bf16.msra.mxu0 %v4637
    %5309 = vmatprep.subr.bf16.mxu0 %v4642
    %5310 = vmatpush1.bf16.msra.mxu0 %v4641
    %5311 = vmatprep.subr.bf16.mxu0 %v4646
    %5312 = vmatpush1.bf16.msra.mxu0 %v4645
    %5313 = vmatprep.subr.bf16.mxu0 %v4650
    %5314 = vmatpush1.bf16.msra.mxu0 %v4649
    %5315 = vmatprep.subr.bf16.mxu0 %v4654
    %5316 = vmatpush1.bf16.msra.mxu0 %v4653
    %5317 = vmatprep.subr.bf16.mxu0 %v4658
    %5318 = vmatpush1.bf16.msra.mxu0 %v4657
    %5319 = vmatprep.subr.bf16.mxu0 %v4662
    %5320 = vmatpush1.bf16.msra.mxu0 %v4661
    %5321 = vmatprep.subr.bf16.mxu0 %v4666
    %5322 = vmatpush1.bf16.msra.mxu0 %v4665
    %5323 = vmatprep.subr.bf16.mxu0 %v4670
    %5324 = vmatpush1.bf16.msra.mxu0 %v4669
    %5325 = vmatprep.subr.bf16.mxu0 %v4674
    %5326 = vmatpush1.bf16.msra.mxu0 %v4673
    %5327 = vmatprep.subr.bf16.mxu0 %v4678
    %5328 = vmatpush1.bf16.msra.mxu0 %v4677
    %5329 = vmatprep.subr.bf16.mxu0 %v4682
    %5330 = vmatpush1.bf16.msra.mxu0 %v4681
    %5331 = vmatprep.subr.bf16.mxu0 %v4686
    %5332 = vmatpush1.bf16.msra.mxu0 %v4685
    %5333 = vmatprep.subr.bf16.mxu0 %v4690
    %5334 = vmatpush1.bf16.msra.mxu0 %v4689
    %5335 = vmatprep.mubr.bf16.mxu0 %v3574
    %5336 = vmatmul.mubr.bf16.gmra.mrb[0].mxu0 %v3573
    %v5337 = vpop.f32.mrb[0].mxu0
    %v5338 = vadd.f32 %v3850, %v5337
    %v5339 = vpop.f32.mrb[0].mxu0
    %v5340 = vadd.f32 %v3854, %v5339
    %v5341 = vpop.f32.mrb[0].mxu0
    %v5342 = vpop.f32.mrb[0].mxu0
    %5343 = vdwg.mxu0
    %5344 = vmatprep.subr.bf16.mxu0 %v4694
    %5345 = vmatpush1.bf16.msra.mxu0 %v4693
    %5346 = vmatprep.subr.bf16.mxu0 %v4698
    %5347 = vmatpush1.bf16.msra.mxu0 %v4697
    %5348 = vmatprep.subr.bf16.mxu0 %v4702
    %5349 = vmatpush1.bf16.msra.mxu0 %v4701
    %5350 = vmatprep.subr.bf16.mxu0 %v4706
    %5351 = vmatpush1.bf16.msra.mxu0 %v4705
    %5352 = vmatprep.subr.bf16.mxu0 %v4710
    %5353 = vmatpush1.bf16.msra.mxu0 %v4709
    %5354 = vmatprep.subr.bf16.mxu0 %v4714
    %5355 = vmatpush1.bf16.msra.mxu0 %v4713
    %5356 = vmatprep.subr.bf16.mxu0 %v4718
    %5357 = vmatpush1.bf16.msra.mxu0 %v4717
    %5358 = vmatprep.subr.bf16.mxu0 %v4722
    %5359 = vmatpush1.bf16.msra.mxu0 %v4721
    %5360 = vmatprep.subr.bf16.mxu0 %v4726
    %5361 = vmatpush1.bf16.msra.mxu0 %v4725
    %5362 = vmatprep.subr.bf16.mxu0 %v4730
    %5363 = vmatpush1.bf16.msra.mxu0 %v4729
    %5364 = vmatprep.subr.bf16.mxu0 %v4734
    %5365 = vmatpush1.bf16.msra.mxu0 %v4733
    %5366 = vmatprep.subr.bf16.mxu0 %v4738
    %5367 = vmatpush1.bf16.msra.mxu0 %v4737
    %5368 = vmatprep.subr.bf16.mxu0 %v4742
    %5369 = vmatpush1.bf16.msra.mxu0 %v4741
    %5370 = vmatprep.subr.bf16.mxu0 %v4746
    %5371 = vmatpush1.bf16.msra.mxu0 %v4745
    %5372 = vmatprep.subr.bf16.mxu0 %v4750
    %5373 = vmatpush1.bf16.msra.mxu0 %v4749
    %5374 = vmatprep.subr.bf16.mxu0 %v4754
    %5375 = vmatpush1.bf16.msra.mxu0 %v4753
    %5376 = vmatprep.mubr.bf16.mxu0 %v3576
    %5377 = vmatmul.mubr.bf16.gmra.mrb[0].mxu0 %v3575
    %v5378 = vpop.f32.mrb[0].mxu0
    %v5379 = vadd.f32 %v5338, %v5378
    %v5380 = vpop.f32.mrb[0].mxu0
    %v5381 = vadd.f32 %v5340, %v5380
    %v5382 = vpop.f32.mrb[0].mxu0
    %v5383 = vpop.f32.mrb[0].mxu0
    %5384 = vdwg.mxu0
    %5385 = vmatprep.subr.bf16.mxu0 %v4758
    %5386 = vmatpush1.bf16.msra.mxu0 %v4757
    %5387 = vmatprep.subr.bf16.mxu0 %v4762
    %5388 = vmatpush1.bf16.msra.mxu0 %v4761
    %5389 = vmatprep.subr.bf16.mxu0 %v4766
    %5390 = vmatpush1.bf16.msra.mxu0 %v4765
    %5391 = vmatprep.subr.bf16.mxu0 %v4770
    %5392 = vmatpush1.bf16.msra.mxu0 %v4769
    %5393 = vmatprep.subr.bf16.mxu0 %v4774
    %5394 = vmatpush1.bf16.msra.mxu0 %v4773
    %5395 = vmatprep.subr.bf16.mxu0 %v4778
    %5396 = vmatpush1.bf16.msra.mxu0 %v4777
    %5397 = vmatprep.subr.bf16.mxu0 %v4782
    %5398 = vmatpush1.bf16.msra.mxu0 %v4781
    %5399 = vmatprep.subr.bf16.mxu0 %v4786
    %5400 = vmatpush1.bf16.msra.mxu0 %v4785
    %5401 = vmatprep.subr.bf16.mxu0 %v4790
    %5402 = vmatpush1.bf16.msra.mxu0 %v4789
    %5403 = vmatprep.subr.bf16.mxu0 %v4794
    %5404 = vmatpush1.bf16.msra.mxu0 %v4793
    %5405 = vmatprep.subr.bf16.mxu0 %v4798
    %5406 = vmatpush1.bf16.msra.mxu0 %v4797
    %5407 = vmatprep.subr.bf16.mxu0 %v4802
    %5408 = vmatpush1.bf16.msra.mxu0 %v4801
    %5409 = vmatprep.subr.bf16.mxu0 %v4806
    %5410 = vmatpush1.bf16.msra.mxu0 %v4805
    %5411 = vmatprep.subr.bf16.mxu0 %v4810
    %5412 = vmatpush1.bf16.msra.mxu0 %v4809
    %5413 = vmatprep.subr.bf16.mxu0 %v4814
    %5414 = vmatpush1.bf16.msra.mxu0 %v4813
    %5415 = vmatprep.subr.bf16.mxu0 %v4818
    %5416 = vmatpush1.bf16.msra.mxu0 %v4817
    %5417 = vmatprep.mubr.bf16.mxu0 %v3578
    %5418 = vmatmul.mubr.bf16.gmra.mrb[0].mxu0 %v3577
    %v5419 = vpop.f32.mrb[0].mxu0
    %v5420 = vadd.f32 %v5379, %v5419
    %v5421 = vpop.f32.mrb[0].mxu0
    %v5422 = vadd.f32 %v5381, %v5421
    %v5423 = vpop.f32.mrb[0].mxu0
    %v5424 = vpop.f32.mrb[0].mxu0
    %5425 = vdwg.mxu0
    %5426 = vmatprep.subr.bf16.mxu0 %v4822
    %5427 = vmatpush1.bf16.msra.mxu0 %v4821
    %5428 = vmatprep.subr.bf16.mxu0 %v4826
    %5429 = vmatpush1.bf16.msra.mxu0 %v4825
    %5430 = vmatprep.subr.bf16.mxu0 %v4830
    %5431 = vmatpush1.bf16.msra.mxu0 %v4829
    %5432 = vmatprep.subr.bf16.mxu0 %v4834
    %5433 = vmatpush1.bf16.msra.mxu0 %v4833
    %5434 = vmatprep.subr.bf16.mxu0 %v4838
    %5435 = vmatpush1.bf16.msra.mxu0 %v4837
    %5436 = vmatprep.subr.bf16.mxu0 %v4842
    %5437 = vmatpush1.bf16.msra.mxu0 %v4841
    %5438 = vmatprep.subr.bf16.mxu0 %v4846
    %5439 = vmatpush1.bf16.msra.mxu0 %v4845
    %5440 = vmatprep.subr.bf16.mxu0 %v4850
    %5441 = vmatpush1.bf16.msra.mxu0 %v4849
    %5442 = vmatprep.subr.bf16.mxu0 %v4854
    %5443 = vmatpush1.bf16.msra.mxu0 %v4853
    %5444 = vmatprep.subr.bf16.mxu0 %v4858
    %5445 = vmatpush1.bf16.msra.mxu0 %v4857
    %5446 = vmatprep.subr.bf16.mxu0 %v4862
    %5447 = vmatpush1.bf16.msra.mxu0 %v4861
    %5448 = vmatprep.subr.bf16.mxu0 %v4866
    %5449 = vmatpush1.bf16.msra.mxu0 %v4865
    %5450 = vmatprep.subr.bf16.mxu0 %v4870
    %5451 = vmatpush1.bf16.msra.mxu0 %v4869
    %5452 = vmatprep.subr.bf16.mxu0 %v4874
    %5453 = vmatpush1.bf16.msra.mxu0 %v4873
    %5454 = vmatprep.subr.bf16.mxu0 %v4878
    %5455 = vmatpush1.bf16.msra.mxu0 %v4877
    %5456 = vmatprep.subr.bf16.mxu0 %v4882
    %5457 = vmatpush1.bf16.msra.mxu0 %v4881
    %5458 = vmatprep.mubr.bf16.mxu0 %v3580
    %5459 = vmatmul.mubr.bf16.gmra.mrb[0].mxu0 %v3579
    %v5460 = vpop.f32.mrb[0].mxu0
    %v5461 = vadd.f32 %v5420, %v5460
    %v5462 = vpop.f32.mrb[0].mxu0
    %v5463 = vadd.f32 %v5422, %v5462
    %v5464 = vpop.f32.mrb[0].mxu0
    %v5465 = vpop.f32.mrb[0].mxu0
    %5466 = vdwg.mxu0
    %vm5467 = vcmp.gt.f32.partialorder %v5297, 0.0
    %vm5468 = vcmp.gt.f32.partialorder %v5299, 0.0
    %vm5469 = vcmp.gt.f32.partialorder %v5461, 0.0
    %vm5470 = vcmp.gt.f32.partialorder %v5463, 0.0
    %v5471 = vmul.f32 %v5297, 0.2
    %v5472 = vmul.f32 %v5299, 0.2
    %v5473 = vmul.f32 %v5461, 0.2
    %v5474 = vmul.f32 %v5463, 0.2
    %v5475 = vsel %vm5467, %v5297, %v5471
    %v5476 = vsel %vm5468, %v5299, %v5472
    %v5477 = vsel %vm5469, %v5461, %v5473
    %v5478 = vsel %vm5470, %v5463, %v5474
    %v5479 = vpack.c.bf16 %v5475, %v5475
    %v5480 = vpack.c.bf16 %v5476, %v5476
    %v5481 = vpack.c.bf16 %v5477, %v5477
    %v5482 = vpack.c.bf16 %v5478, %v5478
    %v5483 = vld [vmem:[#allocation11] sm:$0xff]
    %v5484 = vld [vmem:[#allocation11 + $0x8] sm:$0xff]
    %v5485 = vld [vmem:[#allocation11 + $0x10] sm:$0xff]
    %v5486 = vld [vmem:[#allocation11 + $0x18] sm:$0xff]
    %v5487 = vld [vmem:[#allocation11 + $0x20] sm:$0xff]
    %v5488 = vld [vmem:[#allocation11 + $0x28] sm:$0xff]
    %v5489 = vld [vmem:[#allocation11 + $0x30] sm:$0xff]
    %v5490 = vld [vmem:[#allocation11 + $0x38] sm:$0xff]
    %v5491 = vld [vmem:[#allocation11 + $0x40] sm:$0xff]
    %v5492 = vld [vmem:[#allocation11 + $0x48] sm:$0xff]
    %v5493 = vld [vmem:[#allocation11 + $0x50] sm:$0xff]
    %v5494 = vld [vmem:[#allocation11 + $0x58] sm:$0xff]
    %v5495 = vld [vmem:[#allocation11 + $0x60] sm:$0xff]
    %v5496 = vld [vmem:[#allocation11 + $0x68] sm:$0xff]
    %v5497 = vld [vmem:[#allocation11 + $0x70] sm:$0xff]
    %v5498 = vld [vmem:[#allocation11 + $0x78] sm:$0xff]
    %v5499 = vld [vmem:[#allocation11 + $0x80] sm:$0xff]
    %v5500 = vld [vmem:[#allocation11 + $0x88] sm:$0xff]
    %v5501 = vld [vmem:[#allocation11 + $0x90] sm:$0xff]
    %v5502 = vld [vmem:[#allocation11 + $0x98] sm:$0xff]
    %v5503 = vld [vmem:[#allocation11 + $0xa0] sm:$0xff]
    %v5504 = vld [vmem:[#allocation11 + $0xa8] sm:$0xff]
    %v5505 = vld [vmem:[#allocation11 + $0xb0] sm:$0xff]
    %v5506 = vld [vmem:[#allocation11 + $0xb8] sm:$0xff]
    %v5507 = vld [vmem:[#allocation11 + $0xc0] sm:$0xff]
    %v5508 = vld [vmem:[#allocation11 + $0xc8] sm:$0xff]
    %v5509 = vld [vmem:[#allocation11 + $0xd0] sm:$0xff]
    %v5510 = vld [vmem:[#allocation11 + $0xd8] sm:$0xff]
    %v5511 = vld [vmem:[#allocation11 + $0xe0] sm:$0xff]
    %v5512 = vld [vmem:[#allocation11 + $0xe8] sm:$0xff]
    %v5513 = vld [vmem:[#allocation11 + $0xf0] sm:$0xff]
    %v5514 = vld [vmem:[#allocation11 + $0xf8] sm:$0xff]
    %v5515 = vld [vmem:[#allocation11 + $0x100] sm:$0xff]
    %v5516 = vld [vmem:[#allocation11 + $0x108] sm:$0xff]
    %v5517 = vld [vmem:[#allocation11 + $0x110] sm:$0xff]
    %v5518 = vld [vmem:[#allocation11 + $0x118] sm:$0xff]
    %v5519 = vld [vmem:[#allocation11 + $0x120] sm:$0xff]
    %v5520 = vld [vmem:[#allocation11 + $0x128] sm:$0xff]
    %v5521 = vld [vmem:[#allocation11 + $0x130] sm:$0xff]
    %v5522 = vld [vmem:[#allocation11 + $0x138] sm:$0xff]
    %v5523 = vld [vmem:[#allocation11 + $0x140] sm:$0xff]
    %v5524 = vld [vmem:[#allocation11 + $0x148] sm:$0xff]
    %v5525 = vld [vmem:[#allocation11 + $0x150] sm:$0xff]
    %v5526 = vld [vmem:[#allocation11 + $0x158] sm:$0xff]
    %v5527 = vld [vmem:[#allocation11 + $0x160] sm:$0xff]
    %v5528 = vld [vmem:[#allocation11 + $0x168] sm:$0xff]
    %v5529 = vld [vmem:[#allocation11 + $0x170] sm:$0xff]
    %v5530 = vld [vmem:[#allocation11 + $0x178] sm:$0xff]
    %v5531 = vld [vmem:[#allocation11 + $0x180] sm:$0xff]
    %v5532 = vld [vmem:[#allocation11 + $0x188] sm:$0xff]
    %v5533 = vld [vmem:[#allocation11 + $0x190] sm:$0xff]
    %v5534 = vld [vmem:[#allocation11 + $0x198] sm:$0xff]
    %v5535 = vld [vmem:[#allocation11 + $0x1a0] sm:$0xff]
    %v5536 = vld [vmem:[#allocation11 + $0x1a8] sm:$0xff]
    %v5537 = vld [vmem:[#allocation11 + $0x1b0] sm:$0xff]
    %v5538 = vld [vmem:[#allocation11 + $0x1b8] sm:$0xff]
    %v5539 = vld [vmem:[#allocation11 + $0x1c0] sm:$0xff]
    %v5540 = vld [vmem:[#allocation11 + $0x1c8] sm:$0xff]
    %v5541 = vld [vmem:[#allocation11 + $0x1d0] sm:$0xff]
    %v5542 = vld [vmem:[#allocation11 + $0x1d8] sm:$0xff]
    %v5543 = vld [vmem:[#allocation11 + $0x1e0] sm:$0xff]
    %v5544 = vld [vmem:[#allocation11 + $0x1e8] sm:$0xff]
    %v5545 = vld [vmem:[#allocation11 + $0x1f0] sm:$0xff]
    %v5546 = vld [vmem:[#allocation11 + $0x1f8] sm:$0xff]
    %v5547 = vld [vmem:[#allocation13] sm:$0x3]
    %v5549 = vlaneseq
    %v5550 = vshrl.u32 %v5549, 7
    %v5551 = vsub.s32 0, %v5550
    %v5552 = vrot.slane %v5547, %v5551
    %v5553 = vlaneseq
    %v5554 = vshrl.u32 %v5553, 7
    %v5555 = vsub.s32 1, %v5554
    %v5556 = vrot.slane %v5547, %v5555
    %v5623 = vunpack.c.l.b16 %v5483
    %v5624 = vunpack.c.h.b16 %v5483
    %v5625 = vunpack.c.l.b16 %v5484
    %v5626 = vunpack.c.h.b16 %v5484
    %v5627 = vunpack.c.l.b16 %v5485
    %v5628 = vunpack.c.h.b16 %v5485
    %v5629 = vunpack.c.l.b16 %v5486
    %v5630 = vunpack.c.h.b16 %v5486
    %v5631 = vunpack.c.l.b16 %v5487
    %v5632 = vunpack.c.h.b16 %v5487
    %v5633 = vunpack.c.l.b16 %v5488
    %v5634 = vunpack.c.h.b16 %v5488
    %v5635 = vunpack.c.l.b16 %v5489
    %v5636 = vunpack.c.h.b16 %v5489
    %v5637 = vunpack.c.l.b16 %v5490
    %v5638 = vunpack.c.h.b16 %v5490
    %v5639 = vunpack.c.l.b16 %v5491
    %v5640 = vunpack.c.h.b16 %v5491
    %v5641 = vunpack.c.l.b16 %v5492
    %v5642 = vunpack.c.h.b16 %v5492
    %v5643 = vunpack.c.l.b16 %v5493
    %v5644 = vunpack.c.h.b16 %v5493
    %v5645 = vunpack.c.l.b16 %v5494
    %v5646 = vunpack.c.h.b16 %v5494
    %v5647 = vunpack.c.l.b16 %v5495
    %v5648 = vunpack.c.h.b16 %v5495
    %v5649 = vunpack.c.l.b16 %v5496
    %v5650 = vunpack.c.h.b16 %v5496
    %v5651 = vunpack.c.l.b16 %v5497
    %v5652 = vunpack.c.h.b16 %v5497
    %v5653 = vunpack.c.l.b16 %v5498
    %v5654 = vunpack.c.h.b16 %v5498
    %v5655 = vunpack.c.l.b16 %v5499
    %v5656 = vunpack.c.h.b16 %v5499
    %v5657 = vunpack.c.l.b16 %v5500
    %v5658 = vunpack.c.h.b16 %v5500
    %v5659 = vunpack.c.l.b16 %v5501
    %v5660 = vunpack.c.h.b16 %v5501
    %v5661 = vunpack.c.l.b16 %v5502
    %v5662 = vunpack.c.h.b16 %v5502
    %v5663 = vunpack.c.l.b16 %v5503
    %v5664 = vunpack.c.h.b16 %v5503
    %v5665 = vunpack.c.l.b16 %v5504
    %v5666 = vunpack.c.h.b16 %v5504
    %v5667 = vunpack.c.l.b16 %v5505
    %v5668 = vunpack.c.h.b16 %v5505
    %v5669 = vunpack.c.l.b16 %v5506
    %v5670 = vunpack.c.h.b16 %v5506
    %v5671 = vunpack.c.l.b16 %v5507
    %v5672 = vunpack.c.h.b16 %v5507
    %v5673 = vunpack.c.l.b16 %v5508
    %v5674 = vunpack.c.h.b16 %v5508
    %v5675 = vunpack.c.l.b16 %v5509
    %v5676 = vunpack.c.h.b16 %v5509
    %v5677 = vunpack.c.l.b16 %v5510
    %v5678 = vunpack.c.h.b16 %v5510
    %v5679 = vunpack.c.l.b16 %v5511
    %v5680 = vunpack.c.h.b16 %v5511
    %v5681 = vunpack.c.l.b16 %v5512
    %v5682 = vunpack.c.h.b16 %v5512
    %v5683 = vunpack.c.l.b16 %v5513
    %v5684 = vunpack.c.h.b16 %v5513
    %v5685 = vunpack.c.l.b16 %v5514
    %v5686 = vunpack.c.h.b16 %v5514
    %v5687 = vunpack.c.l.b16 %v5515
    %v5688 = vunpack.c.h.b16 %v5515
    %v5689 = vunpack.c.l.b16 %v5516
    %v5690 = vunpack.c.h.b16 %v5516
    %v5691 = vunpack.c.l.b16 %v5517
    %v5692 = vunpack.c.h.b16 %v5517
    %v5693 = vunpack.c.l.b16 %v5518
    %v5694 = vunpack.c.h.b16 %v5518
    %v5695 = vunpack.c.l.b16 %v5519
    %v5696 = vunpack.c.h.b16 %v5519
    %v5697 = vunpack.c.l.b16 %v5520
    %v5698 = vunpack.c.h.b16 %v5520
    %v5699 = vunpack.c.l.b16 %v5521
    %v5700 = vunpack.c.h.b16 %v5521
    %v5701 = vunpack.c.l.b16 %v5522
    %v5702 = vunpack.c.h.b16 %v5522
    %v5703 = vunpack.c.l.b16 %v5523
    %v5704 = vunpack.c.h.b16 %v5523
    %v5705 = vunpack.c.l.b16 %v5524
    %v5706 = vunpack.c.h.b16 %v5524
    %v5707 = vunpack.c.l.b16 %v5525
    %v5708 = vunpack.c.h.b16 %v5525
    %v5709 = vunpack.c.l.b16 %v5526
    %v5710 = vunpack.c.h.b16 %v5526
    %v5711 = vunpack.c.l.b16 %v5527
    %v5712 = vunpack.c.h.b16 %v5527
    %v5713 = vunpack.c.l.b16 %v5528
    %v5714 = vunpack.c.h.b16 %v5528
    %v5715 = vunpack.c.l.b16 %v5529
    %v5716 = vunpack.c.h.b16 %v5529
    %v5717 = vunpack.c.l.b16 %v5530
    %v5718 = vunpack.c.h.b16 %v5530
    %v5719 = vunpack.c.l.b16 %v5531
    %v5720 = vunpack.c.h.b16 %v5531
    %v5721 = vunpack.c.l.b16 %v5532
    %v5722 = vunpack.c.h.b16 %v5532
    %v5723 = vunpack.c.l.b16 %v5533
    %v5724 = vunpack.c.h.b16 %v5533
    %v5725 = vunpack.c.l.b16 %v5534
    %v5726 = vunpack.c.h.b16 %v5534
    %v5727 = vunpack.c.l.b16 %v5535
    %v5728 = vunpack.c.h.b16 %v5535
    %v5729 = vunpack.c.l.b16 %v5536
    %v5730 = vunpack.c.h.b16 %v5536
    %v5731 = vunpack.c.l.b16 %v5537
    %v5732 = vunpack.c.h.b16 %v5537
    %v5733 = vunpack.c.l.b16 %v5538
    %v5734 = vunpack.c.h.b16 %v5538
    %v5735 = vunpack.c.l.b16 %v5539
    %v5736 = vunpack.c.h.b16 %v5539
    %v5737 = vunpack.c.l.b16 %v5540
    %v5738 = vunpack.c.h.b16 %v5540
    %v5739 = vunpack.c.l.b16 %v5541
    %v5740 = vunpack.c.h.b16 %v5541
    %v5741 = vunpack.c.l.b16 %v5542
    %v5742 = vunpack.c.h.b16 %v5542
    %v5743 = vunpack.c.l.b16 %v5543
    %v5744 = vunpack.c.h.b16 %v5543
    %v5745 = vunpack.c.l.b16 %v5544
    %v5746 = vunpack.c.h.b16 %v5544
    %v5747 = vunpack.c.l.b16 %v5545
    %v5748 = vunpack.c.h.b16 %v5545
    %v5749 = vunpack.c.l.b16 %v5546
    %v5750 = vunpack.c.h.b16 %v5546
    %v5751 = vpack.c.b16 %v5625, %v5623
    %v5752 = vpack.c.b16 %v5626, %v5624
    %v5753 = vpack.c.b16 %v5629, %v5627
    %v5754 = vpack.c.b16 %v5630, %v5628
    %v5755 = vpack.c.b16 %v5633, %v5631
    %v5756 = vpack.c.b16 %v5634, %v5632
    %v5757 = vpack.c.b16 %v5637, %v5635
    %v5758 = vpack.c.b16 %v5638, %v5636
    %v5759 = vpack.c.b16 %v5641, %v5639
    %v5760 = vpack.c.b16 %v5642, %v5640
    %v5761 = vpack.c.b16 %v5645, %v5643
    %v5762 = vpack.c.b16 %v5646, %v5644
    %v5763 = vpack.c.b16 %v5649, %v5647
    %v5764 = vpack.c.b16 %v5650, %v5648
    %v5765 = vpack.c.b16 %v5653, %v5651
    %v5766 = vpack.c.b16 %v5654, %v5652
    %v5767 = vpack.c.b16 %v5657, %v5655
    %v5768 = vpack.c.b16 %v5658, %v5656
    %v5769 = vpack.c.b16 %v5661, %v5659
    %v5770 = vpack.c.b16 %v5662, %v5660
    %v5771 = vpack.c.b16 %v5665, %v5663
    %v5772 = vpack.c.b16 %v5666, %v5664
    %v5773 = vpack.c.b16 %v5669, %v5667
    %v5774 = vpack.c.b16 %v5670, %v5668
    %v5775 = vpack.c.b16 %v5673, %v5671
    %v5776 = vpack.c.b16 %v5674, %v5672
    %v5777 = vpack.c.b16 %v5677, %v5675
    %v5778 = vpack.c.b16 %v5678, %v5676
    %v5779 = vpack.c.b16 %v5681, %v5679
    %v5780 = vpack.c.b16 %v5682, %v5680
    %v5781 = vpack.c.b16 %v5685, %v5683
    %v5782 = vpack.c.b16 %v5686, %v5684
    %v5783 = vpack.c.b16 %v5689, %v5687
    %v5784 = vpack.c.b16 %v5690, %v5688
    %v5785 = vpack.c.b16 %v5693, %v5691
    %v5786 = vpack.c.b16 %v5694, %v5692
    %v5787 = vpack.c.b16 %v5697, %v5695
    %v5788 = vpack.c.b16 %v5698, %v5696
    %v5789 = vpack.c.b16 %v5701, %v5699
    %v5790 = vpack.c.b16 %v5702, %v5700
    %v5791 = vpack.c.b16 %v5705, %v5703
    %v5792 = vpack.c.b16 %v5706, %v5704
    %v5793 = vpack.c.b16 %v5709, %v5707
    %v5794 = vpack.c.b16 %v5710, %v5708
    %v5795 = vpack.c.b16 %v5713, %v5711
    %v5796 = vpack.c.b16 %v5714, %v5712
    %v5797 = vpack.c.b16 %v5717, %v5715
    %v5798 = vpack.c.b16 %v5718, %v5716
    %v5799 = vpack.c.b16 %v5721, %v5719
    %v5800 = vpack.c.b16 %v5722, %v5720
    %v5801 = vpack.c.b16 %v5725, %v5723
    %v5802 = vpack.c.b16 %v5726, %v5724
    %v5803 = vpack.c.b16 %v5729, %v5727
    %v5804 = vpack.c.b16 %v5730, %v5728
    %v5805 = vpack.c.b16 %v5733, %v5731
    %v5806 = vpack.c.b16 %v5734, %v5732
    %v5807 = vpack.c.b16 %v5737, %v5735
    %v5808 = vpack.c.b16 %v5738, %v5736
    %v5809 = vpack.c.b16 %v5741, %v5739
    %v5810 = vpack.c.b16 %v5742, %v5740
    %v5811 = vpack.c.b16 %v5745, %v5743
    %v5812 = vpack.c.b16 %v5746, %v5744
    %v5813 = vpack.c.b16 %v5749, %v5747
    %v5814 = vpack.c.b16 %v5750, %v5748
    %5879 = vmatprep.subr.bf16.mxu0 %v5752
    %5880 = vmatpush1.bf16.msra.mxu0 %v5751
    %5881 = vmatprep.subr.bf16.mxu0 %v5754
    %5882 = vmatpush1.bf16.msra.mxu0 %v5753
    %5883 = vmatprep.subr.bf16.mxu0 %v5756
    %5884 = vmatpush1.bf16.msra.mxu0 %v5755
    %5885 = vmatprep.subr.bf16.mxu0 %v5758
    %5886 = vmatpush1.bf16.msra.mxu0 %v5757
    %5887 = vmatprep.subr.bf16.mxu0 %v5760
    %5888 = vmatpush1.bf16.msra.mxu0 %v5759
    %5889 = vmatprep.subr.bf16.mxu0 %v5762
    %5890 = vmatpush1.bf16.msra.mxu0 %v5761
    %5891 = vmatprep.subr.bf16.mxu0 %v5764
    %5892 = vmatpush1.bf16.msra.mxu0 %v5763
    %5893 = vmatprep.subr.bf16.mxu0 %v5766
    %5894 = vmatpush1.bf16.msra.mxu0 %v5765
    %5895 = vmatprep.subr.bf16.mxu0 %v5768
    %5896 = vmatpush1.bf16.msra.mxu0 %v5767
    %5897 = vmatprep.subr.bf16.mxu0 %v5770
    %5898 = vmatpush1.bf16.msra.mxu0 %v5769
    %5899 = vmatprep.subr.bf16.mxu0 %v5772
    %5900 = vmatpush1.bf16.msra.mxu0 %v5771
    %5901 = vmatprep.subr.bf16.mxu0 %v5774
    %5902 = vmatpush1.bf16.msra.mxu0 %v5773
    %5903 = vmatprep.subr.bf16.mxu0 %v5776
    %5904 = vmatpush1.bf16.msra.mxu0 %v5775
    %5905 = vmatprep.subr.bf16.mxu0 %v5778
    %5906 = vmatpush1.bf16.msra.mxu0 %v5777
    %5907 = vmatprep.subr.bf16.mxu0 %v5780
    %5908 = vmatpush1.bf16.msra.mxu0 %v5779
    %5909 = vmatprep.subr.bf16.mxu0 %v5782
    %5910 = vmatpush1.bf16.msra.mxu0 %v5781
    %5911 = vmatprep.mubr.bf16.mxu0 %v5480
    %5912 = vmatmul.mubr.bf16.gmra.mrb[0].mxu0 %v5479
    %v5913 = vpop.f32.mrb[0].mxu0
    %v5914 = vadd.f32 %v5552, %v5913
    %v5915 = vpop.f32.mrb[0].mxu0
    %v5916 = vadd.f32 %v5556, %v5915
    %v5917 = vpop.f32.mrb[0].mxu0
    %v5918 = vpop.f32.mrb[0].mxu0
    %5919 = vdwg.mxu0
    %5920 = vmatprep.subr.bf16.mxu0 %v5784
    %5921 = vmatpush1.bf16.msra.mxu0 %v5783
    %5922 = vmatprep.subr.bf16.mxu0 %v5786
    %5923 = vmatpush1.bf16.msra.mxu0 %v5785
    %5924 = vmatprep.subr.bf16.mxu0 %v5788
    %5925 = vmatpush1.bf16.msra.mxu0 %v5787
    %5926 = vmatprep.subr.bf16.mxu0 %v5790
    %5927 = vmatpush1.bf16.msra.mxu0 %v5789
    %5928 = vmatprep.subr.bf16.mxu0 %v5792
    %5929 = vmatpush1.bf16.msra.mxu0 %v5791
    %5930 = vmatprep.subr.bf16.mxu0 %v5794
    %5931 = vmatpush1.bf16.msra.mxu0 %v5793
    %5932 = vmatprep.subr.bf16.mxu0 %v5796
    %5933 = vmatpush1.bf16.msra.mxu0 %v5795
    %5934 = vmatprep.subr.bf16.mxu0 %v5798
    %5935 = vmatpush1.bf16.msra.mxu0 %v5797
    %5936 = vmatprep.subr.bf16.mxu0 %v5800
    %5937 = vmatpush1.bf16.msra.mxu0 %v5799
    %5938 = vmatprep.subr.bf16.mxu0 %v5802
    %5939 = vmatpush1.bf16.msra.mxu0 %v5801
    %5940 = vmatprep.subr.bf16.mxu0 %v5804
    %5941 = vmatpush1.bf16.msra.mxu0 %v5803
    %5942 = vmatprep.subr.bf16.mxu0 %v5806
    %5943 = vmatpush1.bf16.msra.mxu0 %v5805
    %5944 = vmatprep.subr.bf16.mxu0 %v5808
    %5945 = vmatpush1.bf16.msra.mxu0 %v5807
    %5946 = vmatprep.subr.bf16.mxu0 %v5810
    %5947 = vmatpush1.bf16.msra.mxu0 %v5809
    %5948 = vmatprep.subr.bf16.mxu0 %v5812
    %5949 = vmatpush1.bf16.msra.mxu0 %v5811
    %5950 = vmatprep.subr.bf16.mxu0 %v5814
    %5951 = vmatpush1.bf16.msra.mxu0 %v5813
    %5952 = vmatprep.mubr.bf16.mxu0 %v5482
    %5953 = vmatmul.mubr.bf16.gmra.mrb[0].mxu0 %v5481
    %v5954 = vpop.f32.mrb[0].mxu0
    %v5955 = vadd.f32 %v5914, %v5954
    %v5956 = vpop.f32.mrb[0].mxu0
    %v5957 = vadd.f32 %v5916, %v5956
    %v5958 = vpop.f32.mrb[0].mxu0
    %v5959 = vpop.f32.mrb[0].mxu0
    %5960 = vdwg.mxu0
    %vm5961 = vcmp.gt.f32.partialorder %v5955, 0.0
    %vm5962 = vcmp.gt.f32.partialorder %v5957, 0.0
    %v5963 = vmul.f32 %v5955, 0.2
    %v5964 = vmul.f32 %v5957, 0.2
    %v5965 = vsel %vm5961, %v5955, %v5963
    %v5966 = vsel %vm5962, %v5957, %v5964
    %v5967 = vld [vmem:[#allocation14] sm:$0x3]
    %v5968 = vunpack.c.l.bf16 %v5967
    %v5970 = vlaneseq
    %v5971 = vshrl.u32 %v5970, 7
    %v5972 = vsub.s32 0, %v5971
    %v5973 = vrot.slane %v5968, %v5972
    %v5974 = vlaneseq
    %v5975 = vshrl.u32 %v5974, 7
    %v5976 = vsub.s32 2, %v5975
    %v5977 = vrot.slane %v5968, %v5976
    %v5980 = vlaneseq
    %v5981 = vshrl.u32 %v5980, 7
    %v5982 = vsub.s32 0, %v5981
    %v5983 = vrot.slane %v5973, %v5982
    %v5984 = vlaneseq
    %v5985 = vshrl.u32 %v5984, 7
    %v5986 = vsub.s32 0, %v5985
    %v5987 = vrot.slane %v5977, %v5986
    %v5988 = vmul.f32 %v5965, %v5983
    %v5989 = vmul.f32 %v5966, %v5987
    %v5990 = vadd.f32 %v5988, %v5989
    %5991 = vadd.xlane.f32.xlu0 %v5990
    %v5992 = vpop.xlane.xlu0 %5991
    %v5993 = vld [vmem:[#allocation2] sm:$0x1]
    %v5995 = vlaneseq
    %v5996 = vshrl.u32 %v5995, 7
    %v5997 = vsub.s32 0, %v5996
    %v5998 = vrot.slane %v5993, %v5997
    %v6000 = vadd.f32 %v5992, %v5998
    %v6001 = vxor.u32 %v6000, 2147483648
    %v6002 = vmul.f32 %v6001, 1.442695
    %v6003 = vpow.pop %v6002
    %v6004 = vadd.f32 %v6003, 1.0
    %v6005 = vrcp.pop %v6004
    %v6006 = vmul.f32 1.0, %v6005
    %vm6007 = vcmask 7168
    %6008 = vst.msk [vmem:[%s9] sm:$0xff] %vm6007, %v6006
    // Predicated region
    $region70: #{tpu_custom_call.1} parent=1 // pred_check
      _
    $region71: #{tpu_custom_call.1} parent=1 // pred_check_branch
      %6010 = sbr.rel (0) target = $region73
    $region72: #{tpu_custom_call.1} parent=1 // pred_region
      _
    $region73: #{tpu_custom_call.1} parent=1 // pred_fallthru
      _
    // Predicated region
    $region74: #{tpu_custom_call.1} parent=1 // pred_check
      _
    $region75: #{tpu_custom_call.1} parent=1 // pred_check_branch
      %6012 = sbr.rel (0) target = $region77
    $region76: #{tpu_custom_call.1} parent=1 // pred_region
      _
    $region77: #{tpu_custom_call.1} parent=1 // pred_fallthru
      _
    %6013 = vsyncpa [#allocation4], 1
    %6014 = vsyncpa [#allocation6], 1
    %6015 = vsyncpa [#allocation9], 1
    %6016 = vsyncpa [#allocation12], 1
    %6017 = vsyncpa [#allocation15], 1

</llo_original>
